<compile_context>
chip_gen: v7x
topology: tpu7x:2x2x1
jax: 0.10.0
libtpu: 0.0.40
codegen_flags: <defaults>
</compile_context>

<pallas_src>
import math
import functools

import jax
import jax.numpy as jnp
from jax import lax
from jax.experimental import pallas as pl
from jax.experimental.pallas import tpu as pltpu


_TM_MAX = 512                      # max rows per M-tile for row-tiled kernels
_VMEM_LIMIT = 64 * 1024 * 1024     # scoped VMEM limit for the weight-heavy kernels


def _pick_tm(M, tmax=_TM_MAX):
    """Row tile: <= tmax, and >= 2 grid steps when possible (v7x has 2 TensorCores)."""
    if M <= 8:
        return M
    if M > tmax:
        return tmax
    half = (M + 1) // 2
    return max(8, ((half + 7) // 8) * 8)


# ----------------------------- plain linear (enc-proj / output heads) -----------------------------

def _linear_kernel(x_ref, w_ref, b_ref, o_ref):
    # x: [tm, K], w: [K, N] bf16, b: [1, N] f32 ; f32 accumulation, store in o dtype
    y = jnp.dot(x_ref[...].astype(jnp.bfloat16), w_ref[...],
                preferred_element_type=jnp.float32)
    o_ref[...] = (y + b_ref[...]).astype(o_ref.dtype)


def pallas_linear(x2d, w, b, out_dtype=jnp.bfloat16):
    """y = x2d @ w + b   (w stored [K, N] bf16, pre-transposed at init)."""
    M, K = x2d.shape
    N = w.shape[1]
    tm = _pick_tm(M)
    return pl.pallas_call(
        _linear_kernel,
        out_shape=jax.ShapeDtypeStruct((M, N), out_dtype),
        grid=(pl.cdiv(M, tm),),
        in_specs=[pl.BlockSpec((tm, K), lambda i: (i, 0)),
                  pl.BlockSpec((K, N), lambda i: (0, 0)),
                  pl.BlockSpec((1, N), lambda i: (0, 0))],
        out_specs=pl.BlockSpec((tm, N), lambda i: (i, 0)),
        compiler_params=pltpu.CompilerParams(
            dimension_semantics=("parallel",),
            vmem_limit_bytes=_VMEM_LIMIT),
    )(x2d, w, b.reshape(1, N))


# ----------------------------- embedding-scale + positional encoding -----------------------------

def _add_pe_kernel(emb_ref, pe_ref, o_ref):
    # emb: [1, T, D] f32 (sqrt(d_model) already folded into table), pe: [T, D] f32
    o_ref[...] = (emb_ref[...] + pe_ref[...][None, :, :]).astype(o_ref.dtype)


def pallas_add_pe(emb, pe):
    B, T, D = emb.shape
    return pl.pallas_call(
        _add_pe_kernel,
        out_shape=jax.ShapeDtypeStruct((B, T, D), jnp.bfloat16),
        grid=(B,),
        in_specs=[pl.BlockSpec((1, T, D), lambda b: (b, 0, 0)),
                  pl.BlockSpec((T, D), lambda b: (0, 0))],
        out_specs=pl.BlockSpec((1, T, D), lambda b: (b, 0, 0)),
        compiler_params=pltpu.CompilerParams(dimension_semantics=("parallel",)),
    )(emb, pe)


# ----------------------------- fused self-attention block -----------------------------
# QKV proj + causal multi-head attention + out-proj + residual + LayerNorm, per batch element.

def _self_attn_block_kernel(x_ref, qkv_w_ref, qkv_b_ref, out_w_ref, out_b_ref,
                            g_ref, beta_ref, o_ref, *, nhead, eps):
    T, D = x_ref.shape[1], x_ref.shape[2]
    Dh = D // nhead
    x = x_ref[0]                                                       # [T, D] bf16

    qkv = jnp.dot(x, qkv_w_ref[...], preferred_element_type=jnp.float32) + qkv_b_ref[...]
    qkv = qkv.astype(jnp.bfloat16)                                     # [T, 3D]; 1/sqrt(Dh) folded into Wq

    # causal mask via iota (no HBM mask tensor), shared across heads
    row = lax.broadcasted_iota(jnp.int32, (T, T), 0)
    col = lax.broadcasted_iota(jnp.int32, (T, T), 1)
    keep = col <= row

    heads = []
    for h in range(nhead):                                             # all heads in one grid step
        q = qkv[:, h * Dh:(h + 1) * Dh]
        k = qkv[:, D + h * Dh:D + (h + 1) * Dh]
        v = qkv[:, 2 * D + h * Dh:2 * D + (h + 1) * Dh]
        # contract last dims -> K consumed in stored layout (no transpose)
        s = lax.dot_general(q, k, (((1,), (1,)), ((), ())),
                            preferred_element_type=jnp.float32)        # [T, T] f32
        s = jnp.where(keep, s, -1e9)
        mx = jnp.max(s, axis=-1, keepdims=True)
        p = jnp.exp(s - mx)
        denom = jnp.sum(p, axis=-1, keepdims=True)
        o = jnp.dot(p.astype(jnp.bfloat16), v, preferred_element_type=jnp.float32)
        heads.append(o * pl.reciprocal(denom, approx=True))            # defer 1/sum to [T, Dh]
    attn = jnp.concatenate(heads, axis=-1).astype(jnp.bfloat16)        # [T, D]

    proj = jnp.dot(attn, out_w_ref[...], preferred_element_type=jnp.float32) + out_b_ref[...]

    # residual + LayerNorm (f32 statistics)
    xr = x.astype(jnp.float32) + proj
    mean = jnp.mean(xr, axis=-1, keepdims=True)
    var = jnp.mean((xr - mean) ** 2, axis=-1, keepdims=True)
    y = (xr - mean) * lax.rsqrt(var + eps) * g_ref[...] + beta_ref[...]
    o_ref[0] = y.astype(o_ref.dtype)


def pallas_self_attn_block(x, p, gamma, beta, *, nhead, eps=1e-5):
    B, T, D = x.shape
    return pl.pallas_call(
        functools.partial(_self_attn_block_kernel, nhead=nhead, eps=eps),
        out_shape=jax.ShapeDtypeStruct((B, T, D), jnp.bfloat16),
        grid=(B,),
        in_specs=[pl.BlockSpec((1, T, D), lambda b: (b, 0, 0)),
                  pl.BlockSpec((D, 3 * D), lambda b: (0, 0)),
                  pl.BlockSpec((1, 3 * D), lambda b: (0, 0)),
                  pl.BlockSpec((D, D), lambda b: (0, 0)),
                  pl.BlockSpec((1, D), lambda b: (0, 0)),
                  pl.BlockSpec((1, D), lambda b: (0, 0)),
                  pl.BlockSpec((1, D), lambda b: (0, 0))],
        out_specs=pl.BlockSpec((1, T, D), lambda b: (b, 0, 0)),
        compiler_params=pltpu.CompilerParams(
            dimension_semantics=("parallel",),
            vmem_limit_bytes=_VMEM_LIMIT),
    )(x, p["qkv_w"], p["qkv_b"].reshape(1, 3 * D), p["out_w"],
      p["out_b"].reshape(1, D), gamma.reshape(1, D), beta.reshape(1, D))


# ----------------------------- fused cross-attention block -----------------------------
# Q proj + KV proj of memory + multi-head attention + out-proj + residual + LayerNorm.

def _cross_attn_block_kernel(x_ref, mem_ref, q_w_ref, q_b_ref, kv_w_ref, kv_b_ref,
                             out_w_ref, out_b_ref, g_ref, beta_ref, o_ref, *, nhead, eps):
    T, D = x_ref.shape[1], x_ref.shape[2]
    Dh = D // nhead
    x = x_ref[0]                                                       # [T, D] bf16
    mem = mem_ref[0]                                                   # [S, D] bf16

    qa = (jnp.dot(x, q_w_ref[...], preferred_element_type=jnp.float32)
          + q_b_ref[...]).astype(jnp.bfloat16)                         # [T, D]; scale folded into Wq
    kv = (jnp.dot(mem, kv_w_ref[...], preferred_element_type=jnp.float32)
          + kv_b_ref[...]).astype(jnp.bfloat16)                        # [S, 2D]

    heads = []
    for h in range(nhead):
        q = qa[:, h * Dh:(h + 1) * Dh]
        k = kv[:, h * Dh:(h + 1) * Dh]
        v = kv[:, D + h * Dh:D + (h + 1) * Dh]
        s = lax.dot_general(q, k, (((1,), (1,)), ((), ())),
                            preferred_element_type=jnp.float32)        # [T, S] f32 (no mask)
        mx = jnp.max(s, axis=-1, keepdims=True)
        p = jnp.exp(s - mx)
        denom = jnp.sum(p, axis=-1, keepdims=True)
        o = jnp.dot(p.astype(jnp.bfloat16), v, preferred_element_type=jnp.float32)
        heads.append(o * pl.reciprocal(denom, approx=True))
    attn = jnp.concatenate(heads, axis=-1).astype(jnp.bfloat16)        # [T, D]

    proj = jnp.dot(attn, out_w_ref[...], preferred_element_type=jnp.float32) + out_b_ref[...]

    xr = x.astype(jnp.float32) + proj
    mean = jnp.mean(xr, axis=-1, keepdims=True)
    var = jnp.mean((xr - mean) ** 2, axis=-1, keepdims=True)
    y = (xr - mean) * lax.rsqrt(var + eps) * g_ref[...] + beta_ref[...]
    o_ref[0] = y.astype(o_ref.dtype)


def pallas_cross_attn_block(x, memory, p, gamma, beta, *, nhead, eps=1e-5):
    B, T, D = x.shape
    S = memory.shape[1]
    return pl.pallas_call(
        functools.partial(_cross_attn_block_kernel, nhead=nhead, eps=eps),
        out_shape=jax.ShapeDtypeStruct((B, T, D), jnp.bfloat16),
        grid=(B,),
        in_specs=[pl.BlockSpec((1, T, D), lambda b: (b, 0, 0)),
                  pl.BlockSpec((1, S, D), lambda b: (b, 0, 0)),
                  pl.BlockSpec((D, D), lambda b: (0, 0)),
                  pl.BlockSpec((1, D), lambda b: (0, 0)),
                  pl.BlockSpec((D, 2 * D), lambda b: (0, 0)),
                  pl.BlockSpec((1, 2 * D), lambda b: (0, 0)),
                  pl.BlockSpec((D, D), lambda b: (0, 0)),
                  pl.BlockSpec((1, D), lambda b: (0, 0)),
                  pl.BlockSpec((1, D), lambda b: (0, 0)),
                  pl.BlockSpec((1, D), lambda b: (0, 0))],
        out_specs=pl.BlockSpec((1, T, D), lambda b: (b, 0, 0)),
        compiler_params=pltpu.CompilerParams(
            dimension_semantics=("parallel",),
            vmem_limit_bytes=_VMEM_LIMIT),
    )(x, memory, p["q_w"], p["q_b"].reshape(1, D), p["kv_w"], p["kv_b"].reshape(1, 2 * D),
      p["out_w"], p["out_b"].reshape(1, D), gamma.reshape(1, D), beta.reshape(1, D))


# ----------------------------- fused feed-forward block -----------------------------
# relu(x @ W1 + b1) @ W2 + b2, residual add, LayerNorm — the [tm, dim_ff] intermediate
# lives only in VMEM (never written to HBM).

def _ffn_block_kernel(x_ref, w1_ref, b1_ref, w2_ref, b2_ref, g_ref, beta_ref, o_ref, *, eps):
    x = x_ref[...]                                                     # [tm, D] bf16
    h = jnp.dot(x, w1_ref[...], preferred_element_type=jnp.float32) + b1_ref[...]
    h = jnp.maximum(h, 0.0).astype(jnp.bfloat16)                       # [tm, F]
    y = jnp.dot(h, w2_ref[...], preferred_element_type=jnp.float32) + b2_ref[...]
    xr = x.astype(jnp.float32) + y
    mean = jnp.mean(xr, axis=-1, keepdims=True)
    var = jnp.mean((xr - mean) ** 2, axis=-1, keepdims=True)
    o_ref[...] = ((xr - mean) * lax.rsqrt(var + eps) * g_ref[...] + beta_ref[...]).astype(o_ref.dtype)


def pallas_ffn_block(x, lp, gamma, beta, *, eps=1e-5):
    B, T, D = x.shape
    x2 = x.reshape(B * T, D)
    M = B * T
    F = lp["lin1_w"].shape[1]
    tm = _pick_tm(M)
    out = pl.pallas_call(
        functools.partial(_ffn_block_kernel, eps=eps),
        out_shape=jax.ShapeDtypeStruct((M, D), jnp.bfloat16),
        grid=(pl.cdiv(M, tm),),
        in_specs=[pl.BlockSpec((tm, D), lambda i: (i, 0)),
                  pl.BlockSpec((D, F), lambda i: (0, 0)),
                  pl.BlockSpec((1, F), lambda i: (0, 0)),
                  pl.BlockSpec((F, D), lambda i: (0, 0)),
                  pl.BlockSpec((1, D), lambda i: (0, 0)),
                  pl.BlockSpec((1, D), lambda i: (0, 0)),
                  pl.BlockSpec((1, D), lambda i: (0, 0))],
        out_specs=pl.BlockSpec((tm, D), lambda i: (i, 0)),
        compiler_params=pltpu.CompilerParams(
            dimension_semantics=("parallel",),
            vmem_limit_bytes=_VMEM_LIMIT),
    )(x2, lp["lin1_w"], lp["lin1_b"].reshape(1, F), lp["lin2_w"],
      lp["lin2_b"].reshape(1, D), gamma.reshape(1, D), beta.reshape(1, D))
    return out.reshape(B, T, D)


# ----------------------------- model glue (plain JAX) -----------------------------

def decoder_layer(x, memory, lp, nhead):
    """nn.TransformerDecoderLayer (norm_first=False, relu, dropout=identity in eval)."""
    x = pallas_self_attn_block(x, lp["self_attn"], lp["norm1_g"], lp["norm1_b"], nhead=nhead)
    x = pallas_cross_attn_block(x, memory, lp["cross_attn"], lp["norm2_g"], lp["norm2_b"], nhead=nhead)
    x = pallas_ffn_block(x, lp, lp["norm3_g"], lp["norm3_b"])
    return x


def voice_to_notes_forward(params, whisper_hidden, target_tokens, *, nhead, d_model):
    """VoiceToNotesModel.forward with target_tokens provided (teacher-forcing path)."""
    B, S_enc, Dw = whisper_hidden.shape
    T = target_tokens.shape[1]

    # encode_audio: (frozen whisper output) -> encoder_projection Linear (bf16 activations)
    enc = pallas_linear(whisper_hidden.reshape(B * S_enc, Dw),
                        params["enc_proj_w"], params["enc_proj_b"],
                        out_dtype=jnp.bfloat16).reshape(B, S_enc, d_model)

    # token embedding gather (plain JAX); sqrt(d_model) folded into the table.
    emb = jnp.take(params["token_emb_scaled"], target_tokens, axis=0)   # [B, T, d_model] f32

    # x = emb*sqrt(d_model) + pe[:T]  (embedding_dropout = identity in eval), bf16 out
    x = pallas_add_pe(emb, params["pe"][:T])

    for lp in params["layers"]:
        x = decoder_layer(x, enc, lp, nhead)

    # output_dropout = identity in eval
    # fused, lane-dense 384-wide output heads: [note(128) | time(100) | dur(100) | pad(56)]
    logits = pallas_linear(x.reshape(B * T, d_model), params["heads_w"], params["heads_b"],
                           out_dtype=jnp.float32).reshape(B, T, -1)
    note_logits = logits[..., :128]
    time_logits = logits[..., 128:228]
    dur_logits = logits[..., 228:328]
    return note_logits, time_logits, dur_logits


# ----------------------------- deterministic param init -----------------------------

def init_params(key, *, whisper_dim, d_model, nhead, num_layers, dim_ff,
                vocab_size, max_notes):
    dh = d_model // nhead
    q_scale = 1.0 / math.sqrt(dh)            # folded into Q projection weights
    keys = iter(jax.random.split(key, 8 + 10 * num_layers))

    def w32(shape, scale=0.02):
        return scale * jax.random.normal(next(keys), shape, jnp.float32)

    def zeros(n):
        return jnp.zeros((n,), jnp.float32)

    def ones(n):
        return jnp.ones((n,), jnp.float32)

    # fused output heads, zero-padded to 384 lanes (128 + 100 + 100 + 56)
    heads_w = jnp.concatenate(
        [w32((d_model, 128)), w32((d_model, 100)), w32((d_model, 100)),
         jnp.zeros((d_model, 56), jnp.float32)], axis=1).astype(jnp.bfloat16)

    params = {
        "enc_proj_w": w32((whisper_dim, d_model)).astype(jnp.bfloat16),
        "enc_proj_b": zeros(d_model),
        # sqrt(d_model) folded into the embedding table (kept in f32)
        "token_emb_scaled": jax.random.normal(next(keys), (vocab_size, d_model),
                                              jnp.float32) * math.sqrt(d_model),
        "heads_w": heads_w,
        "heads_b": zeros(384),
    }

    # PositionalEncoding buffer (max_len = max_notes)
    position = jnp.arange(max_notes, dtype=jnp.float32)[:, None]
    div_term = jnp.exp(jnp.arange(0, d_model, 2, dtype=jnp.float32)
                       * (-math.log(10000.0) / d_model))
    pe = jnp.zeros((max_notes, d_model), jnp.float32)
    pe = pe.at[:, 0::2].set(jnp.sin(position * div_term))
    pe = pe.at[:, 1::2].set(jnp.cos(position * div_term))
    params["pe"] = pe

    layers = []
    for _ in range(num_layers):
        q_w, k_w, v_w = w32((d_model, d_model)), w32((d_model, d_model)), w32((d_model, d_model))
        qkv_w = jnp.concatenate([q_w * q_scale, k_w, v_w], axis=1).astype(jnp.bfloat16)
        cq_w = (w32((d_model, d_model)) * q_scale).astype(jnp.bfloat16)
        ckv_w = jnp.concatenate([w32((d_model, d_model)), w32((d_model, d_model))],
                                axis=1).astype(jnp.bfloat16)
        layers.append({
            "self_attn": {
                "qkv_w": qkv_w, "qkv_b": zeros(3 * d_model),
                "out_w": w32((d_model, d_model)).astype(jnp.bfloat16), "out_b": zeros(d_model),
            },
            "cross_attn": {
                "q_w": cq_w, "q_b": zeros(d_model),
                "kv_w": ckv_w, "kv_b": zeros(2 * d_model),
                "out_w": w32((d_model, d_model)).astype(jnp.bfloat16), "out_b": zeros(d_model),
            },
            "lin1_w": w32((d_model, dim_ff)).astype(jnp.bfloat16), "lin1_b": zeros(dim_ff),
            "lin2_w": w32((dim_ff, d_model)).astype(jnp.bfloat16), "lin2_b": zeros(d_model),
            "norm1_g": ones(d_model), "norm1_b": zeros(d_model),
            "norm2_g": ones(d_model), "norm2_b": zeros(d_model),
            "norm3_g": ones(d_model), "norm3_b": zeros(d_model),
        })
    params["layers"] = layers
    return params


# ----------------------------- main -----------------------------

if __name__ == "__main__":
    # Small shapes consistent with the forward pass
    B, S_ENC, T = 2, 8, 8
    WHISPER_DIM, D_MODEL, NHEAD = 16, 32, 4
    NUM_LAYERS, DIM_FF, MAX_NOTES = 2, 64, 16
    VOCAB_SIZE = 3 + 128 + 100 + 100   # 331, as in the module

    root = jax.random.PRNGKey(0)
    k_params, k_audio, k_tok = jax.random.split(root, 3)

    params = init_params(k_params, whisper_dim=WHISPER_DIM, d_model=D_MODEL,
                         nhead=NHEAD, num_layers=NUM_LAYERS, dim_ff=DIM_FF,
                         vocab_size=VOCAB_SIZE, max_notes=MAX_NOTES)

    whisper_hidden = jax.random.normal(k_audio, (B, S_ENC, WHISPER_DIM), jnp.float32)
    target_tokens = jax.random.randint(k_tok, (B, T), 0, VOCAB_SIZE, dtype=jnp.int32)

    fwd = jax.jit(functools.partial(voice_to_notes_forward, nhead=NHEAD, d_model=D_MODEL))
    note_logits, time_logits, dur_logits = fwd(params, whisper_hidden, target_tokens)
    jax.block_until_ready((note_logits, time_logits, dur_logits))

    assert note_logits.shape == (B, T, 128)
    assert time_logits.shape == (B, T, 100)
    assert dur_logits.shape == (B, T, 100)
    assert note_logits.dtype == jnp.float32

    print("KERNEL_OK")
</pallas_src>

<mosaic_0001>
module attributes {stable_mosaic.version = 11 : i64} {
  func.func @_add_pe_kernel(%arg0: i32, %arg1: memref<1x8x32xf32, #tpu.memory_space<vmem>>, %arg2: memref<8x32xf32, #tpu.memory_space<vmem>>, %arg3: memref<1x8x32xbf16, #tpu.memory_space<vmem>>) attributes {dimension_semantics = [#tpu.dimension_semantics<parallel>], iteration_bounds = array<i64: 2>, scalar_prefetch = 0 : i64, scratch_operands = 0 : i64, tpu.core_type = #tpu.core_type<tc>, window_params = [{transform_indices = @transform_0, window_bounds = array<i64: 1, 8, 32>}, {pipeline_mode = #tpu.pipeline_mode<synchronous>, transform_indices = @transform_1, window_bounds = array<i64: 8, 32>}, {transform_indices = @transform_2, window_bounds = array<i64: 1, 8, 32>}]} {
    %c0 = arith.constant 0 : index
    %c0_0 = arith.constant 0 : index
    %c0_1 = arith.constant 0 : index
    %0 = vector.load %arg1[%c0, %c0_0, %c0_1] : memref<1x8x32xf32, #tpu.memory_space<vmem>>, vector<1x8x32xf32>
    %c0_2 = arith.constant 0 : index
    %c0_3 = arith.constant 0 : index
    %1 = vector.load %arg2[%c0_2, %c0_3] : memref<8x32xf32, #tpu.memory_space<vmem>>, vector<8x32xf32>
    %2 = vector.shape_cast %1 : vector<8x32xf32> to vector<1x8x32xf32>
    %3 = arith.addf %0, %2 : vector<1x8x32xf32>
    %4 = arith.truncf %3 : vector<1x8x32xf32> to vector<1x8x32xbf16>
    %c0_4 = arith.constant 0 : index
    %c0_5 = arith.constant 0 : index
    %c0_6 = arith.constant 0 : index
    %5 = vector.load %arg3[%c0_4, %c0_5, %c0_6] : memref<1x8x32xbf16, #tpu.memory_space<vmem>>, vector<1x8x32xbf16>
    tpu.vector_store %arg3[%c0_4, %c0_5, %c0_6], %4 {strides = array<i32>} : memref<1x8x32xbf16, #tpu.memory_space<vmem>>, vector<1x8x32xbf16>,
    return
  }
  func.func @transform_0(%arg0: i32) -> (i32, i32, i32) {
    %c0_i32 = arith.constant 0 : i32
    %c0_i32_0 = arith.constant 0 : i32
    %c0_i32_1 = arith.constant 0 : i32
    return %arg0, %c0_i32, %c0_i32_0 : i32, i32, i32
  }
  func.func @transform_1(%arg0: i32) -> (i32, i32) {
    %c0_i32 = arith.constant 0 : i32
    %c0_i32_0 = arith.constant 0 : i32
    %c0_i32_1 = arith.constant 0 : i32
    return %c0_i32, %c0_i32_0 : i32, i32
  }
  func.func @transform_2(%arg0: i32) -> (i32, i32, i32) {
    %c0_i32 = arith.constant 0 : i32
    %c0_i32_0 = arith.constant 0 : i32
    %c0_i32_1 = arith.constant 0 : i32
    return %arg0, %c0_i32, %c0_i32_0 : i32, i32, i32
  }
}

module attributes {stable_mosaic.version = 11 : i64} {
  func.func @_linear_kernel(%arg0: i32, %arg1: memref<8x16xf32, #tpu.memory_space<vmem>>, %arg2: memref<16x32xbf16, #tpu.memory_space<vmem>>, %arg3: memref<1x32xf32, #tpu.memory_space<vmem>>, %arg4: memref<8x32xbf16, #tpu.memory_space<vmem>>) attributes {dimension_semantics = [#tpu.dimension_semantics<parallel>], iteration_bounds = array<i64: 2>, scalar_prefetch = 0 : i64, scratch_operands = 0 : i64, tpu.core_type = #tpu.core_type<tc>, window_params = [{transform_indices = @transform_0, window_bounds = array<i64: 8, 16>}, {pipeline_mode = #tpu.pipeline_mode<synchronous>, transform_indices = @transform_1, window_bounds = array<i64: 16, 32>}, {pipeline_mode = #tpu.pipeline_mode<synchronous>, transform_indices = @transform_2, window_bounds = array<i64: 1, 32>}, {transform_indices = @transform_3, window_bounds = array<i64: 8, 32>}]} {
    %c0 = arith.constant 0 : index
    %c0_0 = arith.constant 0 : index
    %0 = vector.load %arg1[%c0, %c0_0] : memref<8x16xf32, #tpu.memory_space<vmem>>, vector<8x16xf32>
    %1 = arith.truncf %0 : vector<8x16xf32> to vector<8x16xbf16>
    %c0_1 = arith.constant 0 : index
    %c0_2 = arith.constant 0 : index
    %2 = vector.load %arg2[%c0_1, %c0_2] : memref<16x32xbf16, #tpu.memory_space<vmem>>, vector<16x32xbf16>
    %cst = arith.constant dense<0.000000e+00> : vector<8x32xf32>
    %3 = tpu.matmul %1, %2, %cst {dimension_numbers = #tpu.dot_dimension_numbers<[1], [0], [0], [1], [0, 0, 1, 1], [], []>} : vector<8x16xbf16>, vector<16x32xbf16>, vector<8x32xf32> -> vector<8x32xf32>
    %c0_3 = arith.constant 0 : index
    %c0_4 = arith.constant 0 : index
    %4 = vector.load %arg3[%c0_3, %c0_4] : memref<1x32xf32, #tpu.memory_space<vmem>>, vector<1x32xf32>
    %5 = vector.broadcast %4 : vector<1x32xf32> to vector<8x32xf32>
    %6 = arith.addf %3, %5 : vector<8x32xf32>
    %7 = arith.truncf %6 : vector<8x32xf32> to vector<8x32xbf16>
    %c0_5 = arith.constant 0 : index
    %c0_6 = arith.constant 0 : index
    %8 = vector.load %arg4[%c0_5, %c0_6] : memref<8x32xbf16, #tpu.memory_space<vmem>>, vector<8x32xbf16>
    tpu.vector_store %arg4[%c0_5, %c0_6], %7 {strides = array<i32>} : memref<8x32xbf16, #tpu.memory_space<vmem>>, vector<8x32xbf16>,
    return
  }
  func.func @transform_0(%arg0: i32) -> (i32, i32) {
    %c0_i32 = arith.constant 0 : i32
    %c0_i32_0 = arith.constant 0 : i32
    return %arg0, %c0_i32 : i32, i32
  }
  func.func @transform_1(%arg0: i32) -> (i32, i32) {
    %c0_i32 = arith.constant 0 : i32
    %c0_i32_0 = arith.constant 0 : i32
    %c0_i32_1 = arith.constant 0 : i32
    return %c0_i32, %c0_i32_0 : i32, i32
  }
  func.func @transform_2(%arg0: i32) -> (i32, i32) {
    %c0_i32 = arith.constant 0 : i32
    %c0_i32_0 = arith.constant 0 : i32
    %c0_i32_1 = arith.constant 0 : i32
    return %c0_i32, %c0_i32_0 : i32, i32
  }
  func.func @transform_3(%arg0: i32) -> (i32, i32) {
    %c0_i32 = arith.constant 0 : i32
    %c0_i32_0 = arith.constant 0 : i32
    return %arg0, %c0_i32 : i32, i32
  }
}

module attributes {stable_mosaic.version = 11 : i64} {
  func.func @_self_attn_block_kernel(%arg0: i32, %arg1: memref<1x8x32xbf16, #tpu.memory_space<vmem>>, %arg2: memref<32x96xbf16, #tpu.memory_space<vmem>>, %arg3: memref<1x96xf32, #tpu.memory_space<vmem>>, %arg4: memref<32x32xbf16, #tpu.memory_space<vmem>>, %arg5: memref<1x32xf32, #tpu.memory_space<vmem>>, %arg6: memref<1x32xf32, #tpu.memory_space<vmem>>, %arg7: memref<1x32xf32, #tpu.memory_space<vmem>>, %arg8: memref<1x8x32xbf16, #tpu.memory_space<vmem>>) attributes {dimension_semantics = [#tpu.dimension_semantics<parallel>], iteration_bounds = array<i64: 2>, scalar_prefetch = 0 : i64, scratch_operands = 0 : i64, tpu.core_type = #tpu.core_type<tc>, window_params = [{transform_indices = @transform_0, window_bounds = array<i64: 1, 8, 32>}, {pipeline_mode = #tpu.pipeline_mode<synchronous>, transform_indices = @transform_1, window_bounds = array<i64: 32, 96>}, {pipeline_mode = #tpu.pipeline_mode<synchronous>, transform_indices = @transform_2, window_bounds = array<i64: 1, 96>}, {pipeline_mode = #tpu.pipeline_mode<synchronous>, transform_indices = @transform_3, window_bounds = array<i64: 32, 32>}, {pipeline_mode = #tpu.pipeline_mode<synchronous>, transform_indices = @transform_4, window_bounds = array<i64: 1, 32>}, {pipeline_mode = #tpu.pipeline_mode<synchronous>, transform_indices = @transform_5, window_bounds = array<i64: 1, 32>}, {pipeline_mode = #tpu.pipeline_mode<synchronous>, transform_indices = @transform_6, window_bounds = array<i64: 1, 32>}, {transform_indices = @transform_7, window_bounds = array<i64: 1, 8, 32>}]} {
    %c0 = arith.constant 0 : index
    %c0_0 = arith.constant 0 : index
    %c0_1 = arith.constant 0 : index
    %0 = vector.load %arg1[%c0, %c0_0, %c0_1] : memref<1x8x32xbf16, #tpu.memory_space<vmem>>, vector<1x8x32xbf16>
    %1 = vector.shape_cast %0 : vector<1x8x32xbf16> to vector<8x32xbf16>
    %c0_2 = arith.constant 0 : index
    %c0_3 = arith.constant 0 : index
    %2 = vector.load %arg2[%c0_2, %c0_3] : memref<32x96xbf16, #tpu.memory_space<vmem>>, vector<32x96xbf16>
    %cst = arith.constant dense<0.000000e+00> : vector<8x96xf32>
    %3 = tpu.matmul %1, %2, %cst {dimension_numbers = #tpu.dot_dimension_numbers<[1], [0], [0], [1], [0, 0, 1, 1], [], []>} : vector<8x32xbf16>, vector<32x96xbf16>, vector<8x96xf32> -> vector<8x96xf32>
    %c0_4 = arith.constant 0 : index
    %c0_5 = arith.constant 0 : index
    %4 = vector.load %arg3[%c0_4, %c0_5] : memref<1x96xf32, #tpu.memory_space<vmem>>, vector<1x96xf32>
    %5 = vector.broadcast %4 : vector<1x96xf32> to vector<8x96xf32>
    %6 = arith.addf %3, %5 : vector<8x96xf32>
    %7 = arith.truncf %6 : vector<8x96xf32> to vector<8x96xbf16>
    %8 = tpu.iota {dimensions = array<i32: 0>} : vector<8x8xi32>
    %9 = tpu.iota {dimensions = array<i32: 1>} : vector<8x8xi32>
    %10 = arith.cmpi sle, %9, %8 : vector<8x8xi32>
    %11 = vector.extract_strided_slice %7 {offsets = [0, 0], sizes = [8, 8], strides = [1, 1]} : vector<8x96xbf16> to vector<8x8xbf16>
    %12 = vector.extract_strided_slice %7 {offsets = [0, 32], sizes = [8, 8], strides = [1, 1]} : vector<8x96xbf16> to vector<8x8xbf16>
    %13 = vector.extract_strided_slice %7 {offsets = [0, 64], sizes = [8, 8], strides = [1, 1]} : vector<8x96xbf16> to vector<8x8xbf16>
    %cst_6 = arith.constant dense<0.000000e+00> : vector<8x8xf32>
    %14 = tpu.matmul %11, %12, %cst_6 {dimension_numbers = #tpu.dot_dimension_numbers<[1], [1], [0], [0], [0, 0, 1, 0], [], []>} : vector<8x8xbf16>, vector<8x8xbf16>, vector<8x8xf32> -> vector<8x8xf32>
    %cst_7 = arith.constant -1.000000e+09 : f32
    %15 = vector.broadcast %cst_7 : f32 to vector<8x8xf32>
    %16 = arith.select %10, %14, %15 : vector<8x8xi1>, vector<8x8xf32>
    %cst_8 = arith.constant dense<0xFF800000> : vector<8xf32>
    %17 = vector.multi_reduction <maximumf>, %16, %cst_8 [1] : vector<8x8xf32> to vector<8xf32>
    %18 = vector.shape_cast %17 : vector<8xf32> to vector<8x1xf32>
    %19 = vector.broadcast %18 : vector<8x1xf32> to vector<8x8xf32>
    %20 = arith.subf %16, %19 : vector<8x8xf32>
    %21 = math.exp %20 : vector<8x8xf32>
    %cst_9 = arith.constant dense<0.000000e+00> : vector<8xf32>
    %22 = vector.multi_reduction <add>, %21, %cst_9 [1] : vector<8x8xf32> to vector<8xf32>
    %23 = vector.shape_cast %22 : vector<8xf32> to vector<8x1xf32>
    %24 = arith.truncf %21 : vector<8x8xf32> to vector<8x8xbf16>
    %cst_10 = arith.constant dense<0.000000e+00> : vector<8x8xf32>
    %25 = tpu.matmul %24, %13, %cst_10 {dimension_numbers = #tpu.dot_dimension_numbers<[1], [0], [0], [1], [0, 0, 1, 1], [], []>} : vector<8x8xbf16>, vector<8x8xbf16>, vector<8x8xf32> -> vector<8x8xf32>
    %26 = tpu.reciprocal %23 {approx = true} : vector<8x1xf32> -> vector<8x1xf32>
    %27 = vector.broadcast %26 : vector<8x1xf32> to vector<8x8xf32>
    %28 = arith.mulf %25, %27 : vector<8x8xf32>
    %29 = vector.extract_strided_slice %7 {offsets = [0, 8], sizes = [8, 8], strides = [1, 1]} : vector<8x96xbf16> to vector<8x8xbf16>
    %30 = vector.extract_strided_slice %7 {offsets = [0, 40], sizes = [8, 8], strides = [1, 1]} : vector<8x96xbf16> to vector<8x8xbf16>
    %31 = vector.extract_strided_slice %7 {offsets = [0, 72], sizes = [8, 8], strides = [1, 1]} : vector<8x96xbf16> to vector<8x8xbf16>
    %cst_11 = arith.constant dense<0.000000e+00> : vector<8x8xf32>
    %32 = tpu.matmul %29, %30, %cst_11 {dimension_numbers = #tpu.dot_dimension_numbers<[1], [1], [0], [0], [0, 0, 1, 0], [], []>} : vector<8x8xbf16>, vector<8x8xbf16>, vector<8x8xf32> -> vector<8x8xf32>
    %cst_12 = arith.constant -1.000000e+09 : f32
    %33 = vector.broadcast %cst_12 : f32 to vector<8x8xf32>
    %34 = arith.select %10, %32, %33 : vector<8x8xi1>, vector<8x8xf32>
    %cst_13 = arith.constant dense<0xFF800000> : vector<8xf32>
    %35 = vector.multi_reduction <maximumf>, %34, %cst_13 [1] : vector<8x8xf32> to vector<8xf32>
    %36 = vector.shape_cast %35 : vector<8xf32> to vector<8x1xf32>
    %37 = vector.broadcast %36 : vector<8x1xf32> to vector<8x8xf32>
    %38 = arith.subf %34, %37 : vector<8x8xf32>
    %39 = math.exp %38 : vector<8x8xf32>
    %cst_14 = arith.constant dense<0.000000e+00> : vector<8xf32>
    %40 = vector.multi_reduction <add>, %39, %cst_14 [1] : vector<8x8xf32> to vector<8xf32>
    %41 = vector.shape_cast %40 : vector<8xf32> to vector<8x1xf32>
    %42 = arith.truncf %39 : vector<8x8xf32> to vector<8x8xbf16>
    %cst_15 = arith.constant dense<0.000000e+00> : vector<8x8xf32>
    %43 = tpu.matmul %42, %31, %cst_15 {dimension_numbers = #tpu.dot_dimension_numbers<[1], [0], [0], [1], [0, 0, 1, 1], [], []>} : vector<8x8xbf16>, vector<8x8xbf16>, vector<8x8xf32> -> vector<8x8xf32>
    %44 = tpu.reciprocal %41 {approx = true} : vector<8x1xf32> -> vector<8x1xf32>
    %45 = vector.broadcast %44 : vector<8x1xf32> to vector<8x8xf32>
    %46 = arith.mulf %43, %45 : vector<8x8xf32>
    %47 = vector.extract_strided_slice %7 {offsets = [0, 16], sizes = [8, 8], strides = [1, 1]} : vector<8x96xbf16> to vector<8x8xbf16>
    %48 = vector.extract_strided_slice %7 {offsets = [0, 48], sizes = [8, 8], strides = [1, 1]} : vector<8x96xbf16> to vector<8x8xbf16>
    %49 = vector.extract_strided_slice %7 {offsets = [0, 80], sizes = [8, 8], strides = [1, 1]} : vector<8x96xbf16> to vector<8x8xbf16>
    %cst_16 = arith.constant dense<0.000000e+00> : vector<8x8xf32>
    %50 = tpu.matmul %47, %48, %cst_16 {dimension_numbers = #tpu.dot_dimension_numbers<[1], [1], [0], [0], [0, 0, 1, 0], [], []>} : vector<8x8xbf16>, vector<8x8xbf16>, vector<8x8xf32> -> vector<8x8xf32>
    %cst_17 = arith.constant -1.000000e+09 : f32
    %51 = vector.broadcast %cst_17 : f32 to vector<8x8xf32>
    %52 = arith.select %10, %50, %51 : vector<8x8xi1>, vector<8x8xf32>
    %cst_18 = arith.constant dense<0xFF800000> : vector<8xf32>
    %53 = vector.multi_reduction <maximumf>, %52, %cst_18 [1] : vector<8x8xf32> to vector<8xf32>
    %54 = vector.shape_cast %53 : vector<8xf32> to vector<8x1xf32>
    %55 = vector.broadcast %54 : vector<8x1xf32> to vector<8x8xf32>
    %56 = arith.subf %52, %55 : vector<8x8xf32>
    %57 = math.exp %56 : vector<8x8xf32>
    %cst_19 = arith.constant dense<0.000000e+00> : vector<8xf32>
    %58 = vector.multi_reduction <add>, %57, %cst_19 [1] : vector<8x8xf32> to vector<8xf32>
    %59 = vector.shape_cast %58 : vector<8xf32> to vector<8x1xf32>
    %60 = arith.truncf %57 : vector<8x8xf32> to vector<8x8xbf16>
    %cst_20 = arith.constant dense<0.000000e+00> : vector<8x8xf32>
    %61 = tpu.matmul %60, %49, %cst_20 {dimension_numbers = #tpu.dot_dimension_numbers<[1], [0], [0], [1], [0, 0, 1, 1], [], []>} : vector<8x8xbf16>, vector<8x8xbf16>, vector<8x8xf32> -> vector<8x8xf32>
    %62 = tpu.reciprocal %59 {approx = true} : vector<8x1xf32> -> vector<8x1xf32>
    %63 = vector.broadcast %62 : vector<8x1xf32> to vector<8x8xf32>
    %64 = arith.mulf %61, %63 : vector<8x8xf32>
    %65 = vector.extract_strided_slice %7 {offsets = [0, 24], sizes = [8, 8], strides = [1, 1]} : vector<8x96xbf16> to vector<8x8xbf16>
    %66 = vector.extract_strided_slice %7 {offsets = [0, 56], sizes = [8, 8], strides = [1, 1]} : vector<8x96xbf16> to vector<8x8xbf16>
    %67 = vector.extract_strided_slice %7 {offsets = [0, 88], sizes = [8, 8], strides = [1, 1]} : vector<8x96xbf16> to vector<8x8xbf16>
    %cst_21 = arith.constant dense<0.000000e+00> : vector<8x8xf32>
    %68 = tpu.matmul %65, %66, %cst_21 {dimension_numbers = #tpu.dot_dimension_numbers<[1], [1], [0], [0], [0, 0, 1, 0], [], []>} : vector<8x8xbf16>, vector<8x8xbf16>, vector<8x8xf32> -> vector<8x8xf32>
    %cst_22 = arith.constant -1.000000e+09 : f32
    %69 = vector.broadcast %cst_22 : f32 to vector<8x8xf32>
    %70 = arith.select %10, %68, %69 : vector<8x8xi1>, vector<8x8xf32>
    %cst_23 = arith.constant dense<0xFF800000> : vector<8xf32>
    %71 = vector.multi_reduction <maximumf>, %70, %cst_23 [1] : vector<8x8xf32> to vector<8xf32>
    %72 = vector.shape_cast %71 : vector<8xf32> to vector<8x1xf32>
    %73 = vector.broadcast %72 : vector<8x1xf32> to vector<8x8xf32>
    %74 = arith.subf %70, %73 : vector<8x8xf32>
    %75 = math.exp %74 : vector<8x8xf32>
    %cst_24 = arith.constant dense<0.000000e+00> : vector<8xf32>
    %76 = vector.multi_reduction <add>, %75, %cst_24 [1] : vector<8x8xf32> to vector<8xf32>
    %77 = vector.shape_cast %76 : vector<8xf32> to vector<8x1xf32>
    %78 = arith.truncf %75 : vector<8x8xf32> to vector<8x8xbf16>
    %cst_25 = arith.constant dense<0.000000e+00> : vector<8x8xf32>
    %79 = tpu.matmul %78, %67, %cst_25 {dimension_numbers = #tpu.dot_dimension_numbers<[1], [0], [0], [1], [0, 0, 1, 1], [], []>} : vector<8x8xbf16>, vector<8x8xbf16>, vector<8x8xf32> -> vector<8x8xf32>
    %80 = tpu.reciprocal %77 {approx = true} : vector<8x1xf32> -> vector<8x1xf32>
    %81 = vector.broadcast %80 : vector<8x1xf32> to vector<8x8xf32>
    %82 = arith.mulf %79, %81 : vector<8x8xf32>
    %83 = tpu.concatenate %28, %46, %64, %82 in 1 : vector<8x8xf32>, vector<8x8xf32>, vector<8x8xf32>, vector<8x8xf32> -> vector<8x32xf32>
    %84 = arith.truncf %83 : vector<8x32xf32> to vector<8x32xbf16>
    %c0_26 = arith.constant 0 : index
    %c0_27 = arith.constant 0 : index
    %85 = vector.load %arg4[%c0_26, %c0_27] : memref<32x32xbf16, #tpu.memory_space<vmem>>, vector<32x32xbf16>
    %cst_28 = arith.constant dense<0.000000e+00> : vector<8x32xf32>
    %86 = tpu.matmul %84, %85, %cst_28 {dimension_numbers = #tpu.dot_dimension_numbers<[1], [0], [0], [1], [0, 0, 1, 1], [], []>} : vector<8x32xbf16>, vector<32x32xbf16>, vector<8x32xf32> -> vector<8x32xf32>
    %c0_29 = arith.constant 0 : index
    %c0_30 = arith.constant 0 : index
    %87 = vector.load %arg5[%c0_29, %c0_30] : memref<1x32xf32, #tpu.memory_space<vmem>>, vector<1x32xf32>
    %88 = vector.broadcast %87 : vector<1x32xf32> to vector<8x32xf32>
    %89 = arith.addf %86, %88 : vector<8x32xf32>
    %90 = arith.extf %1 : vector<8x32xbf16> to vector<8x32xf32>
    %91 = arith.addf %90, %89 : vector<8x32xf32>
    %cst_31 = arith.constant dense<0.000000e+00> : vector<8xf32>
    %92 = vector.multi_reduction <add>, %91, %cst_31 [1] : vector<8x32xf32> to vector<8xf32>
    %93 = vector.shape_cast %92 : vector<8xf32> to vector<8x1xf32>
    %cst_32 = arith.constant 3.200000e+01 : f32
    %94 = vector.broadcast %cst_32 : f32 to vector<8x1xf32>
    %95 = arith.divf %93, %94 : vector<8x1xf32>
    %96 = vector.broadcast %95 : vector<8x1xf32> to vector<8x32xf32>
    %97 = arith.subf %91, %96 : vector<8x32xf32>
    %98 = arith.mulf %97, %97 : vector<8x32xf32>
    %cst_33 = arith.constant dense<0.000000e+00> : vector<8xf32>
    %99 = vector.multi_reduction <add>, %98, %cst_33 [1] : vector<8x32xf32> to vector<8xf32>
    %100 = vector.shape_cast %99 : vector<8xf32> to vector<8x1xf32>
    %cst_34 = arith.constant 3.200000e+01 : f32
    %101 = vector.broadcast %cst_34 : f32 to vector<8x1xf32>
    %102 = arith.divf %100, %101 : vector<8x1xf32>
    %103 = vector.broadcast %95 : vector<8x1xf32> to vector<8x32xf32>
    %104 = arith.subf %91, %103 : vector<8x32xf32>
    %cst_35 = arith.constant 9.99999974E-6 : f32
    %105 = vector.broadcast %cst_35 : f32 to vector<8x1xf32>
    %106 = arith.addf %102, %105 : vector<8x1xf32>
    %107 = math.rsqrt %106 : vector<8x1xf32>
    %108 = vector.broadcast %107 : vector<8x1xf32> to vector<8x32xf32>
    %109 = arith.mulf %104, %108 : vector<8x32xf32>
    %c0_36 = arith.constant 0 : index
    %c0_37 = arith.constant 0 : index
    %110 = vector.load %arg6[%c0_36, %c0_37] : memref<1x32xf32, #tpu.memory_space<vmem>>, vector<1x32xf32>
    %111 = vector.broadcast %110 : vector<1x32xf32> to vector<8x32xf32>
    %112 = arith.mulf %109, %111 : vector<8x32xf32>
    %c0_38 = arith.constant 0 : index
    %c0_39 = arith.constant 0 : index
    %113 = vector.load %arg7[%c0_38, %c0_39] : memref<1x32xf32, #tpu.memory_space<vmem>>, vector<1x32xf32>
    %114 = vector.broadcast %113 : vector<1x32xf32> to vector<8x32xf32>
    %115 = arith.addf %112, %114 : vector<8x32xf32>
    %116 = arith.truncf %115 : vector<8x32xf32> to vector<8x32xbf16>
    %c0_40 = arith.constant 0 : index
    %c0_41 = arith.constant 0 : index
    %c0_42 = arith.constant 0 : index
    %117 = vector.load %arg8[%c0_40, %c0_41, %c0_42] : memref<1x8x32xbf16, #tpu.memory_space<vmem>>, vector<1x8x32xbf16>
    %118 = vector.shape_cast %117 : vector<1x8x32xbf16> to vector<8x32xbf16>
    %119 = vector.shape_cast %116 : vector<8x32xbf16> to vector<1x8x32xbf16>
    tpu.vector_store %arg8[%c0_40, %c0_41, %c0_42], %119 {strides = array<i32>} : memref<1x8x32xbf16, #tpu.memory_space<vmem>>, vector<1x8x32xbf16>,
    return
  }
  func.func @transform_0(%arg0: i32) -> (i32, i32, i32) {
    %c0_i32 = arith.constant 0 : i32
    %c0_i32_0 = arith.constant 0 : i32
    %c0_i32_1 = arith.constant 0 : i32
    return %arg0, %c0_i32, %c0_i32_0 : i32, i32, i32
  }
  func.func @transform_1(%arg0: i32) -> (i32, i32) {
    %c0_i32 = arith.constant 0 : i32
    %c0_i32_0 = arith.constant 0 : i32
    %c0_i32_1 = arith.constant 0 : i32
    return %c0_i32, %c0_i32_0 : i32, i32
  }
  func.func @transform_2(%arg0: i32) -> (i32, i32) {
    %c0_i32 = arith.constant 0 : i32
    %c0_i32_0 = arith.constant 0 : i32
    %c0_i32_1 = arith.constant 0 : i32
    return %c0_i32, %c0_i32_0 : i32, i32
  }
  func.func @transform_3(%arg0: i32) -> (i32, i32) {
    %c0_i32 = arith.constant 0 : i32
    %c0_i32_0 = arith.constant 0 : i32
    %c0_i32_1 = arith.constant 0 : i32
    return %c0_i32, %c0_i32_0 : i32, i32
  }
  func.func @transform_4(%arg0: i32) -> (i32, i32) {
    %c0_i32 = arith.constant 0 : i32
    %c0_i32_0 = arith.constant 0 : i32
    %c0_i32_1 = arith.constant 0 : i32
    return %c0_i32, %c0_i32_0 : i32, i32
  }
  func.func @transform_5(%arg0: i32) -> (i32, i32) {
    %c0_i32 = arith.constant 0 : i32
    %c0_i32_0 = arith.constant 0 : i32
    %c0_i32_1 = arith.constant 0 : i32
    return %c0_i32, %c0_i32_0 : i32, i32
  }
  func.func @transform_6(%arg0: i32) -> (i32, i32) {
    %c0_i32 = arith.constant 0 : i32
    %c0_i32_0 = arith.constant 0 : i32
    %c0_i32_1 = arith.constant 0 : i32
    return %c0_i32, %c0_i32_0 : i32, i32
  }
  func.func @transform_7(%arg0: i32) -> (i32, i32, i32) {
    %c0_i32 = arith.constant 0 : i32
    %c0_i32_0 = arith.constant 0 : i32
    %c0_i32_1 = arith.constant 0 : i32
    return %arg0, %c0_i32, %c0_i32_0 : i32, i32, i32
  }
}

module attributes {stable_mosaic.version = 11 : i64} {
  func.func @_cross_attn_block_kernel(%arg0: i32, %arg1: memref<1x8x32xbf16, #tpu.memory_space<vmem>>, %arg2: memref<1x8x32xbf16, #tpu.memory_space<vmem>>, %arg3: memref<32x32xbf16, #tpu.memory_space<vmem>>, %arg4: memref<1x32xf32, #tpu.memory_space<vmem>>, %arg5: memref<32x64xbf16, #tpu.memory_space<vmem>>, %arg6: memref<1x64xf32, #tpu.memory_space<vmem>>, %arg7: memref<32x32xbf16, #tpu.memory_space<vmem>>, %arg8: memref<1x32xf32, #tpu.memory_space<vmem>>, %arg9: memref<1x32xf32, #tpu.memory_space<vmem>>, %arg10: memref<1x32xf32, #tpu.memory_space<vmem>>, %arg11: memref<1x8x32xbf16, #tpu.memory_space<vmem>>) attributes {dimension_semantics = [#tpu.dimension_semantics<parallel>], iteration_bounds = array<i64: 2>, scalar_prefetch = 0 : i64, scratch_operands = 0 : i64, tpu.core_type = #tpu.core_type<tc>, window_params = [{transform_indices = @transform_0, window_bounds = array<i64: 1, 8, 32>}, {transform_indices = @transform_1, window_bounds = array<i64: 1, 8, 32>}, {pipeline_mode = #tpu.pipeline_mode<synchronous>, transform_indices = @transform_2, window_bounds = array<i64: 32, 32>}, {pipeline_mode = #tpu.pipeline_mode<synchronous>, transform_indices = @transform_3, window_bounds = array<i64: 1, 32>}, {pipeline_mode = #tpu.pipeline_mode<synchronous>, transform_indices = @transform_4, window_bounds = array<i64: 32, 64>}, {pipeline_mode = #tpu.pipeline_mode<synchronous>, transform_indices = @transform_5, window_bounds = array<i64: 1, 64>}, {pipeline_mode = #tpu.pipeline_mode<synchronous>, transform_indices = @transform_6, window_bounds = array<i64: 32, 32>}, {pipeline_mode = #tpu.pipeline_mode<synchronous>, transform_indices = @transform_7, window_bounds = array<i64: 1, 32>}, {pipeline_mode = #tpu.pipeline_mode<synchronous>, transform_indices = @transform_8, window_bounds = array<i64: 1, 32>}, {pipeline_mode = #tpu.pipeline_mode<synchronous>, transform_indices = @transform_9, window_bounds = array<i64: 1, 32>}, {transform_indices = @transform_10, window_bounds = array<i64: 1, 8, 32>}]} {
    %c0 = arith.constant 0 : index
    %c0_0 = arith.constant 0 : index
    %c0_1 = arith.constant 0 : index
    %0 = vector.load %arg1[%c0, %c0_0, %c0_1] : memref<1x8x32xbf16, #tpu.memory_space<vmem>>, vector<1x8x32xbf16>
    %1 = vector.shape_cast %0 : vector<1x8x32xbf16> to vector<8x32xbf16>
    %c0_2 = arith.constant 0 : index
    %c0_3 = arith.constant 0 : index
    %c0_4 = arith.constant 0 : index
    %2 = vector.load %arg2[%c0_2, %c0_3, %c0_4] : memref<1x8x32xbf16, #tpu.memory_space<vmem>>, vector<1x8x32xbf16>
    %3 = vector.shape_cast %2 : vector<1x8x32xbf16> to vector<8x32xbf16>
    %c0_5 = arith.constant 0 : index
    %c0_6 = arith.constant 0 : index
    %4 = vector.load %arg3[%c0_5, %c0_6] : memref<32x32xbf16, #tpu.memory_space<vmem>>, vector<32x32xbf16>
    %cst = arith.constant dense<0.000000e+00> : vector<8x32xf32>
    %5 = tpu.matmul %1, %4, %cst {dimension_numbers = #tpu.dot_dimension_numbers<[1], [0], [0], [1], [0, 0, 1, 1], [], []>} : vector<8x32xbf16>, vector<32x32xbf16>, vector<8x32xf32> -> vector<8x32xf32>
    %c0_7 = arith.constant 0 : index
    %c0_8 = arith.constant 0 : index
    %6 = vector.load %arg4[%c0_7, %c0_8] : memref<1x32xf32, #tpu.memory_space<vmem>>, vector<1x32xf32>
    %7 = vector.broadcast %6 : vector<1x32xf32> to vector<8x32xf32>
    %8 = arith.addf %5, %7 : vector<8x32xf32>
    %9 = arith.truncf %8 : vector<8x32xf32> to vector<8x32xbf16>
    %c0_9 = arith.constant 0 : index
    %c0_10 = arith.constant 0 : index
    %10 = vector.load %arg5[%c0_9, %c0_10] : memref<32x64xbf16, #tpu.memory_space<vmem>>, vector<32x64xbf16>
    %cst_11 = arith.constant dense<0.000000e+00> : vector<8x64xf32>
    %11 = tpu.matmul %3, %10, %cst_11 {dimension_numbers = #tpu.dot_dimension_numbers<[1], [0], [0], [1], [0, 0, 1, 1], [], []>} : vector<8x32xbf16>, vector<32x64xbf16>, vector<8x64xf32> -> vector<8x64xf32>
    %c0_12 = arith.constant 0 : index
    %c0_13 = arith.constant 0 : index
    %12 = vector.load %arg6[%c0_12, %c0_13] : memref<1x64xf32, #tpu.memory_space<vmem>>, vector<1x64xf32>
    %13 = vector.broadcast %12 : vector<1x64xf32> to vector<8x64xf32>
    %14 = arith.addf %11, %13 : vector<8x64xf32>
    %15 = arith.truncf %14 : vector<8x64xf32> to vector<8x64xbf16>
    %16 = vector.extract_strided_slice %9 {offsets = [0, 0], sizes = [8, 8], strides = [1, 1]} : vector<8x32xbf16> to vector<8x8xbf16>
    %17 = vector.extract_strided_slice %15 {offsets = [0, 0], sizes = [8, 8], strides = [1, 1]} : vector<8x64xbf16> to vector<8x8xbf16>
    %18 = vector.extract_strided_slice %15 {offsets = [0, 32], sizes = [8, 8], strides = [1, 1]} : vector<8x64xbf16> to vector<8x8xbf16>
    %cst_14 = arith.constant dense<0.000000e+00> : vector<8x8xf32>
    %19 = tpu.matmul %16, %17, %cst_14 {dimension_numbers = #tpu.dot_dimension_numbers<[1], [1], [0], [0], [0, 0, 1, 0], [], []>} : vector<8x8xbf16>, vector<8x8xbf16>, vector<8x8xf32> -> vector<8x8xf32>
    %cst_15 = arith.constant dense<0xFF800000> : vector<8xf32>
    %20 = vector.multi_reduction <maximumf>, %19, %cst_15 [1] : vector<8x8xf32> to vector<8xf32>
    %21 = vector.shape_cast %20 : vector<8xf32> to vector<8x1xf32>
    %22 = vector.broadcast %21 : vector<8x1xf32> to vector<8x8xf32>
    %23 = arith.subf %19, %22 : vector<8x8xf32>
    %24 = math.exp %23 : vector<8x8xf32>
    %cst_16 = arith.constant dense<0.000000e+00> : vector<8xf32>
    %25 = vector.multi_reduction <add>, %24, %cst_16 [1] : vector<8x8xf32> to vector<8xf32>
    %26 = vector.shape_cast %25 : vector<8xf32> to vector<8x1xf32>
    %27 = arith.truncf %24 : vector<8x8xf32> to vector<8x8xbf16>
    %cst_17 = arith.constant dense<0.000000e+00> : vector<8x8xf32>
    %28 = tpu.matmul %27, %18, %cst_17 {dimension_numbers = #tpu.dot_dimension_numbers<[1], [0], [0], [1], [0, 0, 1, 1], [], []>} : vector<8x8xbf16>, vector<8x8xbf16>, vector<8x8xf32> -> vector<8x8xf32>
    %29 = tpu.reciprocal %26 {approx = true} : vector<8x1xf32> -> vector<8x1xf32>
    %30 = vector.broadcast %29 : vector<8x1xf32> to vector<8x8xf32>
    %31 = arith.mulf %28, %30 : vector<8x8xf32>
    %32 = vector.extract_strided_slice %9 {offsets = [0, 8], sizes = [8, 8], strides = [1, 1]} : vector<8x32xbf16> to vector<8x8xbf16>
    %33 = vector.extract_strided_slice %15 {offsets = [0, 8], sizes = [8, 8], strides = [1, 1]} : vector<8x64xbf16> to vector<8x8xbf16>
    %34 = vector.extract_strided_slice %15 {offsets = [0, 40], sizes = [8, 8], strides = [1, 1]} : vector<8x64xbf16> to vector<8x8xbf16>
    %cst_18 = arith.constant dense<0.000000e+00> : vector<8x8xf32>
    %35 = tpu.matmul %32, %33, %cst_18 {dimension_numbers = #tpu.dot_dimension_numbers<[1], [1], [0], [0], [0, 0, 1, 0], [], []>} : vector<8x8xbf16>, vector<8x8xbf16>, vector<8x8xf32> -> vector<8x8xf32>
    %cst_19 = arith.constant dense<0xFF800000> : vector<8xf32>
    %36 = vector.multi_reduction <maximumf>, %35, %cst_19 [1] : vector<8x8xf32> to vector<8xf32>
    %37 = vector.shape_cast %36 : vector<8xf32> to vector<8x1xf32>
    %38 = vector.broadcast %37 : vector<8x1xf32> to vector<8x8xf32>
    %39 = arith.subf %35, %38 : vector<8x8xf32>
    %40 = math.exp %39 : vector<8x8xf32>
    %cst_20 = arith.constant dense<0.000000e+00> : vector<8xf32>
    %41 = vector.multi_reduction <add>, %40, %cst_20 [1] : vector<8x8xf32> to vector<8xf32>
    %42 = vector.shape_cast %41 : vector<8xf32> to vector<8x1xf32>
    %43 = arith.truncf %40 : vector<8x8xf32> to vector<8x8xbf16>
    %cst_21 = arith.constant dense<0.000000e+00> : vector<8x8xf32>
    %44 = tpu.matmul %43, %34, %cst_21 {dimension_numbers = #tpu.dot_dimension_numbers<[1], [0], [0], [1], [0, 0, 1, 1], [], []>} : vector<8x8xbf16>, vector<8x8xbf16>, vector<8x8xf32> -> vector<8x8xf32>
    %45 = tpu.reciprocal %42 {approx = true} : vector<8x1xf32> -> vector<8x1xf32>
    %46 = vector.broadcast %45 : vector<8x1xf32> to vector<8x8xf32>
    %47 = arith.mulf %44, %46 : vector<8x8xf32>
    %48 = vector.extract_strided_slice %9 {offsets = [0, 16], sizes = [8, 8], strides = [1, 1]} : vector<8x32xbf16> to vector<8x8xbf16>
    %49 = vector.extract_strided_slice %15 {offsets = [0, 16], sizes = [8, 8], strides = [1, 1]} : vector<8x64xbf16> to vector<8x8xbf16>
    %50 = vector.extract_strided_slice %15 {offsets = [0, 48], sizes = [8, 8], strides = [1, 1]} : vector<8x64xbf16> to vector<8x8xbf16>
    %cst_22 = arith.constant dense<0.000000e+00> : vector<8x8xf32>
    %51 = tpu.matmul %48, %49, %cst_22 {dimension_numbers = #tpu.dot_dimension_numbers<[1], [1], [0], [0], [0, 0, 1, 0], [], []>} : vector<8x8xbf16>, vector<8x8xbf16>, vector<8x8xf32> -> vector<8x8xf32>
    %cst_23 = arith.constant dense<0xFF800000> : vector<8xf32>
    %52 = vector.multi_reduction <maximumf>, %51, %cst_23 [1] : vector<8x8xf32> to vector<8xf32>
    %53 = vector.shape_cast %52 : vector<8xf32> to vector<8x1xf32>
    %54 = vector.broadcast %53 : vector<8x1xf32> to vector<8x8xf32>
    %55 = arith.subf %51, %54 : vector<8x8xf32>
    %56 = math.exp %55 : vector<8x8xf32>
    %cst_24 = arith.constant dense<0.000000e+00> : vector<8xf32>
    %57 = vector.multi_reduction <add>, %56, %cst_24 [1] : vector<8x8xf32> to vector<8xf32>
    %58 = vector.shape_cast %57 : vector<8xf32> to vector<8x1xf32>
    %59 = arith.truncf %56 : vector<8x8xf32> to vector<8x8xbf16>
    %cst_25 = arith.constant dense<0.000000e+00> : vector<8x8xf32>
    %60 = tpu.matmul %59, %50, %cst_25 {dimension_numbers = #tpu.dot_dimension_numbers<[1], [0], [0], [1], [0, 0, 1, 1], [], []>} : vector<8x8xbf16>, vector<8x8xbf16>, vector<8x8xf32> -> vector<8x8xf32>
    %61 = tpu.reciprocal %58 {approx = true} : vector<8x1xf32> -> vector<8x1xf32>
    %62 = vector.broadcast %61 : vector<8x1xf32> to vector<8x8xf32>
    %63 = arith.mulf %60, %62 : vector<8x8xf32>
    %64 = vector.extract_strided_slice %9 {offsets = [0, 24], sizes = [8, 8], strides = [1, 1]} : vector<8x32xbf16> to vector<8x8xbf16>
    %65 = vector.extract_strided_slice %15 {offsets = [0, 24], sizes = [8, 8], strides = [1, 1]} : vector<8x64xbf16> to vector<8x8xbf16>
    %66 = vector.extract_strided_slice %15 {offsets = [0, 56], sizes = [8, 8], strides = [1, 1]} : vector<8x64xbf16> to vector<8x8xbf16>
    %cst_26 = arith.constant dense<0.000000e+00> : vector<8x8xf32>
    %67 = tpu.matmul %64, %65, %cst_26 {dimension_numbers = #tpu.dot_dimension_numbers<[1], [1], [0], [0], [0, 0, 1, 0], [], []>} : vector<8x8xbf16>, vector<8x8xbf16>, vector<8x8xf32> -> vector<8x8xf32>
    %cst_27 = arith.constant dense<0xFF800000> : vector<8xf32>
    %68 = vector.multi_reduction <maximumf>, %67, %cst_27 [1] : vector<8x8xf32> to vector<8xf32>
    %69 = vector.shape_cast %68 : vector<8xf32> to vector<8x1xf32>
    %70 = vector.broadcast %69 : vector<8x1xf32> to vector<8x8xf32>
    %71 = arith.subf %67, %70 : vector<8x8xf32>
    %72 = math.exp %71 : vector<8x8xf32>
    %cst_28 = arith.constant dense<0.000000e+00> : vector<8xf32>
    %73 = vector.multi_reduction <add>, %72, %cst_28 [1] : vector<8x8xf32> to vector<8xf32>
    %74 = vector.shape_cast %73 : vector<8xf32> to vector<8x1xf32>
    %75 = arith.truncf %72 : vector<8x8xf32> to vector<8x8xbf16>
    %cst_29 = arith.constant dense<0.000000e+00> : vector<8x8xf32>
    %76 = tpu.matmul %75, %66, %cst_29 {dimension_numbers = #tpu.dot_dimension_numbers<[1], [0], [0], [1], [0, 0, 1, 1], [], []>} : vector<8x8xbf16>, vector<8x8xbf16>, vector<8x8xf32> -> vector<8x8xf32>
    %77 = tpu.reciprocal %74 {approx = true} : vector<8x1xf32> -> vector<8x1xf32>
    %78 = vector.broadcast %77 : vector<8x1xf32> to vector<8x8xf32>
    %79 = arith.mulf %76, %78 : vector<8x8xf32>
    %80 = tpu.concatenate %31, %47, %63, %79 in 1 : vector<8x8xf32>, vector<8x8xf32>, vector<8x8xf32>, vector<8x8xf32> -> vector<8x32xf32>
    %81 = arith.truncf %80 : vector<8x32xf32> to vector<8x32xbf16>
    %c0_30 = arith.constant 0 : index
    %c0_31 = arith.constant 0 : index
    %82 = vector.load %arg7[%c0_30, %c0_31] : memref<32x32xbf16, #tpu.memory_space<vmem>>, vector<32x32xbf16>
    %cst_32 = arith.constant dense<0.000000e+00> : vector<8x32xf32>
    %83 = tpu.matmul %81, %82, %cst_32 {dimension_numbers = #tpu.dot_dimension_numbers<[1], [0], [0], [1], [0, 0, 1, 1], [], []>} : vector<8x32xbf16>, vector<32x32xbf16>, vector<8x32xf32> -> vector<8x32xf32>
    %c0_33 = arith.constant 0 : index
    %c0_34 = arith.constant 0 : index
    %84 = vector.load %arg8[%c0_33, %c0_34] : memref<1x32xf32, #tpu.memory_space<vmem>>, vector<1x32xf32>
    %85 = vector.broadcast %84 : vector<1x32xf32> to vector<8x32xf32>
    %86 = arith.addf %83, %85 : vector<8x32xf32>
    %87 = arith.extf %1 : vector<8x32xbf16> to vector<8x32xf32>
    %88 = arith.addf %87, %86 : vector<8x32xf32>
    %cst_35 = arith.constant dense<0.000000e+00> : vector<8xf32>
    %89 = vector.multi_reduction <add>, %88, %cst_35 [1] : vector<8x32xf32> to vector<8xf32>
    %90 = vector.shape_cast %89 : vector<8xf32> to vector<8x1xf32>
    %cst_36 = arith.constant 3.200000e+01 : f32
    %91 = vector.broadcast %cst_36 : f32 to vector<8x1xf32>
    %92 = arith.divf %90, %91 : vector<8x1xf32>
    %93 = vector.broadcast %92 : vector<8x1xf32> to vector<8x32xf32>
    %94 = arith.subf %88, %93 : vector<8x32xf32>
    %95 = arith.mulf %94, %94 : vector<8x32xf32>
    %cst_37 = arith.constant dense<0.000000e+00> : vector<8xf32>
    %96 = vector.multi_reduction <add>, %95, %cst_37 [1] : vector<8x32xf32> to vector<8xf32>
    %97 = vector.shape_cast %96 : vector<8xf32> to vector<8x1xf32>
    %cst_38 = arith.constant 3.200000e+01 : f32
    %98 = vector.broadcast %cst_38 : f32 to vector<8x1xf32>
    %99 = arith.divf %97, %98 : vector<8x1xf32>
    %100 = vector.broadcast %92 : vector<8x1xf32> to vector<8x32xf32>
    %101 = arith.subf %88, %100 : vector<8x32xf32>
    %cst_39 = arith.constant 9.99999974E-6 : f32
    %102 = vector.broadcast %cst_39 : f32 to vector<8x1xf32>
    %103 = arith.addf %99, %102 : vector<8x1xf32>
    %104 = math.rsqrt %103 : vector<8x1xf32>
    %105 = vector.broadcast %104 : vector<8x1xf32> to vector<8x32xf32>
    %106 = arith.mulf %101, %105 : vector<8x32xf32>
    %c0_40 = arith.constant 0 : index
    %c0_41 = arith.constant 0 : index
    %107 = vector.load %arg9[%c0_40, %c0_41] : memref<1x32xf32, #tpu.memory_space<vmem>>, vector<1x32xf32>
    %108 = vector.broadcast %107 : vector<1x32xf32> to vector<8x32xf32>
    %109 = arith.mulf %106, %108 : vector<8x32xf32>
    %c0_42 = arith.constant 0 : index
    %c0_43 = arith.constant 0 : index
    %110 = vector.load %arg10[%c0_42, %c0_43] : memref<1x32xf32, #tpu.memory_space<vmem>>, vector<1x32xf32>
    %111 = vector.broadcast %110 : vector<1x32xf32> to vector<8x32xf32>
    %112 = arith.addf %109, %111 : vector<8x32xf32>
    %113 = arith.truncf %112 : vector<8x32xf32> to vector<8x32xbf16>
    %c0_44 = arith.constant 0 : index
    %c0_45 = arith.constant 0 : index
    %c0_46 = arith.constant 0 : index
    %114 = vector.load %arg11[%c0_44, %c0_45, %c0_46] : memref<1x8x32xbf16, #tpu.memory_space<vmem>>, vector<1x8x32xbf16>
    %115 = vector.shape_cast %114 : vector<1x8x32xbf16> to vector<8x32xbf16>
    %116 = vector.shape_cast %113 : vector<8x32xbf16> to vector<1x8x32xbf16>
    tpu.vector_store %arg11[%c0_44, %c0_45, %c0_46], %116 {strides = array<i32>} : memref<1x8x32xbf16, #tpu.memory_space<vmem>>, vector<1x8x32xbf16>,
    return
  }
  func.func @transform_0(%arg0: i32) -> (i32, i32, i32) {
    %c0_i32 = arith.constant 0 : i32
    %c0_i32_0 = arith.constant 0 : i32
    %c0_i32_1 = arith.constant 0 : i32
    return %arg0, %c0_i32, %c0_i32_0 : i32, i32, i32
  }
  func.func @transform_1(%arg0: i32) -> (i32, i32, i32) {
    %c0_i32 = arith.constant 0 : i32
    %c0_i32_0 = arith.constant 0 : i32
    %c0_i32_1 = arith.constant 0 : i32
    return %arg0, %c0_i32, %c0_i32_0 : i32, i32, i32
  }
  func.func @transform_2(%arg0: i32) -> (i32, i32) {
    %c0_i32 = arith.constant 0 : i32
    %c0_i32_0 = arith.constant 0 : i32
    %c0_i32_1 = arith.constant 0 : i32
    return %c0_i32, %c0_i32_0 : i32, i32
  }
  func.func @transform_3(%arg0: i32) -> (i32, i32) {
    %c0_i32 = arith.constant 0 : i32
    %c0_i32_0 = arith.constant 0 : i32
    %c0_i32_1 = arith.constant 0 : i32
    return %c0_i32, %c0_i32_0 : i32, i32
  }
  func.func @transform_4(%arg0: i32) -> (i32, i32) {
    %c0_i32 = arith.constant 0 : i32
    %c0_i32_0 = arith.constant 0 : i32
    %c0_i32_1 = arith.constant 0 : i32
    return %c0_i32, %c0_i32_0 : i32, i32
  }
  func.func @transform_5(%arg0: i32) -> (i32, i32) {
    %c0_i32 = arith.constant 0 : i32
    %c0_i32_0 = arith.constant 0 : i32
    %c0_i32_1 = arith.constant 0 : i32
    return %c0_i32, %c0_i32_0 : i32, i32
  }
  func.func @transform_6(%arg0: i32) -> (i32, i32) {
    %c0_i32 = arith.constant 0 : i32
    %c0_i32_0 = arith.constant 0 : i32
    %c0_i32_1 = arith.constant 0 : i32
    return %c0_i32, %c0_i32_0 : i32, i32
  }
  func.func @transform_7(%arg0: i32) -> (i32, i32) {
    %c0_i32 = arith.constant 0 : i32
    %c0_i32_0 = arith.constant 0 : i32
    %c0_i32_1 = arith.constant 0 : i32
    return %c0_i32, %c0_i32_0 : i32, i32
  }
  func.func @transform_8(%arg0: i32) -> (i32, i32) {
    %c0_i32 = arith.constant 0 : i32
    %c0_i32_0 = arith.constant 0 : i32
    %c0_i32_1 = arith.constant 0 : i32
    return %c0_i32, %c0_i32_0 : i32, i32
  }
  func.func @transform_9(%arg0: i32) -> (i32, i32) {
    %c0_i32 = arith.constant 0 : i32
    %c0_i32_0 = arith.constant 0 : i32
    %c0_i32_1 = arith.constant 0 : i32
    return %c0_i32, %c0_i32_0 : i32, i32
  }
  func.func @transform_10(%arg0: i32) -> (i32, i32, i32) {
    %c0_i32 = arith.constant 0 : i32
    %c0_i32_0 = arith.constant 0 : i32
    %c0_i32_1 = arith.constant 0 : i32
    return %arg0, %c0_i32, %c0_i32_0 : i32, i32, i32
  }
}

module attributes {stable_mosaic.version = 11 : i64} {
  func.func @_ffn_block_kernel(%arg0: i32, %arg1: memref<8x32xbf16, #tpu.memory_space<vmem>>, %arg2: memref<32x64xbf16, #tpu.memory_space<vmem>>, %arg3: memref<1x64xf32, #tpu.memory_space<vmem>>, %arg4: memref<64x32xbf16, #tpu.memory_space<vmem>>, %arg5: memref<1x32xf32, #tpu.memory_space<vmem>>, %arg6: memref<1x32xf32, #tpu.memory_space<vmem>>, %arg7: memref<1x32xf32, #tpu.memory_space<vmem>>, %arg8: memref<8x32xbf16, #tpu.memory_space<vmem>>) attributes {dimension_semantics = [#tpu.dimension_semantics<parallel>], iteration_bounds = array<i64: 2>, scalar_prefetch = 0 : i64, scratch_operands = 0 : i64, tpu.core_type = #tpu.core_type<tc>, window_params = [{transform_indices = @transform_0, window_bounds = array<i64: 8, 32>}, {pipeline_mode = #tpu.pipeline_mode<synchronous>, transform_indices = @transform_1, window_bounds = array<i64: 32, 64>}, {pipeline_mode = #tpu.pipeline_mode<synchronous>, transform_indices = @transform_2, window_bounds = array<i64: 1, 64>}, {pipeline_mode = #tpu.pipeline_mode<synchronous>, transform_indices = @transform_3, window_bounds = array<i64: 64, 32>}, {pipeline_mode = #tpu.pipeline_mode<synchronous>, transform_indices = @transform_4, window_bounds = array<i64: 1, 32>}, {pipeline_mode = #tpu.pipeline_mode<synchronous>, transform_indices = @transform_5, window_bounds = array<i64: 1, 32>}, {pipeline_mode = #tpu.pipeline_mode<synchronous>, transform_indices = @transform_6, window_bounds = array<i64: 1, 32>}, {transform_indices = @transform_7, window_bounds = array<i64: 8, 32>}]} {
    %c0 = arith.constant 0 : index
    %c0_0 = arith.constant 0 : index
    %0 = vector.load %arg1[%c0, %c0_0] : memref<8x32xbf16, #tpu.memory_space<vmem>>, vector<8x32xbf16>
    %c0_1 = arith.constant 0 : index
    %c0_2 = arith.constant 0 : index
    %1 = vector.load %arg2[%c0_1, %c0_2] : memref<32x64xbf16, #tpu.memory_space<vmem>>, vector<32x64xbf16>
    %cst = arith.constant dense<0.000000e+00> : vector<8x64xf32>
    %2 = tpu.matmul %0, %1, %cst {dimension_numbers = #tpu.dot_dimension_numbers<[1], [0], [0], [1], [0, 0, 1, 1], [], []>} : vector<8x32xbf16>, vector<32x64xbf16>, vector<8x64xf32> -> vector<8x64xf32>
    %c0_3 = arith.constant 0 : index
    %c0_4 = arith.constant 0 : index
    %3 = vector.load %arg3[%c0_3, %c0_4] : memref<1x64xf32, #tpu.memory_space<vmem>>, vector<1x64xf32>
    %4 = vector.broadcast %3 : vector<1x64xf32> to vector<8x64xf32>
    %5 = arith.addf %2, %4 : vector<8x64xf32>
    %cst_5 = arith.constant 0.000000e+00 : f32
    %6 = vector.broadcast %cst_5 : f32 to vector<8x64xf32>
    %7 = arith.maximumf %5, %6 : vector<8x64xf32>
    %8 = arith.truncf %7 : vector<8x64xf32> to vector<8x64xbf16>
    %c0_6 = arith.constant 0 : index
    %c0_7 = arith.constant 0 : index
    %9 = vector.load %arg4[%c0_6, %c0_7] : memref<64x32xbf16, #tpu.memory_space<vmem>>, vector<64x32xbf16>
    %cst_8 = arith.constant dense<0.000000e+00> : vector<8x32xf32>
    %10 = tpu.matmul %8, %9, %cst_8 {dimension_numbers = #tpu.dot_dimension_numbers<[1], [0], [0], [1], [0, 0, 1, 1], [], []>} : vector<8x64xbf16>, vector<64x32xbf16>, vector<8x32xf32> -> vector<8x32xf32>
    %c0_9 = arith.constant 0 : index
    %c0_10 = arith.constant 0 : index
    %11 = vector.load %arg5[%c0_9, %c0_10] : memref<1x32xf32, #tpu.memory_space<vmem>>, vector<1x32xf32>
    %12 = vector.broadcast %11 : vector<1x32xf32> to vector<8x32xf32>
    %13 = arith.addf %10, %12 : vector<8x32xf32>
    %14 = arith.extf %0 : vector<8x32xbf16> to vector<8x32xf32>
    %15 = arith.addf %14, %13 : vector<8x32xf32>
    %cst_11 = arith.constant dense<0.000000e+00> : vector<8xf32>
    %16 = vector.multi_reduction <add>, %15, %cst_11 [1] : vector<8x32xf32> to vector<8xf32>
    %17 = vector.shape_cast %16 : vector<8xf32> to vector<8x1xf32>
    %cst_12 = arith.constant 3.200000e+01 : f32
    %18 = vector.broadcast %cst_12 : f32 to vector<8x1xf32>
    %19 = arith.divf %17, %18 : vector<8x1xf32>
    %20 = vector.broadcast %19 : vector<8x1xf32> to vector<8x32xf32>
    %21 = arith.subf %15, %20 : vector<8x32xf32>
    %22 = arith.mulf %21, %21 : vector<8x32xf32>
    %cst_13 = arith.constant dense<0.000000e+00> : vector<8xf32>
    %23 = vector.multi_reduction <add>, %22, %cst_13 [1] : vector<8x32xf32> to vector<8xf32>
    %24 = vector.shape_cast %23 : vector<8xf32> to vector<8x1xf32>
    %cst_14 = arith.constant 3.200000e+01 : f32
    %25 = vector.broadcast %cst_14 : f32 to vector<8x1xf32>
    %26 = arith.divf %24, %25 : vector<8x1xf32>
    %27 = vector.broadcast %19 : vector<8x1xf32> to vector<8x32xf32>
    %28 = arith.subf %15, %27 : vector<8x32xf32>
    %cst_15 = arith.constant 9.99999974E-6 : f32
    %29 = vector.broadcast %cst_15 : f32 to vector<8x1xf32>
    %30 = arith.addf %26, %29 : vector<8x1xf32>
    %31 = math.rsqrt %30 : vector<8x1xf32>
    %32 = vector.broadcast %31 : vector<8x1xf32> to vector<8x32xf32>
    %33 = arith.mulf %28, %32 : vector<8x32xf32>
    %c0_16 = arith.constant 0 : index
    %c0_17 = arith.constant 0 : index
    %34 = vector.load %arg6[%c0_16, %c0_17] : memref<1x32xf32, #tpu.memory_space<vmem>>, vector<1x32xf32>
    %35 = vector.broadcast %34 : vector<1x32xf32> to vector<8x32xf32>
    %36 = arith.mulf %33, %35 : vector<8x32xf32>
    %c0_18 = arith.constant 0 : index
    %c0_19 = arith.constant 0 : index
    %37 = vector.load %arg7[%c0_18, %c0_19] : memref<1x32xf32, #tpu.memory_space<vmem>>, vector<1x32xf32>
    %38 = vector.broadcast %37 : vector<1x32xf32> to vector<8x32xf32>
    %39 = arith.addf %36, %38 : vector<8x32xf32>
    %40 = arith.truncf %39 : vector<8x32xf32> to vector<8x32xbf16>
    %c0_20 = arith.constant 0 : index
    %c0_21 = arith.constant 0 : index
    %41 = vector.load %arg8[%c0_20, %c0_21] : memref<8x32xbf16, #tpu.memory_space<vmem>>, vector<8x32xbf16>
    tpu.vector_store %arg8[%c0_20, %c0_21], %40 {strides = array<i32>} : memref<8x32xbf16, #tpu.memory_space<vmem>>, vector<8x32xbf16>,
    return
  }
  func.func @transform_0(%arg0: i32) -> (i32, i32) {
    %c0_i32 = arith.constant 0 : i32
    %c0_i32_0 = arith.constant 0 : i32
    return %arg0, %c0_i32 : i32, i32
  }
  func.func @transform_1(%arg0: i32) -> (i32, i32) {
    %c0_i32 = arith.constant 0 : i32
    %c0_i32_0 = arith.constant 0 : i32
    %c0_i32_1 = arith.constant 0 : i32
    return %c0_i32, %c0_i32_0 : i32, i32
  }
  func.func @transform_2(%arg0: i32) -> (i32, i32) {
    %c0_i32 = arith.constant 0 : i32
    %c0_i32_0 = arith.constant 0 : i32
    %c0_i32_1 = arith.constant 0 : i32
    return %c0_i32, %c0_i32_0 : i32, i32
  }
  func.func @transform_3(%arg0: i32) -> (i32, i32) {
    %c0_i32 = arith.constant 0 : i32
    %c0_i32_0 = arith.constant 0 : i32
    %c0_i32_1 = arith.constant 0 : i32
    return %c0_i32, %c0_i32_0 : i32, i32
  }
  func.func @transform_4(%arg0: i32) -> (i32, i32) {
    %c0_i32 = arith.constant 0 : i32
    %c0_i32_0 = arith.constant 0 : i32
    %c0_i32_1 = arith.constant 0 : i32
    return %c0_i32, %c0_i32_0 : i32, i32
  }
  func.func @transform_5(%arg0: i32) -> (i32, i32) {
    %c0_i32 = arith.constant 0 : i32
    %c0_i32_0 = arith.constant 0 : i32
    %c0_i32_1 = arith.constant 0 : i32
    return %c0_i32, %c0_i32_0 : i32, i32
  }
  func.func @transform_6(%arg0: i32) -> (i32, i32) {
    %c0_i32 = arith.constant 0 : i32
    %c0_i32_0 = arith.constant 0 : i32
    %c0_i32_1 = arith.constant 0 : i32
    return %c0_i32, %c0_i32_0 : i32, i32
  }
  func.func @transform_7(%arg0: i32) -> (i32, i32) {
    %c0_i32 = arith.constant 0 : i32
    %c0_i32_0 = arith.constant 0 : i32
    return %arg0, %c0_i32 : i32, i32
  }
}

module attributes {stable_mosaic.version = 11 : i64} {
  func.func @_linear_kernel(%arg0: i32, %arg1: memref<8x32xbf16, #tpu.memory_space<vmem>>, %arg2: memref<32x384xbf16, #tpu.memory_space<vmem>>, %arg3: memref<1x384xf32, #tpu.memory_space<vmem>>, %arg4: memref<8x384xf32, #tpu.memory_space<vmem>>) attributes {dimension_semantics = [#tpu.dimension_semantics<parallel>], iteration_bounds = array<i64: 2>, scalar_prefetch = 0 : i64, scratch_operands = 0 : i64, tpu.core_type = #tpu.core_type<tc>, window_params = [{transform_indices = @transform_0, window_bounds = array<i64: 8, 32>}, {pipeline_mode = #tpu.pipeline_mode<synchronous>, transform_indices = @transform_1, window_bounds = array<i64: 32, 384>}, {pipeline_mode = #tpu.pipeline_mode<synchronous>, transform_indices = @transform_2, window_bounds = array<i64: 1, 384>}, {transform_indices = @transform_3, window_bounds = array<i64: 8, 384>}]} {
    %c0 = arith.constant 0 : index
    %c0_0 = arith.constant 0 : index
    %0 = vector.load %arg1[%c0, %c0_0] : memref<8x32xbf16, #tpu.memory_space<vmem>>, vector<8x32xbf16>
    %c0_1 = arith.constant 0 : index
    %c0_2 = arith.constant 0 : index
    %1 = vector.load %arg2[%c0_1, %c0_2] : memref<32x384xbf16, #tpu.memory_space<vmem>>, vector<32x384xbf16>
    %cst = arith.constant dense<0.000000e+00> : vector<8x384xf32>
    %2 = tpu.matmul %0, %1, %cst {dimension_numbers = #tpu.dot_dimension_numbers<[1], [0], [0], [1], [0, 0, 1, 1], [], []>} : vector<8x32xbf16>, vector<32x384xbf16>, vector<8x384xf32> -> vector<8x384xf32>
    %c0_3 = arith.constant 0 : index
    %c0_4 = arith.constant 0 : index
    %3 = vector.load %arg3[%c0_3, %c0_4] : memref<1x384xf32, #tpu.memory_space<vmem>>, vector<1x384xf32>
    %4 = vector.broadcast %3 : vector<1x384xf32> to vector<8x384xf32>
    %5 = arith.addf %2, %4 : vector<8x384xf32>
    %c0_5 = arith.constant 0 : index
    %c0_6 = arith.constant 0 : index
    %6 = vector.load %arg4[%c0_5, %c0_6] : memref<8x384xf32, #tpu.memory_space<vmem>>, vector<8x384xf32>
    tpu.vector_store %arg4[%c0_5, %c0_6], %5 {strides = array<i32>} : memref<8x384xf32, #tpu.memory_space<vmem>>, vector<8x384xf32>,
    return
  }
  func.func @transform_0(%arg0: i32) -> (i32, i32) {
    %c0_i32 = arith.constant 0 : i32
    %c0_i32_0 = arith.constant 0 : i32
    return %arg0, %c0_i32 : i32, i32
  }
  func.func @transform_1(%arg0: i32) -> (i32, i32) {
    %c0_i32 = arith.constant 0 : i32
    %c0_i32_0 = arith.constant 0 : i32
    %c0_i32_1 = arith.constant 0 : i32
    return %c0_i32, %c0_i32_0 : i32, i32
  }
  func.func @transform_2(%arg0: i32) -> (i32, i32) {
    %c0_i32 = arith.constant 0 : i32
    %c0_i32_0 = arith.constant 0 : i32
    %c0_i32_1 = arith.constant 0 : i32
    return %c0_i32, %c0_i32_0 : i32, i32
  }
  func.func @transform_3(%arg0: i32) -> (i32, i32) {
    %c0_i32 = arith.constant 0 : i32
    %c0_i32_0 = arith.constant 0 : i32
    return %arg0, %c0_i32 : i32, i32
  }
}

</mosaic_0001>

<llo_original>
// kernel: voice_to_notes_forward.9
$region0: #{voice_to_notes_forward.9}
  #allocation0 [shape = 'u32[]', space=smem, size = 0x4, offset = 0x4, fixed_abs, tag = 'smem constant byte address 0x4 - core index']
  #allocation1 [shape = 'u32[144,128]{1,0:T(1,128)}', space=vmem, size = 0x12000, scoped, tag = 'internal scratch']
  %s0 = inlined_call_operand.hbm [shape: f32[16,16], index: 0, kind: input, shape index: {}]
  %s1 = inlined_call_operand.hbm [shape: bf16[16,32], index: 1, kind: input, shape index: {}]
  %s2 = inlined_call_operand.hbm [shape: f32[1,32], index: 2, kind: input, shape index: {}]
  %s3 = inlined_call_operand.hbm [shape: bf16[16,32], index: 3, kind: output, shape index: {}]
  %s4 = sld [smem:[#allocation0]]
  $region57: #{voice_to_notes_forward.9} parent=0
    _
  %s6 = ssub.s32 1, %s4
  %s7 = scalar_select 0, %s6, %s4
  $region1: #{voice_to_notes_forward.9} parent=0
    #allocation2 [shape = 'u8[8192]{0}', space=vmem, size = 0x2000, scoped, tag = 'input window, operand 0']
    #allocation3 [shape = 's32[2]{0}', space=sflag, size = 0x8, scoped, tag = 'scoped memory for voice_to_notes_forward.9']
    #allocation4 [shape = 's32[2]{0}', space=sflag, size = 0x8, scoped, tag = 'scoped memory for voice_to_notes_forward.9']
    #allocation5 [shape = 'u8[4096]{0}', space=vmem, size = 0x1000, scoped, tag = 'input window, operand 1, single buffered']
    #allocation6 [shape = 's32[1]{0}', space=sflag, size = 0x4, scoped, tag = 'scoped memory for voice_to_notes_forward.9']
    #allocation7 [shape = 'u8[512]{0}', space=vmem, size = 0x400, scoped, tag = 'input window, operand 2, single buffered']
    #allocation8 [shape = 'u8[4096]{0}', space=vmem, size = 0x1000, scoped, tag = 'output window, operand 0']
    %8 = vsyncpa [#allocation3], 0
    %s9 = scalar_lea.sflag [#allocation3], 1
    %10 = vsyncpa %s9, 0
    %11 = vsyncpa [#allocation6], 0
    %12 = vsyncpa [#allocation4], 0
    %s13 = scalar_lea.sflag [#allocation4], 1
    %14 = vsyncpa %s13, 0
    loop: start=0, step=1, limit=4
    $region2: #{voice_to_notes_forward.9} parent=1 // loop_pre_header
      _
    $region3: #{voice_to_notes_forward.9} parent=1 // loop_header
      %s16 = sphi 0, %s20
      %p17 = scmp.ge.s32.totalorder %s16, 4
      %s26 = sphi 0, %s28
      %s29 = sphi 0, %s26
      %s30 = sphi 0, %s29
      %s46 = sphi 0, %s30
      %s50 = sphi 0, %s50
      %s52 = sphi 0, %s50
      %s53 = sphi 0, %s52
      %s67 = sphi 0, %s53
      %s71 = sphi 0, %s71
      %s73 = sphi 0, %s71
      %s74 = sphi 0, %s73
      %s88 = sphi 0, %s74
      %s94 = sphi 0, %s96
      %s97 = sphi 0, %s94
      %s98 = sphi 0, %s97
      %s114 = sphi 0, %s98
    $region4: #{voice_to_notes_forward.9} parent=1 // loop_header_branch
      %19 = sbr.rel (%p17) target = $region8
    $region5: #{voice_to_notes_forward.9} parent=1 // loop_body
      %s21 = ssub.s32 %s16, 1
      %s22 = ssub.s32 %s16, 2
      %s23 = sadd.s32 %s16, 1
      %s24 = ssub.s32 %s16, %s23
      %p25 = scmp.eq.s32.totalorder %s24, 0
      %s27 = sadd.s32 %s26, 1
      %s28 = scalar_select %p25, %s26, %s27
      %p31 = pneg %p25
      %p32 = scmp.eq.s32.totalorder %s16, 1
      %p33 = por %p31, %p32
      %p34 = scmp.ne.s32.totalorder %s26, %s29
      %p35 = scmp.eq.s32.totalorder %s16, 0
      %p36 = por %p34, %p35
      %p37 = scmp.ne.s32.totalorder %s26, %s29
      %p38 = scmp.eq.s32.totalorder %s21, 1
      %p39 = por %p37, %p38
      %p40 = scmp.ne.s32.totalorder %s29, %s30
      %p41 = scmp.eq.s32.totalorder %s21, 0
      %p42 = por %p40, %p41
      %p43 = scmp.ne.s32.totalorder %s29, %s30
      %p44 = scmp.eq.s32.totalorder %s22, 1
      %p45 = por %p43, %p44
      %p47 = scmp.ne.s32.totalorder %s30, %s46
      %p48 = scmp.eq.s32.totalorder %s22, 0
      %p49 = por %p47, %p48
      %s51 = sadd.s32 %s50, 1
      %p54 = scmp.eq.s32.totalorder %s16, 1
      %p55 = scmp.ne.s32.totalorder %s50, %s52
      %p56 = scmp.eq.s32.totalorder %s16, 0
      %p57 = por %p55, %p56
      %p58 = scmp.ne.s32.totalorder %s50, %s52
      %p59 = scmp.eq.s32.totalorder %s21, 1
      %p60 = por %p58, %p59
      %p61 = scmp.ne.s32.totalorder %s52, %s53
      %p62 = scmp.eq.s32.totalorder %s21, 0
      %p63 = por %p61, %p62
      %p64 = scmp.ne.s32.totalorder %s52, %s53
      %p65 = scmp.eq.s32.totalorder %s22, 1
      %p66 = por %p64, %p65
      %p68 = scmp.ne.s32.totalorder %s53, %s67
      %p69 = scmp.eq.s32.totalorder %s22, 0
      %p70 = por %p68, %p69
      %s72 = sadd.s32 %s71, 1
      %p75 = scmp.eq.s32.totalorder %s16, 1
      %p76 = scmp.ne.s32.totalorder %s71, %s73
      %p77 = scmp.eq.s32.totalorder %s16, 0
      %p78 = por %p76, %p77
      %p79 = scmp.ne.s32.totalorder %s71, %s73
      %p80 = scmp.eq.s32.totalorder %s21, 1
      %p81 = por %p79, %p80
      %p82 = scmp.ne.s32.totalorder %s73, %s74
      %p83 = scmp.eq.s32.totalorder %s21, 0
      %p84 = por %p82, %p83
      %p85 = scmp.ne.s32.totalorder %s73, %s74
      %p86 = scmp.eq.s32.totalorder %s22, 1
      %p87 = por %p85, %p86
      %p89 = scmp.ne.s32.totalorder %s74, %s88
      %p90 = scmp.eq.s32.totalorder %s22, 0
      %p91 = por %p89, %p90
      %s92 = ssub.s32 %s16, %s23
      %p93 = scmp.eq.s32.totalorder %s92, 0
      %s95 = sadd.s32 %s94, 1
      %s96 = scalar_select %p93, %s94, %s95
      %p99 = pneg %p93
      %p100 = scmp.eq.s32.totalorder %s16, 1
      %p101 = por %p99, %p100
      %p102 = scmp.ne.s32.totalorder %s94, %s97
      %p103 = scmp.eq.s32.totalorder %s16, 0
      %p104 = por %p102, %p103
      %p105 = scmp.ne.s32.totalorder %s94, %s97
      %p106 = scmp.eq.s32.totalorder %s21, 1
      %p107 = por %p105, %p106
      %p108 = scmp.ne.s32.totalorder %s97, %s98
      %p109 = scmp.eq.s32.totalorder %s21, 0
      %p110 = por %p108, %p109
      %p111 = scmp.ne.s32.totalorder %s97, %s98
      %p112 = scmp.eq.s32.totalorder %s22, 1
      %p113 = por %p111, %p112
      %p115 = scmp.ne.s32.totalorder %s98, %s114
      %p116 = scmp.eq.s32.totalorder %s22, 0
      %p117 = por %p115, %p116
      %p118 = scmp.le.s32.totalorder 1, %s16
      %p119 = scmp.lt.s32.totalorder %s16, 3
      %p120 = pnand %p118, %p119
      %p121 = pneg %p120
      // Predicated region
      $region9: #{voice_to_notes_forward.9} parent=5 // pred_check
        _
      $region10: #{voice_to_notes_forward.9} parent=5 // pred_check_branch
        %123 = sbr.rel (%p120) target = $region12
      $region11: #{voice_to_notes_forward.9} parent=5 // pred_region
        %s124 = ssub.s32 %s16, 1
        // Predicated region
        $region13: #{voice_to_notes_forward.9} parent=11 // pred_check
          %p125 = pneg %p63
        $region14: #{voice_to_notes_forward.9} parent=11 // pred_check_branch
          %127 = sbr.rel (%p125) target = $region16
        $region15: #{voice_to_notes_forward.9} parent=11 // pred_region
          %s129 = ssub.s32 128, 128
          %130 = vsyncadd [#allocation6], %s129
          %s131 = sshll.u32 [#allocation5], 4
          %s132 = int_to_ptr.vmem [resolvable:$true] %s131
          %137 = dma.hbm_to_vmem [thread:$0]  %s1, 128, %s132, [#allocation6], 64, 64, 4
        $region16: #{voice_to_notes_forward.9} parent=11 // pred_fallthru
          _
        // Predicated region
        $region17: #{voice_to_notes_forward.9} parent=11 // pred_check
          %p138 = pneg %p84
        $region18: #{voice_to_notes_forward.9} parent=11 // pred_check_branch
          %140 = sbr.rel (%p138) target = $region20
        $region19: #{voice_to_notes_forward.9} parent=11 // pred_region
          %s142 = ssub.s32 16, 16
          %143 = vsyncadd [#allocation6], %s142
          %s145 = sshll.u32 [#allocation7], 4
          %s146 = int_to_ptr.vmem [resolvable:$true] %s145
          %148 = dma.hbm_to_vmem [thread:$0]  %s2, 16, %s146, [#allocation6]
        $region20: #{voice_to_notes_forward.9} parent=11 // pred_fallthru
          _
      $region12: #{voice_to_notes_forward.9} parent=5 // pred_fallthru
        _
      %p149 = scmp.lt.s32.totalorder %s16, 2
      // Predicated region
      $region21: #{voice_to_notes_forward.9} parent=5 // pred_check
        %p150 = pneg %p149
      $region22: #{voice_to_notes_forward.9} parent=5 // pred_check_branch
        %152 = sbr.rel (%p150) target = $region24
      $region23: #{voice_to_notes_forward.9} parent=5 // pred_region
        // Predicated region
        $region25: #{voice_to_notes_forward.9} parent=23 // pred_check
          %p153 = pneg %p36
        $region26: #{voice_to_notes_forward.9} parent=23 // pred_check_branch
          %155 = sbr.rel (%p153) target = $region28
        $region27: #{voice_to_notes_forward.9} parent=23 // pred_region
          %s156 = sand.u32 %s26, 1
          %s157 = scalar_lea.sflag [#allocation3], %s156
          %s158 = sand.u32 %s26, 1
          %s159 = smul.addr %s158, 8
          %s160 = scalar_lea.vmem [#allocation2], %s159
          %s162 = ssub.s32 128, 128
          %163 = vsyncadd %s157, %s162
          %s164 = smul.addr %s16, 128
          %s165 = scalar_lea.hbm %s0, %s164
          %s167 = sshll.u32 %s160, 4
          %s168 = int_to_ptr.vmem [resolvable:$true] %s167
          %170 = dma.hbm_to_vmem [thread:$0]  %s165, 128, %s168, %s157
        $region28: #{voice_to_notes_forward.9} parent=23 // pred_fallthru
          _
      $region24: #{voice_to_notes_forward.9} parent=5 // pred_fallthru
        _
      %p171 = scmp.le.s32.totalorder 1, %s16
      %p172 = scmp.lt.s32.totalorder %s16, 3
      %p173 = pnand %p171, %p172
      %p174 = pneg %p173
      // Predicated region
      $region29: #{voice_to_notes_forward.9} parent=5 // pred_check
        _
      $region30: #{voice_to_notes_forward.9} parent=5 // pred_check_branch
        %176 = sbr.rel (%p173) target = $region32
      $region31: #{voice_to_notes_forward.9} parent=5 // pred_region
        %s177 = ssub.s32 %s16, 1
        %s178 = sand.u32 %s29, 1
        %s179 = scalar_lea.sflag [#allocation3], %s178
        %s180 = sand.u32 %s29, 1
        %s181 = smul.addr %s180, 8
        %s182 = scalar_lea.vmem [#allocation2], %s181
        // Predicated region
        $region33: #{voice_to_notes_forward.9} parent=31 // pred_check
          %p183 = pneg %p42
        $region34: #{voice_to_notes_forward.9} parent=31 // pred_check_branch
          %185 = sbr.rel (%p183) target = $region36
        $region35: #{voice_to_notes_forward.9} parent=31 // pred_region
          %186 = dma.done %s179, 128
        $region36: #{voice_to_notes_forward.9} parent=31 // pred_fallthru
          _
        // Predicated region
        $region37: #{voice_to_notes_forward.9} parent=31 // pred_check
          %p187 = pneg %p63
        $region38: #{voice_to_notes_forward.9} parent=31 // pred_check_branch
          %189 = sbr.rel (%p187) target = $region40
        $region39: #{voice_to_notes_forward.9} parent=31 // pred_region
          %190 = dma.done [#allocation6], 128
        $region40: #{voice_to_notes_forward.9} parent=31 // pred_fallthru
          _
        // Predicated region
        $region41: #{voice_to_notes_forward.9} parent=31 // pred_check
          %p191 = pneg %p84
        $region42: #{voice_to_notes_forward.9} parent=31 // pred_check_branch
          %193 = sbr.rel (%p191) target = $region44
        $region43: #{voice_to_notes_forward.9} parent=31 // pred_region
          %194 = dma.done [#allocation6], 16
        $region44: #{voice_to_notes_forward.9} parent=31 // pred_fallthru
          _
        %s195 = sand.u32 %s29, 1
        %s196 = scalar_lea.sflag [#allocation3], %s195
        %s197 = sand.u32 %s29, 1
        %s198 = smul.addr %s197, 8
        %s199 = scalar_lea.vmem [#allocation2], %s198
        %p200 = pneg %p42
        %p201 = pneg %p39
        %p202 = pneg %p63
        %p203 = pneg %p60
        %p204 = pneg %p84
        %p205 = pneg %p81
        %p206 = pneg %p110
        %p207 = pneg %p107
        %s208 = sand.u32 %s97, 1
        %s209 = scalar_lea.sflag [#allocation4], %s208
        %s210 = sand.u32 %s97, 1
        %s211 = smul.addr %s210, 4
        %s212 = scalar_lea.vmem [#allocation8], %s211
        %v214 = vld [vmem:[%s182] sm:$0xff]
        %v215 = vpack.c.bf16 %v214, %v214
        %v216 = vld [vmem:[#allocation5] sm:$0xf]
        %v217 = vld [vmem:[#allocation5 + $0x4] sm:$0xf]
        %v218 = vld [vmem:[#allocation7] sm:$0x1]
        %v220 = vlaneseq
        %v221 = vshrl.u32 %v220, 7
        %v222 = vsub.s32 0, %v221
        %v223 = vrot.slane %v218, %v222
        %v227 = vunpack.c.l.b16 %v216
        %v228 = vunpack.c.l.b16 %v217
        %v229 = vpack.c.b16 %v228, %v227
        %vm231 = vcmask 130048
        %v233 = vsel %vm231, %v215, 0
        %235 = vmatprep.subr.bf16.mxu0 0
        %236 = vmatpush1.bf16.msra.mxu0 %v229
        %237 = vmatprep.subr.bf16.mxu0 0
        %238 = vmatpush1.bf16.msra.mxu0 0
        %239 = vmatprep.subr.bf16.mxu0 0
        %240 = vmatpush1.bf16.msra.mxu0 0
        %241 = vmatprep.subr.bf16.mxu0 0
        %242 = vmatpush1.bf16.msra.mxu0 0
        %243 = vmatprep.subr.bf16.mxu0 0
        %244 = vmatpush1.bf16.msra.mxu0 0
        %245 = vmatprep.subr.bf16.mxu0 0
        %246 = vmatpush1.bf16.msra.mxu0 0
        %247 = vmatprep.subr.bf16.mxu0 0
        %248 = vmatpush1.bf16.msra.mxu0 0
        %249 = vmatprep.subr.bf16.mxu0 0
        %250 = vmatpush1.bf16.msra.mxu0 0
        %251 = vmatprep.subr.bf16.mxu0 0
        %252 = vmatpush1.bf16.msra.mxu0 0
        %253 = vmatprep.subr.bf16.mxu0 0
        %254 = vmatpush1.bf16.msra.mxu0 0
        %255 = vmatprep.subr.bf16.mxu0 0
        %256 = vmatpush1.bf16.msra.mxu0 0
        %257 = vmatprep.subr.bf16.mxu0 0
        %258 = vmatpush1.bf16.msra.mxu0 0
        %259 = vmatprep.subr.bf16.mxu0 0
        %260 = vmatpush1.bf16.msra.mxu0 0
        %261 = vmatprep.subr.bf16.mxu0 0
        %262 = vmatpush1.bf16.msra.mxu0 0
        %263 = vmatprep.subr.bf16.mxu0 0
        %264 = vmatpush1.bf16.msra.mxu0 0
        %265 = vmatprep.subr.bf16.mxu0 0
        %266 = vmatpush1.bf16.msra.mxu0 0
        %267 = vmatprep.mubr.bf16.mxu0 0
        %268 = vmatmul.mubr.bf16.gmra.mrb[0].mxu0 %v233
        %v269 = vpop.f32.mrb[0].mxu0
        %v270 = vadd.f32 %v223, %v269
        %v271 = vpop.f32.mrb[0].mxu0
        %v272 = vpop.f32.mrb[0].mxu0
        %v273 = vpop.f32.mrb[0].mxu0
        %274 = vdwg.mxu0
        %v275 = vpack.c.bf16 %v270, %v270
        %vm276 = vcmask 257024
        %277 = vst.msk [vmem:[%s212] sm:$0xf] %vm276, %v275
        %s278 = sand.u32 %s97, 1
        %s279 = scalar_lea.sflag [#allocation4], %s278
        %s280 = sand.u32 %s97, 1
        %s281 = smul.addr %s280, 4
        %s282 = scalar_lea.vmem [#allocation8], %s281
        // Predicated region
        $region45: #{voice_to_notes_forward.9} parent=31 // pred_check
          %p283 = pneg %p107
        $region46: #{voice_to_notes_forward.9} parent=31 // pred_check_branch
          %285 = sbr.rel (%p283) target = $region48
        $region47: #{voice_to_notes_forward.9} parent=31 // pred_region
          %s287 = ssub.s32 64, 64
          %288 = vsyncadd %s279, %s287
          %s289 = smul.addr %s21, 64
          %s290 = scalar_lea.hbm %s3, %s289
          %s292 = sshll.u32 %s282, 4
          %s293 = int_to_ptr.vmem [resolvable:$true] %s292
          %295 = dma.vmem_to_hbm [thread:$0]  %s293, 64, %s290, %s279
        $region48: #{voice_to_notes_forward.9} parent=31 // pred_fallthru
          _
      $region32: #{voice_to_notes_forward.9} parent=5 // pred_fallthru
        _
      %p296 = scmp.le.s32.totalorder 2, %s16
      // Predicated region
      $region49: #{voice_to_notes_forward.9} parent=5 // pred_check
        %p297 = pneg %p296
      $region50: #{voice_to_notes_forward.9} parent=5 // pred_check_branch
        %299 = sbr.rel (%p297) target = $region52
      $region51: #{voice_to_notes_forward.9} parent=5 // pred_region
        %s300 = ssub.s32 %s16, 2
        // Predicated region
        $region53: #{voice_to_notes_forward.9} parent=51 // pred_check
          %p301 = pneg %p113
        $region54: #{voice_to_notes_forward.9} parent=51 // pred_check_branch
          %303 = sbr.rel (%p301) target = $region56
        $region55: #{voice_to_notes_forward.9} parent=51 // pred_region
          %s304 = sand.u32 %s98, 1
          %s305 = scalar_lea.sflag [#allocation4], %s304
          %s306 = sand.u32 %s98, 1
          %s307 = smul.addr %s306, 4
          %s308 = scalar_lea.vmem [#allocation8], %s307
          %309 = dma.done %s305, 64
        $region56: #{voice_to_notes_forward.9} parent=51 // pred_fallthru
          _
      $region52: #{voice_to_notes_forward.9} parent=5 // pred_fallthru
        _
    $region6: #{voice_to_notes_forward.9} parent=1 // loop_footer
      %s20 = sadd.s32 1, %s16
    $region7: #{voice_to_notes_forward.9} parent=1 // loop_footer_branch
      %15 = sbr.rel target = $region3
    $region8: #{voice_to_notes_forward.9} parent=1 // loop_exit
      _
    %310 = vsyncpa [#allocation3], 1
    %s311 = scalar_lea.sflag [#allocation3], 1
    %312 = vsyncpa %s311, 1
    %313 = vsyncpa [#allocation6], 1
    %314 = vsyncpa [#allocation4], 1
    %s315 = scalar_lea.sflag [#allocation4], 1
    %316 = vsyncpa %s315, 1

// kernel: voice_to_notes_forward.10
$region0: #{voice_to_notes_forward.10}
  #allocation0 [shape = 'u32[]', space=smem, size = 0x4, offset = 0x4, fixed_abs, tag = 'smem constant byte address 0x4 - core index']
  #allocation1 [shape = 'u32[144,128]{1,0:T(1,128)}', space=vmem, size = 0x12000, scoped, tag = 'internal scratch']
  %s0 = inlined_call_operand.vmem [shape: f32[2,8,32], index: 0, kind: input, shape index: {}]
  %s1 = inlined_call_operand.vmem [shape: f32[8,32], index: 1, kind: input, shape index: {}]
  %s2 = inlined_call_operand.hbm [shape: bf16[2,8,32], index: 2, kind: output, shape index: {}]
  %s3 = sld [smem:[#allocation0]]
  $region41: #{voice_to_notes_forward.10} parent=0
    _
  %s5 = ssub.s32 1, %s3
  %s6 = scalar_select 0, %s5, %s3
  $region1: #{voice_to_notes_forward.10} parent=0
    #allocation2 [shape = 'u8[4096]{0}', space=vmem, size = 0x1000, scoped, tag = 'output window, operand 0']
    #allocation3 [shape = 's32[2]{0}', space=sflag, size = 0x8, scoped, tag = 'scoped memory for voice_to_notes_forward.10']
    %7 = vsyncpa [#allocation3], 0
    %s8 = scalar_lea.sflag [#allocation3], 1
    %9 = vsyncpa %s8, 0
    loop: start=0, step=1, limit=4
    $region2: #{voice_to_notes_forward.10} parent=1 // loop_pre_header
      _
    $region3: #{voice_to_notes_forward.10} parent=1 // loop_header
      %s11 = sphi 0, %s15
      %p12 = scmp.ge.s32.totalorder %s11, 4
      %s21 = sphi 0, %s23
      %s24 = sphi 0, %s21
      %s25 = sphi 0, %s24
      %s41 = sphi 0, %s25
      %s45 = sphi 0, %s45
      %s47 = sphi 0, %s45
      %s48 = sphi 0, %s47
      %s62 = sphi 0, %s48
      %s68 = sphi 0, %s70
      %s71 = sphi 0, %s68
      %s72 = sphi 0, %s71
      %s88 = sphi 0, %s72
    $region4: #{voice_to_notes_forward.10} parent=1 // loop_header_branch
      %14 = sbr.rel (%p12) target = $region8
    $region5: #{voice_to_notes_forward.10} parent=1 // loop_body
      %s16 = ssub.s32 %s11, 1
      %s17 = ssub.s32 %s11, 2
      %s18 = sadd.s32 %s11, 1
      %s19 = ssub.s32 %s11, %s18
      %p20 = scmp.eq.s32.totalorder %s19, 0
      %s22 = sadd.s32 %s21, 1
      %s23 = scalar_select %p20, %s21, %s22
      %p26 = pneg %p20
      %p27 = scmp.eq.s32.totalorder %s11, 1
      %p28 = por %p26, %p27
      %p29 = scmp.ne.s32.totalorder %s21, %s24
      %p30 = scmp.eq.s32.totalorder %s11, 0
      %p31 = por %p29, %p30
      %p32 = scmp.ne.s32.totalorder %s21, %s24
      %p33 = scmp.eq.s32.totalorder %s16, 1
      %p34 = por %p32, %p33
      %p35 = scmp.ne.s32.totalorder %s24, %s25
      %p36 = scmp.eq.s32.totalorder %s16, 0
      %p37 = por %p35, %p36
      %p38 = scmp.ne.s32.totalorder %s24, %s25
      %p39 = scmp.eq.s32.totalorder %s17, 1
      %p40 = por %p38, %p39
      %p42 = scmp.ne.s32.totalorder %s25, %s41
      %p43 = scmp.eq.s32.totalorder %s17, 0
      %p44 = por %p42, %p43
      %s46 = sadd.s32 %s45, 1
      %p49 = scmp.eq.s32.totalorder %s11, 1
      %p50 = scmp.ne.s32.totalorder %s45, %s47
      %p51 = scmp.eq.s32.totalorder %s11, 0
      %p52 = por %p50, %p51
      %p53 = scmp.ne.s32.totalorder %s45, %s47
      %p54 = scmp.eq.s32.totalorder %s16, 1
      %p55 = por %p53, %p54
      %p56 = scmp.ne.s32.totalorder %s47, %s48
      %p57 = scmp.eq.s32.totalorder %s16, 0
      %p58 = por %p56, %p57
      %p59 = scmp.ne.s32.totalorder %s47, %s48
      %p60 = scmp.eq.s32.totalorder %s17, 1
      %p61 = por %p59, %p60
      %p63 = scmp.ne.s32.totalorder %s48, %s62
      %p64 = scmp.eq.s32.totalorder %s17, 0
      %p65 = por %p63, %p64
      %s66 = ssub.s32 %s11, %s18
      %p67 = scmp.eq.s32.totalorder %s66, 0
      %s69 = sadd.s32 %s68, 1
      %s70 = scalar_select %p67, %s68, %s69
      %p73 = pneg %p67
      %p74 = scmp.eq.s32.totalorder %s11, 1
      %p75 = por %p73, %p74
      %p76 = scmp.ne.s32.totalorder %s68, %s71
      %p77 = scmp.eq.s32.totalorder %s11, 0
      %p78 = por %p76, %p77
      %p79 = scmp.ne.s32.totalorder %s68, %s71
      %p80 = scmp.eq.s32.totalorder %s16, 1
      %p81 = por %p79, %p80
      %p82 = scmp.ne.s32.totalorder %s71, %s72
      %p83 = scmp.eq.s32.totalorder %s16, 0
      %p84 = por %p82, %p83
      %p85 = scmp.ne.s32.totalorder %s71, %s72
      %p86 = scmp.eq.s32.totalorder %s17, 1
      %p87 = por %p85, %p86
      %p89 = scmp.ne.s32.totalorder %s72, %s88
      %p90 = scmp.eq.s32.totalorder %s17, 0
      %p91 = por %p89, %p90
      %p92 = scmp.le.s32.totalorder 1, %s11
      %p93 = scmp.lt.s32.totalorder %s11, 3
      %p94 = pnand %p92, %p93
      %p95 = pneg %p94
      // Predicated region
      $region9: #{voice_to_notes_forward.10} parent=5 // pred_check
        _
      $region10: #{voice_to_notes_forward.10} parent=5 // pred_check_branch
        %97 = sbr.rel (%p94) target = $region12
      $region11: #{voice_to_notes_forward.10} parent=5 // pred_region
        %s98 = ssub.s32 %s11, 1
        // Predicated region
        $region13: #{voice_to_notes_forward.10} parent=11 // pred_check
          %p99 = pneg %p58
        $region14: #{voice_to_notes_forward.10} parent=11 // pred_check_branch
          %101 = sbr.rel (%p99) target = $region16
        $region15: #{voice_to_notes_forward.10} parent=11 // pred_region
          _
        $region16: #{voice_to_notes_forward.10} parent=11 // pred_fallthru
          _
      $region12: #{voice_to_notes_forward.10} parent=5 // pred_fallthru
        _
      %p102 = scmp.lt.s32.totalorder %s11, 2
      // Predicated region
      $region17: #{voice_to_notes_forward.10} parent=5 // pred_check
        %p103 = pneg %p102
      $region18: #{voice_to_notes_forward.10} parent=5 // pred_check_branch
        %105 = sbr.rel (%p103) target = $region20
      $region19: #{voice_to_notes_forward.10} parent=5 // pred_region
        // Predicated region
        $region21: #{voice_to_notes_forward.10} parent=19 // pred_check
          %p106 = pneg %p31
        $region22: #{voice_to_notes_forward.10} parent=19 // pred_check_branch
          %108 = sbr.rel (%p106) target = $region24
        $region23: #{voice_to_notes_forward.10} parent=19 // pred_region
          %p109 = scmp.lt.s32.totalorder %s11, 1
          %s110 = scalar_select %p109, %s11, 1
          %s111 = smul.addr %s110, 8
          %s112 = scalar_lea.vmem %s0, %s111
        $region24: #{voice_to_notes_forward.10} parent=19 // pred_fallthru
          _
      $region20: #{voice_to_notes_forward.10} parent=5 // pred_fallthru
        _
      %p113 = scmp.le.s32.totalorder 1, %s11
      %p114 = scmp.lt.s32.totalorder %s11, 3
      %p115 = pnand %p113, %p114
      %p116 = pneg %p115
      // Predicated region
      $region25: #{voice_to_notes_forward.10} parent=5 // pred_check
        _
      $region26: #{voice_to_notes_forward.10} parent=5 // pred_check_branch
        %118 = sbr.rel (%p115) target = $region28
      $region27: #{voice_to_notes_forward.10} parent=5 // pred_region
        %s119 = ssub.s32 %s11, 1
        %p120 = scmp.lt.s32.totalorder %s16, 1
        %s121 = scalar_select %p120, %s16, 1
        %s122 = smul.addr %s121, 8
        %s123 = scalar_lea.vmem %s0, %s122
        %p124 = pneg %p37
        %p125 = pneg %p34
        %p126 = pneg %p58
        %p127 = pneg %p55
        %p128 = pneg %p84
        %p129 = pneg %p81
        %s130 = sand.u32 %s71, 1
        %s131 = scalar_lea.sflag [#allocation3], %s130
        %s132 = sand.u32 %s71, 1
        %s133 = smul.addr %s132, 4
        %s134 = scalar_lea.vmem [#allocation2], %s133
        %p135 = scmp.lt.s32.totalorder %s16, 1
        %s136 = scalar_select %p135, %s16, 1
        %s137 = smul.addr %s136, 8
        %s138 = scalar_lea.vmem %s0, %s137
        %v139 = vld [vmem:[%s138] sm:$0xff]
        %v140 = vld [vmem:[%s1] sm:$0xff]
        %v141 = vadd.f32 %v139, %v140
        %v142 = vpack.c.bf16 %v141, %v141
        %vm143 = vcmask 257024
        %144 = vst.msk [vmem:[%s134] sm:$0xf] %vm143, %v142
        %s145 = sand.u32 %s71, 1
        %s146 = scalar_lea.sflag [#allocation3], %s145
        %s147 = sand.u32 %s71, 1
        %s148 = smul.addr %s147, 4
        %s149 = scalar_lea.vmem [#allocation2], %s148
        // Predicated region
        $region29: #{voice_to_notes_forward.10} parent=27 // pred_check
          %p150 = pneg %p81
        $region30: #{voice_to_notes_forward.10} parent=27 // pred_check_branch
          %152 = sbr.rel (%p150) target = $region32
        $region31: #{voice_to_notes_forward.10} parent=27 // pred_region
          %s154 = ssub.s32 64, 64
          %155 = vsyncadd %s146, %s154
          %s156 = smul.addr %s16, 64
          %s157 = scalar_lea.hbm %s2, %s156
          %s159 = sshll.u32 %s149, 4
          %s160 = int_to_ptr.vmem [resolvable:$true] %s159
          %162 = dma.vmem_to_hbm [thread:$0]  %s160, 64, %s157, %s146
        $region32: #{voice_to_notes_forward.10} parent=27 // pred_fallthru
          _
      $region28: #{voice_to_notes_forward.10} parent=5 // pred_fallthru
        _
      %p163 = scmp.le.s32.totalorder 2, %s11
      // Predicated region
      $region33: #{voice_to_notes_forward.10} parent=5 // pred_check
        %p164 = pneg %p163
      $region34: #{voice_to_notes_forward.10} parent=5 // pred_check_branch
        %166 = sbr.rel (%p164) target = $region36
      $region35: #{voice_to_notes_forward.10} parent=5 // pred_region
        %s167 = ssub.s32 %s11, 2
        // Predicated region
        $region37: #{voice_to_notes_forward.10} parent=35 // pred_check
          %p168 = pneg %p87
        $region38: #{voice_to_notes_forward.10} parent=35 // pred_check_branch
          %170 = sbr.rel (%p168) target = $region40
        $region39: #{voice_to_notes_forward.10} parent=35 // pred_region
          %s171 = sand.u32 %s72, 1
          %s172 = scalar_lea.sflag [#allocation3], %s171
          %s173 = sand.u32 %s72, 1
          %s174 = smul.addr %s173, 4
          %s175 = scalar_lea.vmem [#allocation2], %s174
          %176 = dma.done %s172, 64
        $region40: #{voice_to_notes_forward.10} parent=35 // pred_fallthru
          _
      $region36: #{voice_to_notes_forward.10} parent=5 // pred_fallthru
        _
    $region6: #{voice_to_notes_forward.10} parent=1 // loop_footer
      %s15 = sadd.s32 1, %s11
    $region7: #{voice_to_notes_forward.10} parent=1 // loop_footer_branch
      %10 = sbr.rel target = $region3
    $region8: #{voice_to_notes_forward.10} parent=1 // loop_exit
      _
    %177 = vsyncpa [#allocation3], 1
    %s178 = scalar_lea.sflag [#allocation3], 1
    %179 = vsyncpa %s178, 1

// kernel: voice_to_notes_forward.11
$region0: #{voice_to_notes_forward.11}
  #allocation0 [shape = 'u32[]', space=smem, size = 0x4, offset = 0x4, fixed_abs, tag = 'smem constant byte address 0x4 - core index']
  #allocation1 [shape = 'u32[144,128]{1,0:T(1,128)}', space=vmem, size = 0x12000, scoped, tag = 'internal scratch']
  %s0 = inlined_call_operand.hbm [shape: bf16[2,8,32], index: 0, kind: input, shape index: {}]
  %s1 = inlined_call_operand.hbm [shape: bf16[32,96], index: 1, kind: input, shape index: {}]
  %s2 = inlined_call_operand.hbm [shape: f32[1,96], index: 2, kind: input, shape index: {}]
  %s3 = inlined_call_operand.hbm [shape: bf16[32,32], index: 3, kind: input, shape index: {}]
  %s4 = inlined_call_operand.hbm [shape: f32[1,32], index: 4, kind: input, shape index: {}]
  %s5 = inlined_call_operand.hbm [shape: f32[1,32], index: 5, kind: input, shape index: {}]
  %s6 = inlined_call_operand.hbm [shape: f32[1,32], index: 6, kind: input, shape index: {}]
  %s7 = inlined_call_operand.hbm [shape: bf16[2,8,32], index: 7, kind: output, shape index: {}]
  %s8 = sld [smem:[#allocation0]]
  $region89: #{voice_to_notes_forward.11} parent=0
    _
  %s10 = ssub.s32 1, %s8
  %s11 = scalar_select 0, %s10, %s8
  $region1: #{voice_to_notes_forward.11} parent=0
    #allocation2 [shape = 'u8[4096]{0}', space=vmem, size = 0x1000, scoped, tag = 'input window, operand 0']
    #allocation3 [shape = 's32[2]{0}', space=sflag, size = 0x8, scoped, tag = 'scoped memory for voice_to_notes_forward.11']
    #allocation4 [shape = 's32[2]{0}', space=sflag, size = 0x8, scoped, tag = 'scoped memory for voice_to_notes_forward.11']
    #allocation5 [shape = 'u8[8192]{0}', space=vmem, size = 0x2000, scoped, tag = 'input window, operand 1, single buffered']
    #allocation6 [shape = 's32[1]{0}', space=sflag, size = 0x4, scoped, tag = 'scoped memory for voice_to_notes_forward.11']
    #allocation7 [shape = 'u8[512]{0}', space=vmem, size = 0x400, scoped, tag = 'input window, operand 2, single buffered']
    #allocation8 [shape = 'u8[8192]{0}', space=vmem, size = 0x2000, scoped, tag = 'input window, operand 3, single buffered']
    #allocation9 [shape = 's32[1]{0}', space=sflag, size = 0x4, scoped, tag = 'scoped memory for voice_to_notes_forward.11']
    #allocation10 [shape = 'u8[512]{0}', space=vmem, size = 0x400, scoped, tag = 'input window, operand 4, single buffered']
    #allocation11 [shape = 'u8[512]{0}', space=vmem, size = 0x400, scoped, tag = 'input window, operand 5, single buffered']
    #allocation12 [shape = 's32[1]{0}', space=sflag, size = 0x4, scoped, tag = 'scoped memory for voice_to_notes_forward.11']
    #allocation13 [shape = 'u8[512]{0}', space=vmem, size = 0x400, scoped, tag = 'input window, operand 6, single buffered']
    #allocation14 [shape = 'u8[4096]{0}', space=vmem, size = 0x1000, scoped, tag = 'output window, operand 0']
    %12 = vsyncpa [#allocation3], 0
    %s13 = scalar_lea.sflag [#allocation3], 1
    %14 = vsyncpa %s13, 0
    %15 = vsyncpa [#allocation6], 0
    %16 = vsyncpa [#allocation9], 0
    %17 = vsyncpa [#allocation12], 0
    %18 = vsyncpa [#allocation4], 0
    %s19 = scalar_lea.sflag [#allocation4], 1
    %20 = vsyncpa %s19, 0
    loop: start=0, step=1, limit=4
    $region2: #{voice_to_notes_forward.11} parent=1 // loop_pre_header
      _
    $region3: #{voice_to_notes_forward.11} parent=1 // loop_header
      %s22 = sphi 0, %s26
      %p23 = scmp.ge.s32.totalorder %s22, 4
      %s32 = sphi 0, %s34
      %s35 = sphi 0, %s32
      %s36 = sphi 0, %s35
      %s52 = sphi 0, %s36
      %s56 = sphi 0, %s56
      %s58 = sphi 0, %s56
      %s59 = sphi 0, %s58
      %s73 = sphi 0, %s59
      %s77 = sphi 0, %s77
      %s79 = sphi 0, %s77
      %s80 = sphi 0, %s79
      %s94 = sphi 0, %s80
      %s98 = sphi 0, %s98
      %s100 = sphi 0, %s98
      %s101 = sphi 0, %s100
      %s115 = sphi 0, %s101
      %s119 = sphi 0, %s119
      %s121 = sphi 0, %s119
      %s122 = sphi 0, %s121
      %s136 = sphi 0, %s122
      %s140 = sphi 0, %s140
      %s142 = sphi 0, %s140
      %s143 = sphi 0, %s142
      %s157 = sphi 0, %s143
      %s161 = sphi 0, %s161
      %s163 = sphi 0, %s161
      %s164 = sphi 0, %s163
      %s178 = sphi 0, %s164
      %s184 = sphi 0, %s186
      %s187 = sphi 0, %s184
      %s188 = sphi 0, %s187
      %s204 = sphi 0, %s188
    $region4: #{voice_to_notes_forward.11} parent=1 // loop_header_branch
      %25 = sbr.rel (%p23) target = $region8
    $region5: #{voice_to_notes_forward.11} parent=1 // loop_body
      %s27 = ssub.s32 %s22, 1
      %s28 = ssub.s32 %s22, 2
      %s29 = sadd.s32 %s22, 1
      %s30 = ssub.s32 %s22, %s29
      %p31 = scmp.eq.s32.totalorder %s30, 0
      %s33 = sadd.s32 %s32, 1
      %s34 = scalar_select %p31, %s32, %s33
      %p37 = pneg %p31
      %p38 = scmp.eq.s32.totalorder %s22, 1
      %p39 = por %p37, %p38
      %p40 = scmp.ne.s32.totalorder %s32, %s35
      %p41 = scmp.eq.s32.totalorder %s22, 0
      %p42 = por %p40, %p41
      %p43 = scmp.ne.s32.totalorder %s32, %s35
      %p44 = scmp.eq.s32.totalorder %s27, 1
      %p45 = por %p43, %p44
      %p46 = scmp.ne.s32.totalorder %s35, %s36
      %p47 = scmp.eq.s32.totalorder %s27, 0
      %p48 = por %p46, %p47
      %p49 = scmp.ne.s32.totalorder %s35, %s36
      %p50 = scmp.eq.s32.totalorder %s28, 1
      %p51 = por %p49, %p50
      %p53 = scmp.ne.s32.totalorder %s36, %s52
      %p54 = scmp.eq.s32.totalorder %s28, 0
      %p55 = por %p53, %p54
      %s57 = sadd.s32 %s56, 1
      %p60 = scmp.eq.s32.totalorder %s22, 1
      %p61 = scmp.ne.s32.totalorder %s56, %s58
      %p62 = scmp.eq.s32.totalorder %s22, 0
      %p63 = por %p61, %p62
      %p64 = scmp.ne.s32.totalorder %s56, %s58
      %p65 = scmp.eq.s32.totalorder %s27, 1
      %p66 = por %p64, %p65
      %p67 = scmp.ne.s32.totalorder %s58, %s59
      %p68 = scmp.eq.s32.totalorder %s27, 0
      %p69 = por %p67, %p68
      %p70 = scmp.ne.s32.totalorder %s58, %s59
      %p71 = scmp.eq.s32.totalorder %s28, 1
      %p72 = por %p70, %p71
      %p74 = scmp.ne.s32.totalorder %s59, %s73
      %p75 = scmp.eq.s32.totalorder %s28, 0
      %p76 = por %p74, %p75
      %s78 = sadd.s32 %s77, 1
      %p81 = scmp.eq.s32.totalorder %s22, 1
      %p82 = scmp.ne.s32.totalorder %s77, %s79
      %p83 = scmp.eq.s32.totalorder %s22, 0
      %p84 = por %p82, %p83
      %p85 = scmp.ne.s32.totalorder %s77, %s79
      %p86 = scmp.eq.s32.totalorder %s27, 1
      %p87 = por %p85, %p86
      %p88 = scmp.ne.s32.totalorder %s79, %s80
      %p89 = scmp.eq.s32.totalorder %s27, 0
      %p90 = por %p88, %p89
      %p91 = scmp.ne.s32.totalorder %s79, %s80
      %p92 = scmp.eq.s32.totalorder %s28, 1
      %p93 = por %p91, %p92
      %p95 = scmp.ne.s32.totalorder %s80, %s94
      %p96 = scmp.eq.s32.totalorder %s28, 0
      %p97 = por %p95, %p96
      %s99 = sadd.s32 %s98, 1
      %p102 = scmp.eq.s32.totalorder %s22, 1
      %p103 = scmp.ne.s32.totalorder %s98, %s100
      %p104 = scmp.eq.s32.totalorder %s22, 0
      %p105 = por %p103, %p104
      %p106 = scmp.ne.s32.totalorder %s98, %s100
      %p107 = scmp.eq.s32.totalorder %s27, 1
      %p108 = por %p106, %p107
      %p109 = scmp.ne.s32.totalorder %s100, %s101
      %p110 = scmp.eq.s32.totalorder %s27, 0
      %p111 = por %p109, %p110
      %p112 = scmp.ne.s32.totalorder %s100, %s101
      %p113 = scmp.eq.s32.totalorder %s28, 1
      %p114 = por %p112, %p113
      %p116 = scmp.ne.s32.totalorder %s101, %s115
      %p117 = scmp.eq.s32.totalorder %s28, 0
      %p118 = por %p116, %p117
      %s120 = sadd.s32 %s119, 1
      %p123 = scmp.eq.s32.totalorder %s22, 1
      %p124 = scmp.ne.s32.totalorder %s119, %s121
      %p125 = scmp.eq.s32.totalorder %s22, 0
      %p126 = por %p124, %p125
      %p127 = scmp.ne.s32.totalorder %s119, %s121
      %p128 = scmp.eq.s32.totalorder %s27, 1
      %p129 = por %p127, %p128
      %p130 = scmp.ne.s32.totalorder %s121, %s122
      %p131 = scmp.eq.s32.totalorder %s27, 0
      %p132 = por %p130, %p131
      %p133 = scmp.ne.s32.totalorder %s121, %s122
      %p134 = scmp.eq.s32.totalorder %s28, 1
      %p135 = por %p133, %p134
      %p137 = scmp.ne.s32.totalorder %s122, %s136
      %p138 = scmp.eq.s32.totalorder %s28, 0
      %p139 = por %p137, %p138
      %s141 = sadd.s32 %s140, 1
      %p144 = scmp.eq.s32.totalorder %s22, 1
      %p145 = scmp.ne.s32.totalorder %s140, %s142
      %p146 = scmp.eq.s32.totalorder %s22, 0
      %p147 = por %p145, %p146
      %p148 = scmp.ne.s32.totalorder %s140, %s142
      %p149 = scmp.eq.s32.totalorder %s27, 1
      %p150 = por %p148, %p149
      %p151 = scmp.ne.s32.totalorder %s142, %s143
      %p152 = scmp.eq.s32.totalorder %s27, 0
      %p153 = por %p151, %p152
      %p154 = scmp.ne.s32.totalorder %s142, %s143
      %p155 = scmp.eq.s32.totalorder %s28, 1
      %p156 = por %p154, %p155
      %p158 = scmp.ne.s32.totalorder %s143, %s157
      %p159 = scmp.eq.s32.totalorder %s28, 0
      %p160 = por %p158, %p159
      %s162 = sadd.s32 %s161, 1
      %p165 = scmp.eq.s32.totalorder %s22, 1
      %p166 = scmp.ne.s32.totalorder %s161, %s163
      %p167 = scmp.eq.s32.totalorder %s22, 0
      %p168 = por %p166, %p167
      %p169 = scmp.ne.s32.totalorder %s161, %s163
      %p170 = scmp.eq.s32.totalorder %s27, 1
      %p171 = por %p169, %p170
      %p172 = scmp.ne.s32.totalorder %s163, %s164
      %p173 = scmp.eq.s32.totalorder %s27, 0
      %p174 = por %p172, %p173
      %p175 = scmp.ne.s32.totalorder %s163, %s164
      %p176 = scmp.eq.s32.totalorder %s28, 1
      %p177 = por %p175, %p176
      %p179 = scmp.ne.s32.totalorder %s164, %s178
      %p180 = scmp.eq.s32.totalorder %s28, 0
      %p181 = por %p179, %p180
      %s182 = ssub.s32 %s22, %s29
      %p183 = scmp.eq.s32.totalorder %s182, 0
      %s185 = sadd.s32 %s184, 1
      %s186 = scalar_select %p183, %s184, %s185
      %p189 = pneg %p183
      %p190 = scmp.eq.s32.totalorder %s22, 1
      %p191 = por %p189, %p190
      %p192 = scmp.ne.s32.totalorder %s184, %s187
      %p193 = scmp.eq.s32.totalorder %s22, 0
      %p194 = por %p192, %p193
      %p195 = scmp.ne.s32.totalorder %s184, %s187
      %p196 = scmp.eq.s32.totalorder %s27, 1
      %p197 = por %p195, %p196
      %p198 = scmp.ne.s32.totalorder %s187, %s188
      %p199 = scmp.eq.s32.totalorder %s27, 0
      %p200 = por %p198, %p199
      %p201 = scmp.ne.s32.totalorder %s187, %s188
      %p202 = scmp.eq.s32.totalorder %s28, 1
      %p203 = por %p201, %p202
      %p205 = scmp.ne.s32.totalorder %s188, %s204
      %p206 = scmp.eq.s32.totalorder %s28, 0
      %p207 = por %p205, %p206
      %p208 = scmp.le.s32.totalorder 1, %s22
      %p209 = scmp.lt.s32.totalorder %s22, 3
      %p210 = pnand %p208, %p209
      %p211 = pneg %p210
      // Predicated region
      $region9: #{voice_to_notes_forward.11} parent=5 // pred_check
        _
      $region10: #{voice_to_notes_forward.11} parent=5 // pred_check_branch
        %213 = sbr.rel (%p210) target = $region12
      $region11: #{voice_to_notes_forward.11} parent=5 // pred_region
        %s214 = ssub.s32 %s22, 1
        // Predicated region
        $region13: #{voice_to_notes_forward.11} parent=11 // pred_check
          %p215 = pneg %p69
        $region14: #{voice_to_notes_forward.11} parent=11 // pred_check_branch
          %217 = sbr.rel (%p215) target = $region16
        $region15: #{voice_to_notes_forward.11} parent=11 // pred_region
          %s219 = ssub.s32 256, 256
          %220 = vsyncadd [#allocation6], %s219
          %s221 = sshll.u32 [#allocation5], 4
          %s222 = int_to_ptr.vmem [resolvable:$true] %s221
          %227 = dma.hbm_to_vmem [thread:$0]  %s1, 256, %s222, [#allocation6], 64, 64, 4
        $region16: #{voice_to_notes_forward.11} parent=11 // pred_fallthru
          _
        // Predicated region
        $region17: #{voice_to_notes_forward.11} parent=11 // pred_check
          %p228 = pneg %p90
        $region18: #{voice_to_notes_forward.11} parent=11 // pred_check_branch
          %230 = sbr.rel (%p228) target = $region20
        $region19: #{voice_to_notes_forward.11} parent=11 // pred_region
          %s232 = ssub.s32 16, 16
          %233 = vsyncadd [#allocation6], %s232
          %s235 = sshll.u32 [#allocation7], 4
          %s236 = int_to_ptr.vmem [resolvable:$true] %s235
          %238 = dma.hbm_to_vmem [thread:$0]  %s2, 16, %s236, [#allocation6]
        $region20: #{voice_to_notes_forward.11} parent=11 // pred_fallthru
          _
        // Predicated region
        $region21: #{voice_to_notes_forward.11} parent=11 // pred_check
          %p239 = pneg %p111
        $region22: #{voice_to_notes_forward.11} parent=11 // pred_check_branch
          %241 = sbr.rel (%p239) target = $region24
        $region23: #{voice_to_notes_forward.11} parent=11 // pred_region
          %s243 = ssub.s32 256, 256
          %244 = vsyncadd [#allocation9], %s243
          %s245 = sshll.u32 [#allocation8], 4
          %s246 = int_to_ptr.vmem [resolvable:$true] %s245
          %251 = dma.hbm_to_vmem [thread:$0]  %s3, 256, %s246, [#allocation9], 64, 64, 4
        $region24: #{voice_to_notes_forward.11} parent=11 // pred_fallthru
          _
        // Predicated region
        $region25: #{voice_to_notes_forward.11} parent=11 // pred_check
          %p252 = pneg %p132
        $region26: #{voice_to_notes_forward.11} parent=11 // pred_check_branch
          %254 = sbr.rel (%p252) target = $region28
        $region27: #{voice_to_notes_forward.11} parent=11 // pred_region
          %s256 = ssub.s32 16, 16
          %257 = vsyncadd [#allocation9], %s256
          %s259 = sshll.u32 [#allocation10], 4
          %s260 = int_to_ptr.vmem [resolvable:$true] %s259
          %262 = dma.hbm_to_vmem [thread:$0]  %s4, 16, %s260, [#allocation9]
        $region28: #{voice_to_notes_forward.11} parent=11 // pred_fallthru
          _
        // Predicated region
        $region29: #{voice_to_notes_forward.11} parent=11 // pred_check
          %p263 = pneg %p153
        $region30: #{voice_to_notes_forward.11} parent=11 // pred_check_branch
          %265 = sbr.rel (%p263) target = $region32
        $region31: #{voice_to_notes_forward.11} parent=11 // pred_region
          %s267 = ssub.s32 16, 16
          %268 = vsyncadd [#allocation12], %s267
          %s270 = sshll.u32 [#allocation11], 4
          %s271 = int_to_ptr.vmem [resolvable:$true] %s270
          %273 = dma.hbm_to_vmem [thread:$0]  %s5, 16, %s271, [#allocation12]
        $region32: #{voice_to_notes_forward.11} parent=11 // pred_fallthru
          _
        // Predicated region
        $region33: #{voice_to_notes_forward.11} parent=11 // pred_check
          %p274 = pneg %p174
        $region34: #{voice_to_notes_forward.11} parent=11 // pred_check_branch
          %276 = sbr.rel (%p274) target = $region36
        $region35: #{voice_to_notes_forward.11} parent=11 // pred_region
          %s278 = ssub.s32 16, 16
          %279 = vsyncadd [#allocation12], %s278
          %s281 = sshll.u32 [#allocation13], 4
          %s282 = int_to_ptr.vmem [resolvable:$true] %s281
          %284 = dma.hbm_to_vmem [thread:$0]  %s6, 16, %s282, [#allocation12]
        $region36: #{voice_to_notes_forward.11} parent=11 // pred_fallthru
          _
      $region12: #{voice_to_notes_forward.11} parent=5 // pred_fallthru
        _
      %p285 = scmp.lt.s32.totalorder %s22, 2
      // Predicated region
      $region37: #{voice_to_notes_forward.11} parent=5 // pred_check
        %p286 = pneg %p285
      $region38: #{voice_to_notes_forward.11} parent=5 // pred_check_branch
        %288 = sbr.rel (%p286) target = $region40
      $region39: #{voice_to_notes_forward.11} parent=5 // pred_region
        // Predicated region
        $region41: #{voice_to_notes_forward.11} parent=39 // pred_check
          %p289 = pneg %p42
        $region42: #{voice_to_notes_forward.11} parent=39 // pred_check_branch
          %291 = sbr.rel (%p289) target = $region44
        $region43: #{voice_to_notes_forward.11} parent=39 // pred_region
          %s292 = sand.u32 %s32, 1
          %s293 = scalar_lea.sflag [#allocation3], %s292
          %s294 = sand.u32 %s32, 1
          %s295 = smul.addr %s294, 4
          %s296 = scalar_lea.vmem [#allocation2], %s295
          %s298 = ssub.s32 64, 64
          %299 = vsyncadd %s293, %s298
          %s300 = smul.addr %s22, 64
          %s301 = scalar_lea.hbm %s0, %s300
          %s303 = sshll.u32 %s296, 4
          %s304 = int_to_ptr.vmem [resolvable:$true] %s303
          %306 = dma.hbm_to_vmem [thread:$0]  %s301, 64, %s304, %s293
        $region44: #{voice_to_notes_forward.11} parent=39 // pred_fallthru
          _
      $region40: #{voice_to_notes_forward.11} parent=5 // pred_fallthru
        _
      %p307 = scmp.le.s32.totalorder 1, %s22
      %p308 = scmp.lt.s32.totalorder %s22, 3
      %p309 = pnand %p307, %p308
      %p310 = pneg %p309
      // Predicated region
      $region45: #{voice_to_notes_forward.11} parent=5 // pred_check
        _
      $region46: #{voice_to_notes_forward.11} parent=5 // pred_check_branch
        %312 = sbr.rel (%p309) target = $region48
      $region47: #{voice_to_notes_forward.11} parent=5 // pred_region
        %s313 = ssub.s32 %s22, 1
        %s314 = sand.u32 %s35, 1
        %s315 = scalar_lea.sflag [#allocation3], %s314
        %s316 = sand.u32 %s35, 1
        %s317 = smul.addr %s316, 4
        %s318 = scalar_lea.vmem [#allocation2], %s317
        // Predicated region
        $region49: #{voice_to_notes_forward.11} parent=47 // pred_check
          %p319 = pneg %p48
        $region50: #{voice_to_notes_forward.11} parent=47 // pred_check_branch
          %321 = sbr.rel (%p319) target = $region52
        $region51: #{voice_to_notes_forward.11} parent=47 // pred_region
          %322 = dma.done %s315, 64
        $region52: #{voice_to_notes_forward.11} parent=47 // pred_fallthru
          _
        // Predicated region
        $region53: #{voice_to_notes_forward.11} parent=47 // pred_check
          %p323 = pneg %p69
        $region54: #{voice_to_notes_forward.11} parent=47 // pred_check_branch
          %325 = sbr.rel (%p323) target = $region56
        $region55: #{voice_to_notes_forward.11} parent=47 // pred_region
          %326 = dma.done [#allocation6], 256
        $region56: #{voice_to_notes_forward.11} parent=47 // pred_fallthru
          _
        // Predicated region
        $region57: #{voice_to_notes_forward.11} parent=47 // pred_check
          %p327 = pneg %p90
        $region58: #{voice_to_notes_forward.11} parent=47 // pred_check_branch
          %329 = sbr.rel (%p327) target = $region60
        $region59: #{voice_to_notes_forward.11} parent=47 // pred_region
          %330 = dma.done [#allocation6], 16
        $region60: #{voice_to_notes_forward.11} parent=47 // pred_fallthru
          _
        // Predicated region
        $region61: #{voice_to_notes_forward.11} parent=47 // pred_check
          %p331 = pneg %p111
        $region62: #{voice_to_notes_forward.11} parent=47 // pred_check_branch
          %333 = sbr.rel (%p331) target = $region64
        $region63: #{voice_to_notes_forward.11} parent=47 // pred_region
          %334 = dma.done [#allocation9], 256
        $region64: #{voice_to_notes_forward.11} parent=47 // pred_fallthru
          _
        // Predicated region
        $region65: #{voice_to_notes_forward.11} parent=47 // pred_check
          %p335 = pneg %p132
        $region66: #{voice_to_notes_forward.11} parent=47 // pred_check_branch
          %337 = sbr.rel (%p335) target = $region68
        $region67: #{voice_to_notes_forward.11} parent=47 // pred_region
          %338 = dma.done [#allocation9], 16
        $region68: #{voice_to_notes_forward.11} parent=47 // pred_fallthru
          _
        // Predicated region
        $region69: #{voice_to_notes_forward.11} parent=47 // pred_check
          %p339 = pneg %p153
        $region70: #{voice_to_notes_forward.11} parent=47 // pred_check_branch
          %341 = sbr.rel (%p339) target = $region72
        $region71: #{voice_to_notes_forward.11} parent=47 // pred_region
          %342 = dma.done [#allocation12], 16
        $region72: #{voice_to_notes_forward.11} parent=47 // pred_fallthru
          _
        // Predicated region
        $region73: #{voice_to_notes_forward.11} parent=47 // pred_check
          %p343 = pneg %p174
        $region74: #{voice_to_notes_forward.11} parent=47 // pred_check_branch
          %345 = sbr.rel (%p343) target = $region76
        $region75: #{voice_to_notes_forward.11} parent=47 // pred_region
          %346 = dma.done [#allocation12], 16
        $region76: #{voice_to_notes_forward.11} parent=47 // pred_fallthru
          _
        %s347 = sand.u32 %s35, 1
        %s348 = scalar_lea.sflag [#allocation3], %s347
        %s349 = sand.u32 %s35, 1
        %s350 = smul.addr %s349, 4
        %s351 = scalar_lea.vmem [#allocation2], %s350
        %p352 = pneg %p48
        %p353 = pneg %p45
        %p354 = pneg %p69
        %p355 = pneg %p66
        %p356 = pneg %p90
        %p357 = pneg %p87
        %p358 = pneg %p111
        %p359 = pneg %p108
        %p360 = pneg %p132
        %p361 = pneg %p129
        %p362 = pneg %p153
        %p363 = pneg %p150
        %p364 = pneg %p174
        %p365 = pneg %p171
        %p366 = pneg %p200
        %p367 = pneg %p197
        %s368 = sand.u32 %s187, 1
        %s369 = scalar_lea.sflag [#allocation4], %s368
        %s370 = sand.u32 %s187, 1
        %s371 = smul.addr %s370, 4
        %s372 = scalar_lea.vmem [#allocation14], %s371
        %v374 = vld [vmem:[%s318] sm:$0xf]
        %v375 = vld [vmem:[#allocation5] sm:$0xf]
        %v376 = vld [vmem:[#allocation5 + $0x4] sm:$0xf]
        %v377 = vld [vmem:[#allocation5 + $0x8] sm:$0xf]
        %v378 = vld [vmem:[#allocation5 + $0xc] sm:$0xf]
        %v379 = vld [vmem:[#allocation7] sm:$0x1]
        %v381 = vlaneseq
        %v382 = vshrl.u32 %v381, 7
        %v383 = vsub.s32 0, %v382
        %v384 = vrot.slane %v379, %v383
        %v390 = vunpack.c.l.b16 %v375
        %v391 = vunpack.c.l.b16 %v376
        %v392 = vunpack.c.l.b16 %v377
        %v393 = vunpack.c.l.b16 %v378
        %v394 = vpack.c.b16 %v391, %v390
        %v395 = vpack.c.b16 %v393, %v392
        %vm398 = vcmask 261120
        %v400 = vsel %vm398, %v374, 0
        %402 = vmatprep.subr.bf16.mxu0 0
        %403 = vmatpush1.bf16.msra.mxu0 %v394
        %404 = vmatprep.subr.bf16.mxu0 0
        %405 = vmatpush1.bf16.msra.mxu0 %v395
        %406 = vmatprep.subr.bf16.mxu0 0
        %407 = vmatpush1.bf16.msra.mxu0 0
        %408 = vmatprep.subr.bf16.mxu0 0
        %409 = vmatpush1.bf16.msra.mxu0 0
        %410 = vmatprep.subr.bf16.mxu0 0
        %411 = vmatpush1.bf16.msra.mxu0 0
        %412 = vmatprep.subr.bf16.mxu0 0
        %413 = vmatpush1.bf16.msra.mxu0 0
        %414 = vmatprep.subr.bf16.mxu0 0
        %415 = vmatpush1.bf16.msra.mxu0 0
        %416 = vmatprep.subr.bf16.mxu0 0
        %417 = vmatpush1.bf16.msra.mxu0 0
        %418 = vmatprep.subr.bf16.mxu0 0
        %419 = vmatpush1.bf16.msra.mxu0 0
        %420 = vmatprep.subr.bf16.mxu0 0
        %421 = vmatpush1.bf16.msra.mxu0 0
        %422 = vmatprep.subr.bf16.mxu0 0
        %423 = vmatpush1.bf16.msra.mxu0 0
        %424 = vmatprep.subr.bf16.mxu0 0
        %425 = vmatpush1.bf16.msra.mxu0 0
        %426 = vmatprep.subr.bf16.mxu0 0
        %427 = vmatpush1.bf16.msra.mxu0 0
        %428 = vmatprep.subr.bf16.mxu0 0
        %429 = vmatpush1.bf16.msra.mxu0 0
        %430 = vmatprep.subr.bf16.mxu0 0
        %431 = vmatpush1.bf16.msra.mxu0 0
        %432 = vmatprep.subr.bf16.mxu0 0
        %433 = vmatpush1.bf16.msra.mxu0 0
        %434 = vmatprep.mubr.bf16.mxu0 0
        %435 = vmatmul.mubr.bf16.gmra.mrb[0].mxu0 %v400
        %v436 = vpop.f32.mrb[0].mxu0
        %v437 = vadd.f32 %v384, %v436
        %v438 = vpop.f32.mrb[0].mxu0
        %v439 = vpop.f32.mrb[0].mxu0
        %v440 = vpop.f32.mrb[0].mxu0
        %441 = vdwg.mxu0
        %v442 = vpack.c.bf16 %v437, %v437
        %v443 = vlaneseq
        %v444 = vshrl.u32 %v443, 7
        %v445 = vlaneseq
        %v446 = vand.u32 %v445, 127
        %vm447 = vcmp.le.s32.totalorder %v446, %v444
        %449 = vrot.lane.b32.xlu0 %v442, 96
        %v450 = vpop.permute.xlu0 %449
        %vm451 = vcmask 64512
        %v453 = vsel %vm451, %v442, 0
        %v456 = vsel %vm451, %v450, 0
        %458 = vmatprep.subr.bf16.mxu0 0
        %459 = vmatpush1.bf16.xpose.msra.mxu0 %v456
        %460 = vmatprep.subr.bf16.mxu0 0
        %461 = vmatpush1.bf16.xpose.msra.mxu0 0
        %462 = vmatprep.subr.bf16.mxu0 0
        %463 = vmatpush1.bf16.xpose.msra.mxu0 0
        %464 = vmatprep.subr.bf16.mxu0 0
        %465 = vmatpush1.bf16.xpose.msra.mxu0 0
        %466 = vmatprep.subr.bf16.mxu0 0
        %467 = vmatpush1.bf16.xpose.msra.mxu0 0
        %468 = vmatprep.subr.bf16.mxu0 0
        %469 = vmatpush1.bf16.xpose.msra.mxu0 0
        %470 = vmatprep.subr.bf16.mxu0 0
        %471 = vmatpush1.bf16.xpose.msra.mxu0 0
        %472 = vmatprep.subr.bf16.mxu0 0
        %473 = vmatpush1.bf16.xpose.msra.mxu0 0
        %474 = vmatprep.subr.bf16.mxu0 0
        %475 = vmatpush1.bf16.xpose.msra.mxu0 0
        %476 = vmatprep.subr.bf16.mxu0 0
        %477 = vmatpush1.bf16.xpose.msra.mxu0 0
        %478 = vmatprep.subr.bf16.mxu0 0
        %479 = vmatpush1.bf16.xpose.msra.mxu0 0
        %480 = vmatprep.subr.bf16.mxu0 0
        %481 = vmatpush1.bf16.xpose.msra.mxu0 0
        %482 = vmatprep.subr.bf16.mxu0 0
        %483 = vmatpush1.bf16.xpose.msra.mxu0 0
        %484 = vmatprep.subr.bf16.mxu0 0
        %485 = vmatpush1.bf16.xpose.msra.mxu0 0
        %486 = vmatprep.subr.bf16.mxu0 0
        %487 = vmatpush1.bf16.xpose.msra.mxu0 0
        %488 = vmatprep.subr.bf16.mxu0 0
        %489 = vmatpush1.bf16.xpose.msra.mxu0 0
        %490 = vmatprep.mubr.bf16.mxu0 0
        %491 = vmatmul.mubr.bf16.gmra.mrb[0].mxu0 %v453
        %v492 = vpop.f32.mrb[0].mxu0
        %v493 = vadd.f32 0.0, %v492
        %v494 = vpop.f32.mrb[0].mxu0
        %v495 = vpop.f32.mrb[0].mxu0
        %v496 = vpop.f32.mrb[0].mxu0
        %497 = vdwg.mxu0
        %v498 = vsel %vm447, %v493, -1e+09
        %v499 = vsel %vm451, %v498, -inf
        %500 = vmax.xlane.f32.xlu0 %v499
        %v501 = vpop.xlane.xlu0 %500
        %v502 = vsub.f32 %v498, %v501
        %v503 = vmul.f32 %v502, 1.442695
        %v504 = vpow.pop %v503
        %v505 = vsel %vm451, %v504, 0.0
        %506 = vadd.xlane.f32.xlu0 %v505
        %v507 = vpop.xlane.xlu0 %506
        %v508 = vpack.c.bf16 %v504, %v504
        %509 = vrot.lane.b32.xlu0 %v442, 64
        %v510 = vpop.permute.xlu0 %509
        %v512 = vsel %vm451, %v508, 0
        %vm514 = vcmask 1043456
        %v516 = vsel %vm514, %v510, 0
        %518 = vmatprep.subr.bf16.mxu0 0
        %519 = vmatpush1.bf16.msra.mxu0 %v516
        %520 = vmatprep.subr.bf16.mxu0 0
        %521 = vmatpush1.bf16.msra.mxu0 0
        %522 = vmatprep.subr.bf16.mxu0 0
        %523 = vmatpush1.bf16.msra.mxu0 0
        %524 = vmatprep.subr.bf16.mxu0 0
        %525 = vmatpush1.bf16.msra.mxu0 0
        %526 = vmatprep.subr.bf16.mxu0 0
        %527 = vmatpush1.bf16.msra.mxu0 0
        %528 = vmatprep.subr.bf16.mxu0 0
        %529 = vmatpush1.bf16.msra.mxu0 0
        %530 = vmatprep.subr.bf16.mxu0 0
        %531 = vmatpush1.bf16.msra.mxu0 0
        %532 = vmatprep.subr.bf16.mxu0 0
        %533 = vmatpush1.bf16.msra.mxu0 0
        %534 = vmatprep.subr.bf16.mxu0 0
        %535 = vmatpush1.bf16.msra.mxu0 0
        %536 = vmatprep.subr.bf16.mxu0 0
        %537 = vmatpush1.bf16.msra.mxu0 0
        %538 = vmatprep.subr.bf16.mxu0 0
        %539 = vmatpush1.bf16.msra.mxu0 0
        %540 = vmatprep.subr.bf16.mxu0 0
        %541 = vmatpush1.bf16.msra.mxu0 0
        %542 = vmatprep.subr.bf16.mxu0 0
        %543 = vmatpush1.bf16.msra.mxu0 0
        %544 = vmatprep.subr.bf16.mxu0 0
        %545 = vmatpush1.bf16.msra.mxu0 0
        %546 = vmatprep.subr.bf16.mxu0 0
        %547 = vmatpush1.bf16.msra.mxu0 0
        %548 = vmatprep.subr.bf16.mxu0 0
        %549 = vmatpush1.bf16.msra.mxu0 0
        %550 = vmatprep.mubr.bf16.mxu0 0
        %551 = vmatmul.mubr.bf16.gmra.mrb[0].mxu0 %v512
        %v552 = vpop.f32.mrb[0].mxu0
        %v553 = vadd.f32 0.0, %v552
        %v554 = vpop.f32.mrb[0].mxu0
        %v555 = vpop.f32.mrb[0].mxu0
        %v556 = vpop.f32.mrb[0].mxu0
        %557 = vdwg.mxu0
        %v558 = vrcp.pop %v507
        %v559 = vmul.f32 %v553, %v558
        %560 = vrot.lane.b32.xlu0 %v442, 120
        %v561 = vpop.permute.xlu0 %560
        %562 = vrot.lane.b32.xlu0 %v442, 88
        %v563 = vpop.permute.xlu0 %562
        %v565 = vsel %vm451, %v561, 0
        %v568 = vsel %vm451, %v563, 0
        %570 = vmatprep.subr.bf16.mxu0 0
        %571 = vmatpush1.bf16.xpose.msra.mxu0 %v568
        %572 = vmatprep.subr.bf16.mxu0 0
        %573 = vmatpush1.bf16.xpose.msra.mxu0 0
        %574 = vmatprep.subr.bf16.mxu0 0
        %575 = vmatpush1.bf16.xpose.msra.mxu0 0
        %576 = vmatprep.subr.bf16.mxu0 0
        %577 = vmatpush1.bf16.xpose.msra.mxu0 0
        %578 = vmatprep.subr.bf16.mxu0 0
        %579 = vmatpush1.bf16.xpose.msra.mxu0 0
        %580 = vmatprep.subr.bf16.mxu0 0
        %581 = vmatpush1.bf16.xpose.msra.mxu0 0
        %582 = vmatprep.subr.bf16.mxu0 0
        %583 = vmatpush1.bf16.xpose.msra.mxu0 0
        %584 = vmatprep.subr.bf16.mxu0 0
        %585 = vmatpush1.bf16.xpose.msra.mxu0 0
        %586 = vmatprep.subr.bf16.mxu0 0
        %587 = vmatpush1.bf16.xpose.msra.mxu0 0
        %588 = vmatprep.subr.bf16.mxu0 0
        %589 = vmatpush1.bf16.xpose.msra.mxu0 0
        %590 = vmatprep.subr.bf16.mxu0 0
        %591 = vmatpush1.bf16.xpose.msra.mxu0 0
        %592 = vmatprep.subr.bf16.mxu0 0
        %593 = vmatpush1.bf16.xpose.msra.mxu0 0
        %594 = vmatprep.subr.bf16.mxu0 0
        %595 = vmatpush1.bf16.xpose.msra.mxu0 0
        %596 = vmatprep.subr.bf16.mxu0 0
        %597 = vmatpush1.bf16.xpose.msra.mxu0 0
        %598 = vmatprep.subr.bf16.mxu0 0
        %599 = vmatpush1.bf16.xpose.msra.mxu0 0
        %600 = vmatprep.subr.bf16.mxu0 0
        %601 = vmatpush1.bf16.xpose.msra.mxu0 0
        %602 = vmatprep.mubr.bf16.mxu0 0
        %603 = vmatmul.mubr.bf16.gmra.mrb[0].mxu0 %v565
        %v604 = vpop.f32.mrb[0].mxu0
        %v605 = vadd.f32 0.0, %v604
        %v606 = vpop.f32.mrb[0].mxu0
        %v607 = vpop.f32.mrb[0].mxu0
        %v608 = vpop.f32.mrb[0].mxu0
        %609 = vdwg.mxu0
        %v610 = vsel %vm447, %v605, -1e+09
        %v611 = vsel %vm451, %v610, -inf
        %612 = vmax.xlane.f32.xlu0 %v611
        %v613 = vpop.xlane.xlu0 %612
        %v614 = vsub.f32 %v610, %v613
        %v615 = vmul.f32 %v614, 1.442695
        %v616 = vpow.pop %v615
        %v617 = vsel %vm451, %v616, 0.0
        %618 = vadd.xlane.f32.xlu0 %v617
        %v619 = vpop.xlane.xlu0 %618
        %v620 = vpack.c.bf16 %v616, %v616
        %621 = vrot.lane.b32.xlu0 %v442, 56
        %v622 = vpop.permute.xlu0 %621
        %v624 = vsel %vm451, %v620, 0
        %v627 = vsel %vm514, %v622, 0
        %629 = vmatprep.subr.bf16.mxu0 0
        %630 = vmatpush1.bf16.msra.mxu0 %v627
        %631 = vmatprep.subr.bf16.mxu0 0
        %632 = vmatpush1.bf16.msra.mxu0 0
        %633 = vmatprep.subr.bf16.mxu0 0
        %634 = vmatpush1.bf16.msra.mxu0 0
        %635 = vmatprep.subr.bf16.mxu0 0
        %636 = vmatpush1.bf16.msra.mxu0 0
        %637 = vmatprep.subr.bf16.mxu0 0
        %638 = vmatpush1.bf16.msra.mxu0 0
        %639 = vmatprep.subr.bf16.mxu0 0
        %640 = vmatpush1.bf16.msra.mxu0 0
        %641 = vmatprep.subr.bf16.mxu0 0
        %642 = vmatpush1.bf16.msra.mxu0 0
        %643 = vmatprep.subr.bf16.mxu0 0
        %644 = vmatpush1.bf16.msra.mxu0 0
        %645 = vmatprep.subr.bf16.mxu0 0
        %646 = vmatpush1.bf16.msra.mxu0 0
        %647 = vmatprep.subr.bf16.mxu0 0
        %648 = vmatpush1.bf16.msra.mxu0 0
        %649 = vmatprep.subr.bf16.mxu0 0
        %650 = vmatpush1.bf16.msra.mxu0 0
        %651 = vmatprep.subr.bf16.mxu0 0
        %652 = vmatpush1.bf16.msra.mxu0 0
        %653 = vmatprep.subr.bf16.mxu0 0
        %654 = vmatpush1.bf16.msra.mxu0 0
        %655 = vmatprep.subr.bf16.mxu0 0
        %656 = vmatpush1.bf16.msra.mxu0 0
        %657 = vmatprep.subr.bf16.mxu0 0
        %658 = vmatpush1.bf16.msra.mxu0 0
        %659 = vmatprep.subr.bf16.mxu0 0
        %660 = vmatpush1.bf16.msra.mxu0 0
        %661 = vmatprep.mubr.bf16.mxu0 0
        %662 = vmatmul.mubr.bf16.gmra.mrb[0].mxu0 %v624
        %v663 = vpop.f32.mrb[0].mxu0
        %v664 = vadd.f32 0.0, %v663
        %v665 = vpop.f32.mrb[0].mxu0
        %v666 = vpop.f32.mrb[0].mxu0
        %v667 = vpop.f32.mrb[0].mxu0
        %668 = vdwg.mxu0
        %v669 = vrcp.pop %v619
        %v670 = vmul.f32 %v664, %v669
        %671 = vrot.lane.b32.xlu0 %v442, 112
        %v672 = vpop.permute.xlu0 %671
        %673 = vrot.lane.b32.xlu0 %v442, 80
        %v674 = vpop.permute.xlu0 %673
        %v676 = vsel %vm451, %v672, 0
        %v679 = vsel %vm451, %v674, 0
        %681 = vmatprep.subr.bf16.mxu0 0
        %682 = vmatpush1.bf16.xpose.msra.mxu0 %v679
        %683 = vmatprep.subr.bf16.mxu0 0
        %684 = vmatpush1.bf16.xpose.msra.mxu0 0
        %685 = vmatprep.subr.bf16.mxu0 0
        %686 = vmatpush1.bf16.xpose.msra.mxu0 0
        %687 = vmatprep.subr.bf16.mxu0 0
        %688 = vmatpush1.bf16.xpose.msra.mxu0 0
        %689 = vmatprep.subr.bf16.mxu0 0
        %690 = vmatpush1.bf16.xpose.msra.mxu0 0
        %691 = vmatprep.subr.bf16.mxu0 0
        %692 = vmatpush1.bf16.xpose.msra.mxu0 0
        %693 = vmatprep.subr.bf16.mxu0 0
        %694 = vmatpush1.bf16.xpose.msra.mxu0 0
        %695 = vmatprep.subr.bf16.mxu0 0
        %696 = vmatpush1.bf16.xpose.msra.mxu0 0
        %697 = vmatprep.subr.bf16.mxu0 0
        %698 = vmatpush1.bf16.xpose.msra.mxu0 0
        %699 = vmatprep.subr.bf16.mxu0 0
        %700 = vmatpush1.bf16.xpose.msra.mxu0 0
        %701 = vmatprep.subr.bf16.mxu0 0
        %702 = vmatpush1.bf16.xpose.msra.mxu0 0
        %703 = vmatprep.subr.bf16.mxu0 0
        %704 = vmatpush1.bf16.xpose.msra.mxu0 0
        %705 = vmatprep.subr.bf16.mxu0 0
        %706 = vmatpush1.bf16.xpose.msra.mxu0 0
        %707 = vmatprep.subr.bf16.mxu0 0
        %708 = vmatpush1.bf16.xpose.msra.mxu0 0
        %709 = vmatprep.subr.bf16.mxu0 0
        %710 = vmatpush1.bf16.xpose.msra.mxu0 0
        %711 = vmatprep.subr.bf16.mxu0 0
        %712 = vmatpush1.bf16.xpose.msra.mxu0 0
        %713 = vmatprep.mubr.bf16.mxu0 0
        %714 = vmatmul.mubr.bf16.gmra.mrb[0].mxu0 %v676
        %v715 = vpop.f32.mrb[0].mxu0
        %v716 = vadd.f32 0.0, %v715
        %v717 = vpop.f32.mrb[0].mxu0
        %v718 = vpop.f32.mrb[0].mxu0
        %v719 = vpop.f32.mrb[0].mxu0
        %720 = vdwg.mxu0
        %v721 = vsel %vm447, %v716, -1e+09
        %v722 = vsel %vm451, %v721, -inf
        %723 = vmax.xlane.f32.xlu0 %v722
        %v724 = vpop.xlane.xlu0 %723
        %v725 = vsub.f32 %v721, %v724
        %v726 = vmul.f32 %v725, 1.442695
        %v727 = vpow.pop %v726
        %v728 = vsel %vm451, %v727, 0.0
        %729 = vadd.xlane.f32.xlu0 %v728
        %v730 = vpop.xlane.xlu0 %729
        %v731 = vpack.c.bf16 %v727, %v727
        %732 = vrot.lane.b32.xlu0 %v442, 48
        %v733 = vpop.permute.xlu0 %732
        %v735 = vsel %vm451, %v731, 0
        %v738 = vsel %vm514, %v733, 0
        %740 = vmatprep.subr.bf16.mxu0 0
        %741 = vmatpush1.bf16.msra.mxu0 %v738
        %742 = vmatprep.subr.bf16.mxu0 0
        %743 = vmatpush1.bf16.msra.mxu0 0
        %744 = vmatprep.subr.bf16.mxu0 0
        %745 = vmatpush1.bf16.msra.mxu0 0
        %746 = vmatprep.subr.bf16.mxu0 0
        %747 = vmatpush1.bf16.msra.mxu0 0
        %748 = vmatprep.subr.bf16.mxu0 0
        %749 = vmatpush1.bf16.msra.mxu0 0
        %750 = vmatprep.subr.bf16.mxu0 0
        %751 = vmatpush1.bf16.msra.mxu0 0
        %752 = vmatprep.subr.bf16.mxu0 0
        %753 = vmatpush1.bf16.msra.mxu0 0
        %754 = vmatprep.subr.bf16.mxu0 0
        %755 = vmatpush1.bf16.msra.mxu0 0
        %756 = vmatprep.subr.bf16.mxu0 0
        %757 = vmatpush1.bf16.msra.mxu0 0
        %758 = vmatprep.subr.bf16.mxu0 0
        %759 = vmatpush1.bf16.msra.mxu0 0
        %760 = vmatprep.subr.bf16.mxu0 0
        %761 = vmatpush1.bf16.msra.mxu0 0
        %762 = vmatprep.subr.bf16.mxu0 0
        %763 = vmatpush1.bf16.msra.mxu0 0
        %764 = vmatprep.subr.bf16.mxu0 0
        %765 = vmatpush1.bf16.msra.mxu0 0
        %766 = vmatprep.subr.bf16.mxu0 0
        %767 = vmatpush1.bf16.msra.mxu0 0
        %768 = vmatprep.subr.bf16.mxu0 0
        %769 = vmatpush1.bf16.msra.mxu0 0
        %770 = vmatprep.subr.bf16.mxu0 0
        %771 = vmatpush1.bf16.msra.mxu0 0
        %772 = vmatprep.mubr.bf16.mxu0 0
        %773 = vmatmul.mubr.bf16.gmra.mrb[0].mxu0 %v735
        %v774 = vpop.f32.mrb[0].mxu0
        %v775 = vadd.f32 0.0, %v774
        %v776 = vpop.f32.mrb[0].mxu0
        %v777 = vpop.f32.mrb[0].mxu0
        %v778 = vpop.f32.mrb[0].mxu0
        %779 = vdwg.mxu0
        %v780 = vrcp.pop %v730
        %v781 = vmul.f32 %v775, %v780
        %782 = vrot.lane.b32.xlu0 %v442, 104
        %v783 = vpop.permute.xlu0 %782
        %784 = vrot.lane.b32.xlu0 %v442, 72
        %v785 = vpop.permute.xlu0 %784
        %v787 = vsel %vm451, %v783, 0
        %v790 = vsel %vm451, %v785, 0
        %792 = vmatprep.subr.bf16.mxu0 0
        %793 = vmatpush1.bf16.xpose.msra.mxu0 %v790
        %794 = vmatprep.subr.bf16.mxu0 0
        %795 = vmatpush1.bf16.xpose.msra.mxu0 0
        %796 = vmatprep.subr.bf16.mxu0 0
        %797 = vmatpush1.bf16.xpose.msra.mxu0 0
        %798 = vmatprep.subr.bf16.mxu0 0
        %799 = vmatpush1.bf16.xpose.msra.mxu0 0
        %800 = vmatprep.subr.bf16.mxu0 0
        %801 = vmatpush1.bf16.xpose.msra.mxu0 0
        %802 = vmatprep.subr.bf16.mxu0 0
        %803 = vmatpush1.bf16.xpose.msra.mxu0 0
        %804 = vmatprep.subr.bf16.mxu0 0
        %805 = vmatpush1.bf16.xpose.msra.mxu0 0
        %806 = vmatprep.subr.bf16.mxu0 0
        %807 = vmatpush1.bf16.xpose.msra.mxu0 0
        %808 = vmatprep.subr.bf16.mxu0 0
        %809 = vmatpush1.bf16.xpose.msra.mxu0 0
        %810 = vmatprep.subr.bf16.mxu0 0
        %811 = vmatpush1.bf16.xpose.msra.mxu0 0
        %812 = vmatprep.subr.bf16.mxu0 0
        %813 = vmatpush1.bf16.xpose.msra.mxu0 0
        %814 = vmatprep.subr.bf16.mxu0 0
        %815 = vmatpush1.bf16.xpose.msra.mxu0 0
        %816 = vmatprep.subr.bf16.mxu0 0
        %817 = vmatpush1.bf16.xpose.msra.mxu0 0
        %818 = vmatprep.subr.bf16.mxu0 0
        %819 = vmatpush1.bf16.xpose.msra.mxu0 0
        %820 = vmatprep.subr.bf16.mxu0 0
        %821 = vmatpush1.bf16.xpose.msra.mxu0 0
        %822 = vmatprep.subr.bf16.mxu0 0
        %823 = vmatpush1.bf16.xpose.msra.mxu0 0
        %824 = vmatprep.mubr.bf16.mxu0 0
        %825 = vmatmul.mubr.bf16.gmra.mrb[0].mxu0 %v787
        %v826 = vpop.f32.mrb[0].mxu0
        %v827 = vadd.f32 0.0, %v826
        %v828 = vpop.f32.mrb[0].mxu0
        %v829 = vpop.f32.mrb[0].mxu0
        %v830 = vpop.f32.mrb[0].mxu0
        %831 = vdwg.mxu0
        %v832 = vsel %vm447, %v827, -1e+09
        %v833 = vsel %vm451, %v832, -inf
        %834 = vmax.xlane.f32.xlu0 %v833
        %v835 = vpop.xlane.xlu0 %834
        %v836 = vsub.f32 %v832, %v835
        %v837 = vmul.f32 %v836, 1.442695
        %v838 = vpow.pop %v837
        %v839 = vsel %vm451, %v838, 0.0
        %840 = vadd.xlane.f32.xlu0 %v839
        %v841 = vpop.xlane.xlu0 %840
        %v842 = vpack.c.bf16 %v838, %v838
        %843 = vrot.lane.b32.xlu0 %v442, 40
        %v844 = vpop.permute.xlu0 %843
        %v846 = vsel %vm451, %v842, 0
        %v849 = vsel %vm514, %v844, 0
        %851 = vmatprep.subr.bf16.mxu0 0
        %852 = vmatpush1.bf16.msra.mxu0 %v849
        %853 = vmatprep.subr.bf16.mxu0 0
        %854 = vmatpush1.bf16.msra.mxu0 0
        %855 = vmatprep.subr.bf16.mxu0 0
        %856 = vmatpush1.bf16.msra.mxu0 0
        %857 = vmatprep.subr.bf16.mxu0 0
        %858 = vmatpush1.bf16.msra.mxu0 0
        %859 = vmatprep.subr.bf16.mxu0 0
        %860 = vmatpush1.bf16.msra.mxu0 0
        %861 = vmatprep.subr.bf16.mxu0 0
        %862 = vmatpush1.bf16.msra.mxu0 0
        %863 = vmatprep.subr.bf16.mxu0 0
        %864 = vmatpush1.bf16.msra.mxu0 0
        %865 = vmatprep.subr.bf16.mxu0 0
        %866 = vmatpush1.bf16.msra.mxu0 0
        %867 = vmatprep.subr.bf16.mxu0 0
        %868 = vmatpush1.bf16.msra.mxu0 0
        %869 = vmatprep.subr.bf16.mxu0 0
        %870 = vmatpush1.bf16.msra.mxu0 0
        %871 = vmatprep.subr.bf16.mxu0 0
        %872 = vmatpush1.bf16.msra.mxu0 0
        %873 = vmatprep.subr.bf16.mxu0 0
        %874 = vmatpush1.bf16.msra.mxu0 0
        %875 = vmatprep.subr.bf16.mxu0 0
        %876 = vmatpush1.bf16.msra.mxu0 0
        %877 = vmatprep.subr.bf16.mxu0 0
        %878 = vmatpush1.bf16.msra.mxu0 0
        %879 = vmatprep.subr.bf16.mxu0 0
        %880 = vmatpush1.bf16.msra.mxu0 0
        %881 = vmatprep.subr.bf16.mxu0 0
        %882 = vmatpush1.bf16.msra.mxu0 0
        %883 = vmatprep.mubr.bf16.mxu0 0
        %884 = vmatmul.mubr.bf16.gmra.mrb[0].mxu0 %v846
        %v885 = vpop.f32.mrb[0].mxu0
        %v886 = vadd.f32 0.0, %v885
        %v887 = vpop.f32.mrb[0].mxu0
        %v888 = vpop.f32.mrb[0].mxu0
        %v889 = vpop.f32.mrb[0].mxu0
        %890 = vdwg.mxu0
        %v891 = vrcp.pop %v841
        %v892 = vmul.f32 %v886, %v891
        %894 = vrot.lane.b32.xlu0 %v670, 8
        %v895 = vpop.permute.xlu0 %894
        %898 = vrot.lane.b32.xlu0 %v781, 16
        %v899 = vpop.permute.xlu0 %898
        %902 = vrot.lane.b32.xlu0 %v892, 24
        %v903 = vpop.permute.xlu0 %902
        %v905 = vsel %vm451, %v559, %v895
        %vm906 = vcmask 130048
        %v907 = vsel %vm906, %v905, %v899
        %vm908 = vcmask 195584
        %v909 = vsel %vm908, %v907, %v903
        %v910 = vpack.c.bf16 %v909, %v909
        %v911 = vld [vmem:[#allocation8] sm:$0xf]
        %v912 = vld [vmem:[#allocation8 + $0x4] sm:$0xf]
        %v913 = vld [vmem:[#allocation8 + $0x8] sm:$0xf]
        %v914 = vld [vmem:[#allocation8 + $0xc] sm:$0xf]
        %v915 = vld [vmem:[#allocation10] sm:$0x1]
        %v917 = vlaneseq
        %v918 = vshrl.u32 %v917, 7
        %v919 = vsub.s32 0, %v918
        %v920 = vrot.slane %v915, %v919
        %v926 = vunpack.c.l.b16 %v911
        %v927 = vunpack.c.l.b16 %v912
        %v928 = vunpack.c.l.b16 %v913
        %v929 = vunpack.c.l.b16 %v914
        %v930 = vpack.c.b16 %v927, %v926
        %v931 = vpack.c.b16 %v929, %v928
        %v935 = vsel %vm398, %v910, 0
        %937 = vmatprep.subr.bf16.mxu0 0
        %938 = vmatpush1.bf16.msra.mxu0 %v930
        %939 = vmatprep.subr.bf16.mxu0 0
        %940 = vmatpush1.bf16.msra.mxu0 %v931
        %941 = vmatprep.subr.bf16.mxu0 0
        %942 = vmatpush1.bf16.msra.mxu0 0
        %943 = vmatprep.subr.bf16.mxu0 0
        %944 = vmatpush1.bf16.msra.mxu0 0
        %945 = vmatprep.subr.bf16.mxu0 0
        %946 = vmatpush1.bf16.msra.mxu0 0
        %947 = vmatprep.subr.bf16.mxu0 0
        %948 = vmatpush1.bf16.msra.mxu0 0
        %949 = vmatprep.subr.bf16.mxu0 0
        %950 = vmatpush1.bf16.msra.mxu0 0
        %951 = vmatprep.subr.bf16.mxu0 0
        %952 = vmatpush1.bf16.msra.mxu0 0
        %953 = vmatprep.subr.bf16.mxu0 0
        %954 = vmatpush1.bf16.msra.mxu0 0
        %955 = vmatprep.subr.bf16.mxu0 0
        %956 = vmatpush1.bf16.msra.mxu0 0
        %957 = vmatprep.subr.bf16.mxu0 0
        %958 = vmatpush1.bf16.msra.mxu0 0
        %959 = vmatprep.subr.bf16.mxu0 0
        %960 = vmatpush1.bf16.msra.mxu0 0
        %961 = vmatprep.subr.bf16.mxu0 0
        %962 = vmatpush1.bf16.msra.mxu0 0
        %963 = vmatprep.subr.bf16.mxu0 0
        %964 = vmatpush1.bf16.msra.mxu0 0
        %965 = vmatprep.subr.bf16.mxu0 0
        %966 = vmatpush1.bf16.msra.mxu0 0
        %967 = vmatprep.subr.bf16.mxu0 0
        %968 = vmatpush1.bf16.msra.mxu0 0
        %969 = vmatprep.mubr.bf16.mxu0 0
        %970 = vmatmul.mubr.bf16.gmra.mrb[0].mxu0 %v935
        %v971 = vpop.f32.mrb[0].mxu0
        %v972 = vadd.f32 %v920, %v971
        %v973 = vpop.f32.mrb[0].mxu0
        %v974 = vpop.f32.mrb[0].mxu0
        %v975 = vpop.f32.mrb[0].mxu0
        %976 = vdwg.mxu0
        %v977 = vunpack.c.l.bf16 %v374
        %v978 = vadd.f32 %v977, %v972
        %v979 = vsel %vm398, %v978, 0.0
        %980 = vadd.xlane.f32.xlu0 %v979
        %v981 = vpop.xlane.xlu0 %980
        %v982 = vrcp.pop 32.0
        %v983 = vmul.f32 %v981, %v982
        %v984 = vsub.f32 %v978, %v983
        %v985 = vmul.f32 %v984, %v984
        %v986 = vsel %vm398, %v985, 0.0
        %987 = vadd.xlane.f32.xlu0 %v986
        %v988 = vpop.xlane.xlu0 %987
        %v989 = vmul.f32 %v988, %v982
        %v990 = vadd.f32 %v989, 1e-05
        %v991 = vrsqrt.pop %v990
        %v992 = vmul.f32 %v984, %v991
        %v993 = vld [vmem:[#allocation11] sm:$0x1]
        %v995 = vlaneseq
        %v996 = vshrl.u32 %v995, 7
        %v997 = vsub.s32 0, %v996
        %v998 = vrot.slane %v993, %v997
        %v1000 = vmul.f32 %v992, %v998
        %v1001 = vld [vmem:[#allocation13] sm:$0x1]
        %v1003 = vlaneseq
        %v1004 = vshrl.u32 %v1003, 7
        %v1005 = vsub.s32 0, %v1004
        %v1006 = vrot.slane %v1001, %v1005
        %v1008 = vadd.f32 %v1000, %v1006
        %v1009 = vpack.c.bf16 %v1008, %v1008
        %vm1010 = vcmask 257024
        %1011 = vst.msk [vmem:[%s372] sm:$0xf] %vm1010, %v1009
        %s1012 = sand.u32 %s187, 1
        %s1013 = scalar_lea.sflag [#allocation4], %s1012
        %s1014 = sand.u32 %s187, 1
        %s1015 = smul.addr %s1014, 4
        %s1016 = scalar_lea.vmem [#allocation14], %s1015
        // Predicated region
        $region77: #{voice_to_notes_forward.11} parent=47 // pred_check
          %p1017 = pneg %p197
        $region78: #{voice_to_notes_forward.11} parent=47 // pred_check_branch
          %1019 = sbr.rel (%p1017) target = $region80
        $region79: #{voice_to_notes_forward.11} parent=47 // pred_region
          %s1021 = ssub.s32 64, 64
          %1022 = vsyncadd %s1013, %s1021
          %s1023 = smul.addr %s27, 64
          %s1024 = scalar_lea.hbm %s7, %s1023
          %s1026 = sshll.u32 %s1016, 4
          %s1027 = int_to_ptr.vmem [resolvable:$true] %s1026
          %1029 = dma.vmem_to_hbm [thread:$0]  %s1027, 64, %s1024, %s1013
        $region80: #{voice_to_notes_forward.11} parent=47 // pred_fallthru
          _
      $region48: #{voice_to_notes_forward.11} parent=5 // pred_fallthru
        _
      %p1030 = scmp.le.s32.totalorder 2, %s22
      // Predicated region
      $region81: #{voice_to_notes_forward.11} parent=5 // pred_check
        %p1031 = pneg %p1030
      $region82: #{voice_to_notes_forward.11} parent=5 // pred_check_branch
        %1033 = sbr.rel (%p1031) target = $region84
      $region83: #{voice_to_notes_forward.11} parent=5 // pred_region
        %s1034 = ssub.s32 %s22, 2
        // Predicated region
        $region85: #{voice_to_notes_forward.11} parent=83 // pred_check
          %p1035 = pneg %p203
        $region86: #{voice_to_notes_forward.11} parent=83 // pred_check_branch
          %1037 = sbr.rel (%p1035) target = $region88
        $region87: #{voice_to_notes_forward.11} parent=83 // pred_region
          %s1038 = sand.u32 %s188, 1
          %s1039 = scalar_lea.sflag [#allocation4], %s1038
          %s1040 = sand.u32 %s188, 1
          %s1041 = smul.addr %s1040, 4
          %s1042 = scalar_lea.vmem [#allocation14], %s1041
          %1043 = dma.done %s1039, 64
        $region88: #{voice_to_notes_forward.11} parent=83 // pred_fallthru
          _
      $region84: #{voice_to_notes_forward.11} parent=5 // pred_fallthru
        _
    $region6: #{voice_to_notes_forward.11} parent=1 // loop_footer
      %s26 = sadd.s32 1, %s22
    $region7: #{voice_to_notes_forward.11} parent=1 // loop_footer_branch
      %21 = sbr.rel target = $region3
    $region8: #{voice_to_notes_forward.11} parent=1 // loop_exit
      _
    %1044 = vsyncpa [#allocation3], 1
    %s1045 = scalar_lea.sflag [#allocation3], 1
    %1046 = vsyncpa %s1045, 1
    %1047 = vsyncpa [#allocation6], 1
    %1048 = vsyncpa [#allocation9], 1
    %1049 = vsyncpa [#allocation12], 1
    %1050 = vsyncpa [#allocation4], 1
    %s1051 = scalar_lea.sflag [#allocation4], 1
    %1052 = vsyncpa %s1051, 1

// kernel: voice_to_notes_forward.12
$region0: #{voice_to_notes_forward.12}
  #allocation0 [shape = 'u32[]', space=smem, size = 0x4, offset = 0x4, fixed_abs, tag = 'smem constant byte address 0x4 - core index']
  #allocation1 [shape = 'u32[144,128]{1,0:T(1,128)}', space=vmem, size = 0x12000, scoped, tag = 'internal scratch']
  %s0 = inlined_call_operand.hbm [shape: bf16[2,8,32], index: 0, kind: input, shape index: {}]
  %s1 = inlined_call_operand.hbm [shape: bf16[2,8,32], index: 1, kind: input, shape index: {}]
  %s2 = inlined_call_operand.hbm [shape: bf16[32,32], index: 2, kind: input, shape index: {}]
  %s3 = inlined_call_operand.hbm [shape: f32[1,32], index: 3, kind: input, shape index: {}]
  %s4 = inlined_call_operand.hbm [shape: bf16[32,64], index: 4, kind: input, shape index: {}]
  %s5 = inlined_call_operand.hbm [shape: f32[1,64], index: 5, kind: input, shape index: {}]
  %s6 = inlined_call_operand.hbm [shape: bf16[32,32], index: 6, kind: input, shape index: {}]
  %s7 = inlined_call_operand.hbm [shape: f32[1,32], index: 7, kind: input, shape index: {}]
  %s8 = inlined_call_operand.hbm [shape: f32[1,32], index: 8, kind: input, shape index: {}]
  %s9 = inlined_call_operand.hbm [shape: f32[1,32], index: 9, kind: input, shape index: {}]
  %s10 = inlined_call_operand.hbm [shape: bf16[2,8,32], index: 10, kind: output, shape index: {}]
  %s11 = sld [smem:[#allocation0]]
  $region113: #{voice_to_notes_forward.12} parent=0
    _
  %s13 = ssub.s32 1, %s11
  %s14 = scalar_select 0, %s13, %s11
  $region1: #{voice_to_notes_forward.12} parent=0
    #allocation2 [shape = 'u8[4096]{0}', space=vmem, size = 0x1000, scoped, tag = 'input window, operand 0']
    #allocation3 [shape = 's32[2]{0}', space=sflag, size = 0x8, scoped, tag = 'scoped memory for voice_to_notes_forward.12']
    #allocation4 [shape = 's32[2]{0}', space=sflag, size = 0x8, scoped, tag = 'scoped memory for voice_to_notes_forward.12']
    #allocation5 [shape = 'u8[4096]{0}', space=vmem, size = 0x1000, scoped, tag = 'input window, operand 1']
    #allocation6 [shape = 's32[2]{0}', space=sflag, size = 0x8, scoped, tag = 'scoped memory for voice_to_notes_forward.12']
    #allocation7 [shape = 'u8[8192]{0}', space=vmem, size = 0x2000, scoped, tag = 'input window, operand 2, single buffered']
    #allocation8 [shape = 'u8[512]{0}', space=vmem, size = 0x400, scoped, tag = 'input window, operand 3, single buffered']
    #allocation9 [shape = 's32[1]{0}', space=sflag, size = 0x4, scoped, tag = 'scoped memory for voice_to_notes_forward.12']
    #allocation10 [shape = 'u8[8192]{0}', space=vmem, size = 0x2000, scoped, tag = 'input window, operand 4, single buffered']
    #allocation11 [shape = 'u8[512]{0}', space=vmem, size = 0x400, scoped, tag = 'input window, operand 5, single buffered']
    #allocation12 [shape = 's32[1]{0}', space=sflag, size = 0x4, scoped, tag = 'scoped memory for voice_to_notes_forward.12']
    #allocation13 [shape = 'u8[8192]{0}', space=vmem, size = 0x2000, scoped, tag = 'input window, operand 6, single buffered']
    #allocation14 [shape = 'u8[512]{0}', space=vmem, size = 0x400, scoped, tag = 'input window, operand 7, single buffered']
    #allocation15 [shape = 's32[1]{0}', space=sflag, size = 0x4, scoped, tag = 'scoped memory for voice_to_notes_forward.12']
    #allocation16 [shape = 'u8[512]{0}', space=vmem, size = 0x400, scoped, tag = 'input window, operand 8, single buffered']
    #allocation17 [shape = 'u8[512]{0}', space=vmem, size = 0x400, scoped, tag = 'input window, operand 9, single buffered']
    #allocation18 [shape = 's32[1]{0}', space=sflag, size = 0x4, scoped, tag = 'scoped memory for voice_to_notes_forward.12']
    #allocation19 [shape = 'u8[4096]{0}', space=vmem, size = 0x1000, scoped, tag = 'output window, operand 0']
    %15 = vsyncpa [#allocation3], 0
    %s16 = scalar_lea.sflag [#allocation3], 1
    %17 = vsyncpa %s16, 0
    %18 = vsyncpa [#allocation6], 0
    %s19 = scalar_lea.sflag [#allocation6], 1
    %20 = vsyncpa %s19, 0
    %21 = vsyncpa [#allocation9], 0
    %22 = vsyncpa [#allocation12], 0
    %23 = vsyncpa [#allocation15], 0
    %24 = vsyncpa [#allocation18], 0
    %25 = vsyncpa [#allocation4], 0
    %s26 = scalar_lea.sflag [#allocation4], 1
    %27 = vsyncpa %s26, 0
    loop: start=0, step=1, limit=4
    $region2: #{voice_to_notes_forward.12} parent=1 // loop_pre_header
      _
    $region3: #{voice_to_notes_forward.12} parent=1 // loop_header
      %s29 = sphi 0, %s33
      %p30 = scmp.ge.s32.totalorder %s29, 4
      %s39 = sphi 0, %s41
      %s42 = sphi 0, %s39
      %s43 = sphi 0, %s42
      %s59 = sphi 0, %s43
      %s65 = sphi 0, %s67
      %s68 = sphi 0, %s65
      %s69 = sphi 0, %s68
      %s85 = sphi 0, %s69
      %s89 = sphi 0, %s89
      %s91 = sphi 0, %s89
      %s92 = sphi 0, %s91
      %s106 = sphi 0, %s92
      %s110 = sphi 0, %s110
      %s112 = sphi 0, %s110
      %s113 = sphi 0, %s112
      %s127 = sphi 0, %s113
      %s131 = sphi 0, %s131
      %s133 = sphi 0, %s131
      %s134 = sphi 0, %s133
      %s148 = sphi 0, %s134
      %s152 = sphi 0, %s152
      %s154 = sphi 0, %s152
      %s155 = sphi 0, %s154
      %s169 = sphi 0, %s155
      %s173 = sphi 0, %s173
      %s175 = sphi 0, %s173
      %s176 = sphi 0, %s175
      %s190 = sphi 0, %s176
      %s194 = sphi 0, %s194
      %s196 = sphi 0, %s194
      %s197 = sphi 0, %s196
      %s211 = sphi 0, %s197
      %s215 = sphi 0, %s215
      %s217 = sphi 0, %s215
      %s218 = sphi 0, %s217
      %s232 = sphi 0, %s218
      %s236 = sphi 0, %s236
      %s238 = sphi 0, %s236
      %s239 = sphi 0, %s238
      %s253 = sphi 0, %s239
      %s259 = sphi 0, %s261
      %s262 = sphi 0, %s259
      %s263 = sphi 0, %s262
      %s279 = sphi 0, %s263
    $region4: #{voice_to_notes_forward.12} parent=1 // loop_header_branch
      %32 = sbr.rel (%p30) target = $region8
    $region5: #{voice_to_notes_forward.12} parent=1 // loop_body
      %s34 = ssub.s32 %s29, 1
      %s35 = ssub.s32 %s29, 2
      %s36 = sadd.s32 %s29, 1
      %s37 = ssub.s32 %s29, %s36
      %p38 = scmp.eq.s32.totalorder %s37, 0
      %s40 = sadd.s32 %s39, 1
      %s41 = scalar_select %p38, %s39, %s40
      %p44 = pneg %p38
      %p45 = scmp.eq.s32.totalorder %s29, 1
      %p46 = por %p44, %p45
      %p47 = scmp.ne.s32.totalorder %s39, %s42
      %p48 = scmp.eq.s32.totalorder %s29, 0
      %p49 = por %p47, %p48
      %p50 = scmp.ne.s32.totalorder %s39, %s42
      %p51 = scmp.eq.s32.totalorder %s34, 1
      %p52 = por %p50, %p51
      %p53 = scmp.ne.s32.totalorder %s42, %s43
      %p54 = scmp.eq.s32.totalorder %s34, 0
      %p55 = por %p53, %p54
      %p56 = scmp.ne.s32.totalorder %s42, %s43
      %p57 = scmp.eq.s32.totalorder %s35, 1
      %p58 = por %p56, %p57
      %p60 = scmp.ne.s32.totalorder %s43, %s59
      %p61 = scmp.eq.s32.totalorder %s35, 0
      %p62 = por %p60, %p61
      %s63 = ssub.s32 %s29, %s36
      %p64 = scmp.eq.s32.totalorder %s63, 0
      %s66 = sadd.s32 %s65, 1
      %s67 = scalar_select %p64, %s65, %s66
      %p70 = pneg %p64
      %p71 = scmp.eq.s32.totalorder %s29, 1
      %p72 = por %p70, %p71
      %p73 = scmp.ne.s32.totalorder %s65, %s68
      %p74 = scmp.eq.s32.totalorder %s29, 0
      %p75 = por %p73, %p74
      %p76 = scmp.ne.s32.totalorder %s65, %s68
      %p77 = scmp.eq.s32.totalorder %s34, 1
      %p78 = por %p76, %p77
      %p79 = scmp.ne.s32.totalorder %s68, %s69
      %p80 = scmp.eq.s32.totalorder %s34, 0
      %p81 = por %p79, %p80
      %p82 = scmp.ne.s32.totalorder %s68, %s69
      %p83 = scmp.eq.s32.totalorder %s35, 1
      %p84 = por %p82, %p83
      %p86 = scmp.ne.s32.totalorder %s69, %s85
      %p87 = scmp.eq.s32.totalorder %s35, 0
      %p88 = por %p86, %p87
      %s90 = sadd.s32 %s89, 1
      %p93 = scmp.eq.s32.totalorder %s29, 1
      %p94 = scmp.ne.s32.totalorder %s89, %s91
      %p95 = scmp.eq.s32.totalorder %s29, 0
      %p96 = por %p94, %p95
      %p97 = scmp.ne.s32.totalorder %s89, %s91
      %p98 = scmp.eq.s32.totalorder %s34, 1
      %p99 = por %p97, %p98
      %p100 = scmp.ne.s32.totalorder %s91, %s92
      %p101 = scmp.eq.s32.totalorder %s34, 0
      %p102 = por %p100, %p101
      %p103 = scmp.ne.s32.totalorder %s91, %s92
      %p104 = scmp.eq.s32.totalorder %s35, 1
      %p105 = por %p103, %p104
      %p107 = scmp.ne.s32.totalorder %s92, %s106
      %p108 = scmp.eq.s32.totalorder %s35, 0
      %p109 = por %p107, %p108
      %s111 = sadd.s32 %s110, 1
      %p114 = scmp.eq.s32.totalorder %s29, 1
      %p115 = scmp.ne.s32.totalorder %s110, %s112
      %p116 = scmp.eq.s32.totalorder %s29, 0
      %p117 = por %p115, %p116
      %p118 = scmp.ne.s32.totalorder %s110, %s112
      %p119 = scmp.eq.s32.totalorder %s34, 1
      %p120 = por %p118, %p119
      %p121 = scmp.ne.s32.totalorder %s112, %s113
      %p122 = scmp.eq.s32.totalorder %s34, 0
      %p123 = por %p121, %p122
      %p124 = scmp.ne.s32.totalorder %s112, %s113
      %p125 = scmp.eq.s32.totalorder %s35, 1
      %p126 = por %p124, %p125
      %p128 = scmp.ne.s32.totalorder %s113, %s127
      %p129 = scmp.eq.s32.totalorder %s35, 0
      %p130 = por %p128, %p129
      %s132 = sadd.s32 %s131, 1
      %p135 = scmp.eq.s32.totalorder %s29, 1
      %p136 = scmp.ne.s32.totalorder %s131, %s133
      %p137 = scmp.eq.s32.totalorder %s29, 0
      %p138 = por %p136, %p137
      %p139 = scmp.ne.s32.totalorder %s131, %s133
      %p140 = scmp.eq.s32.totalorder %s34, 1
      %p141 = por %p139, %p140
      %p142 = scmp.ne.s32.totalorder %s133, %s134
      %p143 = scmp.eq.s32.totalorder %s34, 0
      %p144 = por %p142, %p143
      %p145 = scmp.ne.s32.totalorder %s133, %s134
      %p146 = scmp.eq.s32.totalorder %s35, 1
      %p147 = por %p145, %p146
      %p149 = scmp.ne.s32.totalorder %s134, %s148
      %p150 = scmp.eq.s32.totalorder %s35, 0
      %p151 = por %p149, %p150
      %s153 = sadd.s32 %s152, 1
      %p156 = scmp.eq.s32.totalorder %s29, 1
      %p157 = scmp.ne.s32.totalorder %s152, %s154
      %p158 = scmp.eq.s32.totalorder %s29, 0
      %p159 = por %p157, %p158
      %p160 = scmp.ne.s32.totalorder %s152, %s154
      %p161 = scmp.eq.s32.totalorder %s34, 1
      %p162 = por %p160, %p161
      %p163 = scmp.ne.s32.totalorder %s154, %s155
      %p164 = scmp.eq.s32.totalorder %s34, 0
      %p165 = por %p163, %p164
      %p166 = scmp.ne.s32.totalorder %s154, %s155
      %p167 = scmp.eq.s32.totalorder %s35, 1
      %p168 = por %p166, %p167
      %p170 = scmp.ne.s32.totalorder %s155, %s169
      %p171 = scmp.eq.s32.totalorder %s35, 0
      %p172 = por %p170, %p171
      %s174 = sadd.s32 %s173, 1
      %p177 = scmp.eq.s32.totalorder %s29, 1
      %p178 = scmp.ne.s32.totalorder %s173, %s175
      %p179 = scmp.eq.s32.totalorder %s29, 0
      %p180 = por %p178, %p179
      %p181 = scmp.ne.s32.totalorder %s173, %s175
      %p182 = scmp.eq.s32.totalorder %s34, 1
      %p183 = por %p181, %p182
      %p184 = scmp.ne.s32.totalorder %s175, %s176
      %p185 = scmp.eq.s32.totalorder %s34, 0
      %p186 = por %p184, %p185
      %p187 = scmp.ne.s32.totalorder %s175, %s176
      %p188 = scmp.eq.s32.totalorder %s35, 1
      %p189 = por %p187, %p188
      %p191 = scmp.ne.s32.totalorder %s176, %s190
      %p192 = scmp.eq.s32.totalorder %s35, 0
      %p193 = por %p191, %p192
      %s195 = sadd.s32 %s194, 1
      %p198 = scmp.eq.s32.totalorder %s29, 1
      %p199 = scmp.ne.s32.totalorder %s194, %s196
      %p200 = scmp.eq.s32.totalorder %s29, 0
      %p201 = por %p199, %p200
      %p202 = scmp.ne.s32.totalorder %s194, %s196
      %p203 = scmp.eq.s32.totalorder %s34, 1
      %p204 = por %p202, %p203
      %p205 = scmp.ne.s32.totalorder %s196, %s197
      %p206 = scmp.eq.s32.totalorder %s34, 0
      %p207 = por %p205, %p206
      %p208 = scmp.ne.s32.totalorder %s196, %s197
      %p209 = scmp.eq.s32.totalorder %s35, 1
      %p210 = por %p208, %p209
      %p212 = scmp.ne.s32.totalorder %s197, %s211
      %p213 = scmp.eq.s32.totalorder %s35, 0
      %p214 = por %p212, %p213
      %s216 = sadd.s32 %s215, 1
      %p219 = scmp.eq.s32.totalorder %s29, 1
      %p220 = scmp.ne.s32.totalorder %s215, %s217
      %p221 = scmp.eq.s32.totalorder %s29, 0
      %p222 = por %p220, %p221
      %p223 = scmp.ne.s32.totalorder %s215, %s217
      %p224 = scmp.eq.s32.totalorder %s34, 1
      %p225 = por %p223, %p224
      %p226 = scmp.ne.s32.totalorder %s217, %s218
      %p227 = scmp.eq.s32.totalorder %s34, 0
      %p228 = por %p226, %p227
      %p229 = scmp.ne.s32.totalorder %s217, %s218
      %p230 = scmp.eq.s32.totalorder %s35, 1
      %p231 = por %p229, %p230
      %p233 = scmp.ne.s32.totalorder %s218, %s232
      %p234 = scmp.eq.s32.totalorder %s35, 0
      %p235 = por %p233, %p234
      %s237 = sadd.s32 %s236, 1
      %p240 = scmp.eq.s32.totalorder %s29, 1
      %p241 = scmp.ne.s32.totalorder %s236, %s238
      %p242 = scmp.eq.s32.totalorder %s29, 0
      %p243 = por %p241, %p242
      %p244 = scmp.ne.s32.totalorder %s236, %s238
      %p245 = scmp.eq.s32.totalorder %s34, 1
      %p246 = por %p244, %p245
      %p247 = scmp.ne.s32.totalorder %s238, %s239
      %p248 = scmp.eq.s32.totalorder %s34, 0
      %p249 = por %p247, %p248
      %p250 = scmp.ne.s32.totalorder %s238, %s239
      %p251 = scmp.eq.s32.totalorder %s35, 1
      %p252 = por %p250, %p251
      %p254 = scmp.ne.s32.totalorder %s239, %s253
      %p255 = scmp.eq.s32.totalorder %s35, 0
      %p256 = por %p254, %p255
      %s257 = ssub.s32 %s29, %s36
      %p258 = scmp.eq.s32.totalorder %s257, 0
      %s260 = sadd.s32 %s259, 1
      %s261 = scalar_select %p258, %s259, %s260
      %p264 = pneg %p258
      %p265 = scmp.eq.s32.totalorder %s29, 1
      %p266 = por %p264, %p265
      %p267 = scmp.ne.s32.totalorder %s259, %s262
      %p268 = scmp.eq.s32.totalorder %s29, 0
      %p269 = por %p267, %p268
      %p270 = scmp.ne.s32.totalorder %s259, %s262
      %p271 = scmp.eq.s32.totalorder %s34, 1
      %p272 = por %p270, %p271
      %p273 = scmp.ne.s32.totalorder %s262, %s263
      %p274 = scmp.eq.s32.totalorder %s34, 0
      %p275 = por %p273, %p274
      %p276 = scmp.ne.s32.totalorder %s262, %s263
      %p277 = scmp.eq.s32.totalorder %s35, 1
      %p278 = por %p276, %p277
      %p280 = scmp.ne.s32.totalorder %s263, %s279
      %p281 = scmp.eq.s32.totalorder %s35, 0
      %p282 = por %p280, %p281
      %p283 = scmp.le.s32.totalorder 1, %s29
      %p284 = scmp.lt.s32.totalorder %s29, 3
      %p285 = pnand %p283, %p284
      %p286 = pneg %p285
      // Predicated region
      $region9: #{voice_to_notes_forward.12} parent=5 // pred_check
        _
      $region10: #{voice_to_notes_forward.12} parent=5 // pred_check_branch
        %288 = sbr.rel (%p285) target = $region12
      $region11: #{voice_to_notes_forward.12} parent=5 // pred_region
        %s289 = ssub.s32 %s29, 1
        // Predicated region
        $region13: #{voice_to_notes_forward.12} parent=11 // pred_check
          %p290 = pneg %p102
        $region14: #{voice_to_notes_forward.12} parent=11 // pred_check_branch
          %292 = sbr.rel (%p290) target = $region16
        $region15: #{voice_to_notes_forward.12} parent=11 // pred_region
          %s294 = ssub.s32 256, 256
          %295 = vsyncadd [#allocation6], %s294
          %s296 = sshll.u32 [#allocation7], 4
          %s297 = int_to_ptr.vmem [resolvable:$true] %s296
          %302 = dma.hbm_to_vmem [thread:$0]  %s2, 256, %s297, [#allocation6], 64, 64, 4
        $region16: #{voice_to_notes_forward.12} parent=11 // pred_fallthru
          _
        // Predicated region
        $region17: #{voice_to_notes_forward.12} parent=11 // pred_check
          %p303 = pneg %p123
        $region18: #{voice_to_notes_forward.12} parent=11 // pred_check_branch
          %305 = sbr.rel (%p303) target = $region20
        $region19: #{voice_to_notes_forward.12} parent=11 // pred_region
          %s307 = ssub.s32 16, 16
          %308 = vsyncadd [#allocation9], %s307
          %s310 = sshll.u32 [#allocation8], 4
          %s311 = int_to_ptr.vmem [resolvable:$true] %s310
          %313 = dma.hbm_to_vmem [thread:$0]  %s3, 16, %s311, [#allocation9]
        $region20: #{voice_to_notes_forward.12} parent=11 // pred_fallthru
          _
        // Predicated region
        $region21: #{voice_to_notes_forward.12} parent=11 // pred_check
          %p314 = pneg %p144
        $region22: #{voice_to_notes_forward.12} parent=11 // pred_check_branch
          %316 = sbr.rel (%p314) target = $region24
        $region23: #{voice_to_notes_forward.12} parent=11 // pred_region
          %s318 = ssub.s32 256, 256
          %319 = vsyncadd [#allocation9], %s318
          %s320 = sshll.u32 [#allocation10], 4
          %s321 = int_to_ptr.vmem [resolvable:$true] %s320
          %326 = dma.hbm_to_vmem [thread:$0]  %s4, 256, %s321, [#allocation9], 64, 64, 4
        $region24: #{voice_to_notes_forward.12} parent=11 // pred_fallthru
          _
        // Predicated region
        $region25: #{voice_to_notes_forward.12} parent=11 // pred_check
          %p327 = pneg %p165
        $region26: #{voice_to_notes_forward.12} parent=11 // pred_check_branch
          %329 = sbr.rel (%p327) target = $region28
        $region27: #{voice_to_notes_forward.12} parent=11 // pred_region
          %s331 = ssub.s32 16, 16
          %332 = vsyncadd [#allocation12], %s331
          %s334 = sshll.u32 [#allocation11], 4
          %s335 = int_to_ptr.vmem [resolvable:$true] %s334
          %337 = dma.hbm_to_vmem [thread:$0]  %s5, 16, %s335, [#allocation12]
        $region28: #{voice_to_notes_forward.12} parent=11 // pred_fallthru
          _
        // Predicated region
        $region29: #{voice_to_notes_forward.12} parent=11 // pred_check
          %p338 = pneg %p186
        $region30: #{voice_to_notes_forward.12} parent=11 // pred_check_branch
          %340 = sbr.rel (%p338) target = $region32
        $region31: #{voice_to_notes_forward.12} parent=11 // pred_region
          %s342 = ssub.s32 256, 256
          %343 = vsyncadd [#allocation12], %s342
          %s344 = sshll.u32 [#allocation13], 4
          %s345 = int_to_ptr.vmem [resolvable:$true] %s344
          %350 = dma.hbm_to_vmem [thread:$0]  %s6, 256, %s345, [#allocation12], 64, 64, 4
        $region32: #{voice_to_notes_forward.12} parent=11 // pred_fallthru
          _
        // Predicated region
        $region33: #{voice_to_notes_forward.12} parent=11 // pred_check
          %p351 = pneg %p207
        $region34: #{voice_to_notes_forward.12} parent=11 // pred_check_branch
          %353 = sbr.rel (%p351) target = $region36
        $region35: #{voice_to_notes_forward.12} parent=11 // pred_region
          %s355 = ssub.s32 16, 16
          %356 = vsyncadd [#allocation15], %s355
          %s358 = sshll.u32 [#allocation14], 4
          %s359 = int_to_ptr.vmem [resolvable:$true] %s358
          %361 = dma.hbm_to_vmem [thread:$0]  %s7, 16, %s359, [#allocation15]
        $region36: #{voice_to_notes_forward.12} parent=11 // pred_fallthru
          _
        // Predicated region
        $region37: #{voice_to_notes_forward.12} parent=11 // pred_check
          %p362 = pneg %p228
        $region38: #{voice_to_notes_forward.12} parent=11 // pred_check_branch
          %364 = sbr.rel (%p362) target = $region40
        $region39: #{voice_to_notes_forward.12} parent=11 // pred_region
          %s366 = ssub.s32 16, 16
          %367 = vsyncadd [#allocation15], %s366
          %s369 = sshll.u32 [#allocation16], 4
          %s370 = int_to_ptr.vmem [resolvable:$true] %s369
          %372 = dma.hbm_to_vmem [thread:$0]  %s8, 16, %s370, [#allocation15]
        $region40: #{voice_to_notes_forward.12} parent=11 // pred_fallthru
          _
        // Predicated region
        $region41: #{voice_to_notes_forward.12} parent=11 // pred_check
          %p373 = pneg %p249
        $region42: #{voice_to_notes_forward.12} parent=11 // pred_check_branch
          %375 = sbr.rel (%p373) target = $region44
        $region43: #{voice_to_notes_forward.12} parent=11 // pred_region
          %s377 = ssub.s32 16, 16
          %378 = vsyncadd [#allocation18], %s377
          %s380 = sshll.u32 [#allocation17], 4
          %s381 = int_to_ptr.vmem [resolvable:$true] %s380
          %383 = dma.hbm_to_vmem [thread:$0]  %s9, 16, %s381, [#allocation18]
        $region44: #{voice_to_notes_forward.12} parent=11 // pred_fallthru
          _
      $region12: #{voice_to_notes_forward.12} parent=5 // pred_fallthru
        _
      %p384 = scmp.lt.s32.totalorder %s29, 2
      // Predicated region
      $region45: #{voice_to_notes_forward.12} parent=5 // pred_check
        %p385 = pneg %p384
      $region46: #{voice_to_notes_forward.12} parent=5 // pred_check_branch
        %387 = sbr.rel (%p385) target = $region48
      $region47: #{voice_to_notes_forward.12} parent=5 // pred_region
        // Predicated region
        $region49: #{voice_to_notes_forward.12} parent=47 // pred_check
          %p388 = pneg %p49
        $region50: #{voice_to_notes_forward.12} parent=47 // pred_check_branch
          %390 = sbr.rel (%p388) target = $region52
        $region51: #{voice_to_notes_forward.12} parent=47 // pred_region
          %s391 = sand.u32 %s39, 1
          %s392 = scalar_lea.sflag [#allocation3], %s391
          %s393 = sand.u32 %s39, 1
          %s394 = smul.addr %s393, 4
          %s395 = scalar_lea.vmem [#allocation2], %s394
          %s397 = ssub.s32 64, 64
          %398 = vsyncadd %s392, %s397
          %s399 = smul.addr %s29, 64
          %s400 = scalar_lea.hbm %s0, %s399
          %s402 = sshll.u32 %s395, 4
          %s403 = int_to_ptr.vmem [resolvable:$true] %s402
          %405 = dma.hbm_to_vmem [thread:$0]  %s400, 64, %s403, %s392
        $region52: #{voice_to_notes_forward.12} parent=47 // pred_fallthru
          _
        // Predicated region
        $region53: #{voice_to_notes_forward.12} parent=47 // pred_check
          %p406 = pneg %p75
        $region54: #{voice_to_notes_forward.12} parent=47 // pred_check_branch
          %408 = sbr.rel (%p406) target = $region56
        $region55: #{voice_to_notes_forward.12} parent=47 // pred_region
          %s409 = sand.u32 %s29, 1
          %s410 = scalar_lea.sflag [#allocation6], %s409
          %s411 = sand.u32 %s65, 1
          %s412 = smul.addr %s411, 4
          %s413 = scalar_lea.vmem [#allocation5], %s412
          %s415 = ssub.s32 64, 64
          %416 = vsyncadd %s410, %s415
          %s417 = smul.addr %s29, 64
          %s418 = scalar_lea.hbm %s1, %s417
          %s420 = sshll.u32 %s413, 4
          %s421 = int_to_ptr.vmem [resolvable:$true] %s420
          %423 = dma.hbm_to_vmem [thread:$0]  %s418, 64, %s421, %s410
        $region56: #{voice_to_notes_forward.12} parent=47 // pred_fallthru
          _
      $region48: #{voice_to_notes_forward.12} parent=5 // pred_fallthru
        _
      %p424 = scmp.le.s32.totalorder 1, %s29
      %p425 = scmp.lt.s32.totalorder %s29, 3
      %p426 = pnand %p424, %p425
      %p427 = pneg %p426
      // Predicated region
      $region57: #{voice_to_notes_forward.12} parent=5 // pred_check
        _
      $region58: #{voice_to_notes_forward.12} parent=5 // pred_check_branch
        %429 = sbr.rel (%p426) target = $region60
      $region59: #{voice_to_notes_forward.12} parent=5 // pred_region
        %s430 = ssub.s32 %s29, 1
        %s431 = sand.u32 %s42, 1
        %s432 = scalar_lea.sflag [#allocation3], %s431
        %s433 = sand.u32 %s42, 1
        %s434 = smul.addr %s433, 4
        %s435 = scalar_lea.vmem [#allocation2], %s434
        // Predicated region
        $region61: #{voice_to_notes_forward.12} parent=59 // pred_check
          %p436 = pneg %p55
        $region62: #{voice_to_notes_forward.12} parent=59 // pred_check_branch
          %438 = sbr.rel (%p436) target = $region64
        $region63: #{voice_to_notes_forward.12} parent=59 // pred_region
          %439 = dma.done %s432, 64
        $region64: #{voice_to_notes_forward.12} parent=59 // pred_fallthru
          _
        %s440 = sand.u32 %s34, 1
        %s441 = scalar_lea.sflag [#allocation6], %s440
        %s442 = sand.u32 %s68, 1
        %s443 = smul.addr %s442, 4
        %s444 = scalar_lea.vmem [#allocation5], %s443
        // Predicated region
        $region65: #{voice_to_notes_forward.12} parent=59 // pred_check
          %p445 = pneg %p81
        $region66: #{voice_to_notes_forward.12} parent=59 // pred_check_branch
          %447 = sbr.rel (%p445) target = $region68
        $region67: #{voice_to_notes_forward.12} parent=59 // pred_region
          %448 = dma.done %s441, 64
        $region68: #{voice_to_notes_forward.12} parent=59 // pred_fallthru
          _
        // Predicated region
        $region69: #{voice_to_notes_forward.12} parent=59 // pred_check
          %p449 = pneg %p102
        $region70: #{voice_to_notes_forward.12} parent=59 // pred_check_branch
          %451 = sbr.rel (%p449) target = $region72
        $region71: #{voice_to_notes_forward.12} parent=59 // pred_region
          %452 = dma.done [#allocation6], 256
        $region72: #{voice_to_notes_forward.12} parent=59 // pred_fallthru
          _
        // Predicated region
        $region73: #{voice_to_notes_forward.12} parent=59 // pred_check
          %p453 = pneg %p123
        $region74: #{voice_to_notes_forward.12} parent=59 // pred_check_branch
          %455 = sbr.rel (%p453) target = $region76
        $region75: #{voice_to_notes_forward.12} parent=59 // pred_region
          %456 = dma.done [#allocation9], 16
        $region76: #{voice_to_notes_forward.12} parent=59 // pred_fallthru
          _
        // Predicated region
        $region77: #{voice_to_notes_forward.12} parent=59 // pred_check
          %p457 = pneg %p144
        $region78: #{voice_to_notes_forward.12} parent=59 // pred_check_branch
          %459 = sbr.rel (%p457) target = $region80
        $region79: #{voice_to_notes_forward.12} parent=59 // pred_region
          %460 = dma.done [#allocation9], 256
        $region80: #{voice_to_notes_forward.12} parent=59 // pred_fallthru
          _
        // Predicated region
        $region81: #{voice_to_notes_forward.12} parent=59 // pred_check
          %p461 = pneg %p165
        $region82: #{voice_to_notes_forward.12} parent=59 // pred_check_branch
          %463 = sbr.rel (%p461) target = $region84
        $region83: #{voice_to_notes_forward.12} parent=59 // pred_region
          %464 = dma.done [#allocation12], 16
        $region84: #{voice_to_notes_forward.12} parent=59 // pred_fallthru
          _
        // Predicated region
        $region85: #{voice_to_notes_forward.12} parent=59 // pred_check
          %p465 = pneg %p186
        $region86: #{voice_to_notes_forward.12} parent=59 // pred_check_branch
          %467 = sbr.rel (%p465) target = $region88
        $region87: #{voice_to_notes_forward.12} parent=59 // pred_region
          %468 = dma.done [#allocation12], 256
        $region88: #{voice_to_notes_forward.12} parent=59 // pred_fallthru
          _
        // Predicated region
        $region89: #{voice_to_notes_forward.12} parent=59 // pred_check
          %p469 = pneg %p207
        $region90: #{voice_to_notes_forward.12} parent=59 // pred_check_branch
          %471 = sbr.rel (%p469) target = $region92
        $region91: #{voice_to_notes_forward.12} parent=59 // pred_region
          %472 = dma.done [#allocation15], 16
        $region92: #{voice_to_notes_forward.12} parent=59 // pred_fallthru
          _
        // Predicated region
        $region93: #{voice_to_notes_forward.12} parent=59 // pred_check
          %p473 = pneg %p228
        $region94: #{voice_to_notes_forward.12} parent=59 // pred_check_branch
          %475 = sbr.rel (%p473) target = $region96
        $region95: #{voice_to_notes_forward.12} parent=59 // pred_region
          %476 = dma.done [#allocation15], 16
        $region96: #{voice_to_notes_forward.12} parent=59 // pred_fallthru
          _
        // Predicated region
        $region97: #{voice_to_notes_forward.12} parent=59 // pred_check
          %p477 = pneg %p249
        $region98: #{voice_to_notes_forward.12} parent=59 // pred_check_branch
          %479 = sbr.rel (%p477) target = $region100
        $region99: #{voice_to_notes_forward.12} parent=59 // pred_region
          %480 = dma.done [#allocation18], 16
        $region100: #{voice_to_notes_forward.12} parent=59 // pred_fallthru
          _
        %s481 = sand.u32 %s42, 1
        %s482 = scalar_lea.sflag [#allocation3], %s481
        %s483 = sand.u32 %s42, 1
        %s484 = smul.addr %s483, 4
        %s485 = scalar_lea.vmem [#allocation2], %s484
        %p486 = pneg %p55
        %p487 = pneg %p52
        %s488 = sand.u32 %s34, 1
        %s489 = scalar_lea.sflag [#allocation6], %s488
        %s490 = sand.u32 %s68, 1
        %s491 = smul.addr %s490, 4
        %s492 = scalar_lea.vmem [#allocation5], %s491
        %p493 = pneg %p81
        %p494 = pneg %p78
        %p495 = pneg %p102
        %p496 = pneg %p99
        %p497 = pneg %p123
        %p498 = pneg %p120
        %p499 = pneg %p144
        %p500 = pneg %p141
        %p501 = pneg %p165
        %p502 = pneg %p162
        %p503 = pneg %p186
        %p504 = pneg %p183
        %p505 = pneg %p207
        %p506 = pneg %p204
        %p507 = pneg %p228
        %p508 = pneg %p225
        %p509 = pneg %p249
        %p510 = pneg %p246
        %p511 = pneg %p275
        %p512 = pneg %p272
        %s513 = sand.u32 %s262, 1
        %s514 = scalar_lea.sflag [#allocation4], %s513
        %s515 = sand.u32 %s262, 1
        %s516 = smul.addr %s515, 4
        %s517 = scalar_lea.vmem [#allocation19], %s516
        %v519 = vld [vmem:[%s435] sm:$0xf]
        %v520 = vld [vmem:[%s444] sm:$0xf]
        %v521 = vld [vmem:[#allocation7] sm:$0xf]
        %v522 = vld [vmem:[#allocation7 + $0x4] sm:$0xf]
        %v523 = vld [vmem:[#allocation7 + $0x8] sm:$0xf]
        %v524 = vld [vmem:[#allocation7 + $0xc] sm:$0xf]
        %v525 = vld [vmem:[#allocation8] sm:$0x1]
        %v527 = vlaneseq
        %v528 = vshrl.u32 %v527, 7
        %v529 = vsub.s32 0, %v528
        %v530 = vrot.slane %v525, %v529
        %v536 = vunpack.c.l.b16 %v521
        %v537 = vunpack.c.l.b16 %v522
        %v538 = vunpack.c.l.b16 %v523
        %v539 = vunpack.c.l.b16 %v524
        %v540 = vpack.c.b16 %v537, %v536
        %v541 = vpack.c.b16 %v539, %v538
        %vm544 = vcmask 261120
        %v546 = vsel %vm544, %v519, 0
        %548 = vmatprep.subr.bf16.mxu0 0
        %549 = vmatpush1.bf16.msra.mxu0 %v540
        %550 = vmatprep.subr.bf16.mxu0 0
        %551 = vmatpush1.bf16.msra.mxu0 %v541
        %552 = vmatprep.subr.bf16.mxu0 0
        %553 = vmatpush1.bf16.msra.mxu0 0
        %554 = vmatprep.subr.bf16.mxu0 0
        %555 = vmatpush1.bf16.msra.mxu0 0
        %556 = vmatprep.subr.bf16.mxu0 0
        %557 = vmatpush1.bf16.msra.mxu0 0
        %558 = vmatprep.subr.bf16.mxu0 0
        %559 = vmatpush1.bf16.msra.mxu0 0
        %560 = vmatprep.subr.bf16.mxu0 0
        %561 = vmatpush1.bf16.msra.mxu0 0
        %562 = vmatprep.subr.bf16.mxu0 0
        %563 = vmatpush1.bf16.msra.mxu0 0
        %564 = vmatprep.subr.bf16.mxu0 0
        %565 = vmatpush1.bf16.msra.mxu0 0
        %566 = vmatprep.subr.bf16.mxu0 0
        %567 = vmatpush1.bf16.msra.mxu0 0
        %568 = vmatprep.subr.bf16.mxu0 0
        %569 = vmatpush1.bf16.msra.mxu0 0
        %570 = vmatprep.subr.bf16.mxu0 0
        %571 = vmatpush1.bf16.msra.mxu0 0
        %572 = vmatprep.subr.bf16.mxu0 0
        %573 = vmatpush1.bf16.msra.mxu0 0
        %574 = vmatprep.subr.bf16.mxu0 0
        %575 = vmatpush1.bf16.msra.mxu0 0
        %576 = vmatprep.subr.bf16.mxu0 0
        %577 = vmatpush1.bf16.msra.mxu0 0
        %578 = vmatprep.subr.bf16.mxu0 0
        %579 = vmatpush1.bf16.msra.mxu0 0
        %580 = vmatprep.mubr.bf16.mxu0 0
        %581 = vmatmul.mubr.bf16.gmra.mrb[0].mxu0 %v546
        %v582 = vpop.f32.mrb[0].mxu0
        %v583 = vadd.f32 %v530, %v582
        %v584 = vpop.f32.mrb[0].mxu0
        %v585 = vpop.f32.mrb[0].mxu0
        %v586 = vpop.f32.mrb[0].mxu0
        %587 = vdwg.mxu0
        %v588 = vpack.c.bf16 %v583, %v583
        %v589 = vld [vmem:[#allocation10] sm:$0xf]
        %v590 = vld [vmem:[#allocation10 + $0x4] sm:$0xf]
        %v591 = vld [vmem:[#allocation10 + $0x8] sm:$0xf]
        %v592 = vld [vmem:[#allocation10 + $0xc] sm:$0xf]
        %v593 = vld [vmem:[#allocation11] sm:$0x1]
        %v595 = vlaneseq
        %v596 = vshrl.u32 %v595, 7
        %v597 = vsub.s32 0, %v596
        %v598 = vrot.slane %v593, %v597
        %v604 = vunpack.c.l.b16 %v589
        %v605 = vunpack.c.l.b16 %v590
        %v606 = vunpack.c.l.b16 %v591
        %v607 = vunpack.c.l.b16 %v592
        %v608 = vpack.c.b16 %v605, %v604
        %v609 = vpack.c.b16 %v607, %v606
        %v613 = vsel %vm544, %v520, 0
        %615 = vmatprep.subr.bf16.mxu0 0
        %616 = vmatpush1.bf16.msra.mxu0 %v608
        %617 = vmatprep.subr.bf16.mxu0 0
        %618 = vmatpush1.bf16.msra.mxu0 %v609
        %619 = vmatprep.subr.bf16.mxu0 0
        %620 = vmatpush1.bf16.msra.mxu0 0
        %621 = vmatprep.subr.bf16.mxu0 0
        %622 = vmatpush1.bf16.msra.mxu0 0
        %623 = vmatprep.subr.bf16.mxu0 0
        %624 = vmatpush1.bf16.msra.mxu0 0
        %625 = vmatprep.subr.bf16.mxu0 0
        %626 = vmatpush1.bf16.msra.mxu0 0
        %627 = vmatprep.subr.bf16.mxu0 0
        %628 = vmatpush1.bf16.msra.mxu0 0
        %629 = vmatprep.subr.bf16.mxu0 0
        %630 = vmatpush1.bf16.msra.mxu0 0
        %631 = vmatprep.subr.bf16.mxu0 0
        %632 = vmatpush1.bf16.msra.mxu0 0
        %633 = vmatprep.subr.bf16.mxu0 0
        %634 = vmatpush1.bf16.msra.mxu0 0
        %635 = vmatprep.subr.bf16.mxu0 0
        %636 = vmatpush1.bf16.msra.mxu0 0
        %637 = vmatprep.subr.bf16.mxu0 0
        %638 = vmatpush1.bf16.msra.mxu0 0
        %639 = vmatprep.subr.bf16.mxu0 0
        %640 = vmatpush1.bf16.msra.mxu0 0
        %641 = vmatprep.subr.bf16.mxu0 0
        %642 = vmatpush1.bf16.msra.mxu0 0
        %643 = vmatprep.subr.bf16.mxu0 0
        %644 = vmatpush1.bf16.msra.mxu0 0
        %645 = vmatprep.subr.bf16.mxu0 0
        %646 = vmatpush1.bf16.msra.mxu0 0
        %647 = vmatprep.mubr.bf16.mxu0 0
        %648 = vmatmul.mubr.bf16.gmra.mrb[0].mxu0 %v613
        %v649 = vpop.f32.mrb[0].mxu0
        %v650 = vadd.f32 %v598, %v649
        %v651 = vpop.f32.mrb[0].mxu0
        %v652 = vpop.f32.mrb[0].mxu0
        %v653 = vpop.f32.mrb[0].mxu0
        %654 = vdwg.mxu0
        %v655 = vpack.c.bf16 %v650, %v650
        %vm656 = vcmask 64512
        %v658 = vsel %vm656, %v588, 0
        %v661 = vsel %vm656, %v655, 0
        %663 = vmatprep.subr.bf16.mxu0 0
        %664 = vmatpush1.bf16.xpose.msra.mxu0 %v661
        %665 = vmatprep.subr.bf16.mxu0 0
        %666 = vmatpush1.bf16.xpose.msra.mxu0 0
        %667 = vmatprep.subr.bf16.mxu0 0
        %668 = vmatpush1.bf16.xpose.msra.mxu0 0
        %669 = vmatprep.subr.bf16.mxu0 0
        %670 = vmatpush1.bf16.xpose.msra.mxu0 0
        %671 = vmatprep.subr.bf16.mxu0 0
        %672 = vmatpush1.bf16.xpose.msra.mxu0 0
        %673 = vmatprep.subr.bf16.mxu0 0
        %674 = vmatpush1.bf16.xpose.msra.mxu0 0
        %675 = vmatprep.subr.bf16.mxu0 0
        %676 = vmatpush1.bf16.xpose.msra.mxu0 0
        %677 = vmatprep.subr.bf16.mxu0 0
        %678 = vmatpush1.bf16.xpose.msra.mxu0 0
        %679 = vmatprep.subr.bf16.mxu0 0
        %680 = vmatpush1.bf16.xpose.msra.mxu0 0
        %681 = vmatprep.subr.bf16.mxu0 0
        %682 = vmatpush1.bf16.xpose.msra.mxu0 0
        %683 = vmatprep.subr.bf16.mxu0 0
        %684 = vmatpush1.bf16.xpose.msra.mxu0 0
        %685 = vmatprep.subr.bf16.mxu0 0
        %686 = vmatpush1.bf16.xpose.msra.mxu0 0
        %687 = vmatprep.subr.bf16.mxu0 0
        %688 = vmatpush1.bf16.xpose.msra.mxu0 0
        %689 = vmatprep.subr.bf16.mxu0 0
        %690 = vmatpush1.bf16.xpose.msra.mxu0 0
        %691 = vmatprep.subr.bf16.mxu0 0
        %692 = vmatpush1.bf16.xpose.msra.mxu0 0
        %693 = vmatprep.subr.bf16.mxu0 0
        %694 = vmatpush1.bf16.xpose.msra.mxu0 0
        %695 = vmatprep.mubr.bf16.mxu0 0
        %696 = vmatmul.mubr.bf16.gmra.mrb[0].mxu0 %v658
        %v697 = vpop.f32.mrb[0].mxu0
        %v698 = vadd.f32 0.0, %v697
        %v699 = vpop.f32.mrb[0].mxu0
        %v700 = vpop.f32.mrb[0].mxu0
        %v701 = vpop.f32.mrb[0].mxu0
        %702 = vdwg.mxu0
        %v703 = vsel %vm656, %v698, -inf
        %704 = vmax.xlane.f32.xlu0 %v703
        %v705 = vpop.xlane.xlu0 %704
        %v706 = vsub.f32 %v698, %v705
        %v707 = vmul.f32 %v706, 1.442695
        %v708 = vpow.pop %v707
        %v709 = vsel %vm656, %v708, 0.0
        %710 = vadd.xlane.f32.xlu0 %v709
        %v711 = vpop.xlane.xlu0 %710
        %v712 = vpack.c.bf16 %v708, %v708
        %714 = vrot.lane.b32.xlu0 %v655, 96
        %v715 = vpop.permute.xlu0 %714
        %v717 = vsel %vm656, %v712, 0
        %vm719 = vcmask 1043456
        %v721 = vsel %vm719, %v715, 0
        %723 = vmatprep.subr.bf16.mxu0 0
        %724 = vmatpush1.bf16.msra.mxu0 %v721
        %725 = vmatprep.subr.bf16.mxu0 0
        %726 = vmatpush1.bf16.msra.mxu0 0
        %727 = vmatprep.subr.bf16.mxu0 0
        %728 = vmatpush1.bf16.msra.mxu0 0
        %729 = vmatprep.subr.bf16.mxu0 0
        %730 = vmatpush1.bf16.msra.mxu0 0
        %731 = vmatprep.subr.bf16.mxu0 0
        %732 = vmatpush1.bf16.msra.mxu0 0
        %733 = vmatprep.subr.bf16.mxu0 0
        %734 = vmatpush1.bf16.msra.mxu0 0
        %735 = vmatprep.subr.bf16.mxu0 0
        %736 = vmatpush1.bf16.msra.mxu0 0
        %737 = vmatprep.subr.bf16.mxu0 0
        %738 = vmatpush1.bf16.msra.mxu0 0
        %739 = vmatprep.subr.bf16.mxu0 0
        %740 = vmatpush1.bf16.msra.mxu0 0
        %741 = vmatprep.subr.bf16.mxu0 0
        %742 = vmatpush1.bf16.msra.mxu0 0
        %743 = vmatprep.subr.bf16.mxu0 0
        %744 = vmatpush1.bf16.msra.mxu0 0
        %745 = vmatprep.subr.bf16.mxu0 0
        %746 = vmatpush1.bf16.msra.mxu0 0
        %747 = vmatprep.subr.bf16.mxu0 0
        %748 = vmatpush1.bf16.msra.mxu0 0
        %749 = vmatprep.subr.bf16.mxu0 0
        %750 = vmatpush1.bf16.msra.mxu0 0
        %751 = vmatprep.subr.bf16.mxu0 0
        %752 = vmatpush1.bf16.msra.mxu0 0
        %753 = vmatprep.subr.bf16.mxu0 0
        %754 = vmatpush1.bf16.msra.mxu0 0
        %755 = vmatprep.mubr.bf16.mxu0 0
        %756 = vmatmul.mubr.bf16.gmra.mrb[0].mxu0 %v717
        %v757 = vpop.f32.mrb[0].mxu0
        %v758 = vadd.f32 0.0, %v757
        %v759 = vpop.f32.mrb[0].mxu0
        %v760 = vpop.f32.mrb[0].mxu0
        %v761 = vpop.f32.mrb[0].mxu0
        %762 = vdwg.mxu0
        %v763 = vrcp.pop %v711
        %v764 = vmul.f32 %v758, %v763
        %766 = vrot.lane.b32.xlu0 %v588, 120
        %v767 = vpop.permute.xlu0 %766
        %768 = vrot.lane.b32.xlu0 %v655, 120
        %v769 = vpop.permute.xlu0 %768
        %v771 = vsel %vm656, %v767, 0
        %v774 = vsel %vm656, %v769, 0
        %776 = vmatprep.subr.bf16.mxu0 0
        %777 = vmatpush1.bf16.xpose.msra.mxu0 %v774
        %778 = vmatprep.subr.bf16.mxu0 0
        %779 = vmatpush1.bf16.xpose.msra.mxu0 0
        %780 = vmatprep.subr.bf16.mxu0 0
        %781 = vmatpush1.bf16.xpose.msra.mxu0 0
        %782 = vmatprep.subr.bf16.mxu0 0
        %783 = vmatpush1.bf16.xpose.msra.mxu0 0
        %784 = vmatprep.subr.bf16.mxu0 0
        %785 = vmatpush1.bf16.xpose.msra.mxu0 0
        %786 = vmatprep.subr.bf16.mxu0 0
        %787 = vmatpush1.bf16.xpose.msra.mxu0 0
        %788 = vmatprep.subr.bf16.mxu0 0
        %789 = vmatpush1.bf16.xpose.msra.mxu0 0
        %790 = vmatprep.subr.bf16.mxu0 0
        %791 = vmatpush1.bf16.xpose.msra.mxu0 0
        %792 = vmatprep.subr.bf16.mxu0 0
        %793 = vmatpush1.bf16.xpose.msra.mxu0 0
        %794 = vmatprep.subr.bf16.mxu0 0
        %795 = vmatpush1.bf16.xpose.msra.mxu0 0
        %796 = vmatprep.subr.bf16.mxu0 0
        %797 = vmatpush1.bf16.xpose.msra.mxu0 0
        %798 = vmatprep.subr.bf16.mxu0 0
        %799 = vmatpush1.bf16.xpose.msra.mxu0 0
        %800 = vmatprep.subr.bf16.mxu0 0
        %801 = vmatpush1.bf16.xpose.msra.mxu0 0
        %802 = vmatprep.subr.bf16.mxu0 0
        %803 = vmatpush1.bf16.xpose.msra.mxu0 0
        %804 = vmatprep.subr.bf16.mxu0 0
        %805 = vmatpush1.bf16.xpose.msra.mxu0 0
        %806 = vmatprep.subr.bf16.mxu0 0
        %807 = vmatpush1.bf16.xpose.msra.mxu0 0
        %808 = vmatprep.mubr.bf16.mxu0 0
        %809 = vmatmul.mubr.bf16.gmra.mrb[0].mxu0 %v771
        %v810 = vpop.f32.mrb[0].mxu0
        %v811 = vadd.f32 0.0, %v810
        %v812 = vpop.f32.mrb[0].mxu0
        %v813 = vpop.f32.mrb[0].mxu0
        %v814 = vpop.f32.mrb[0].mxu0
        %815 = vdwg.mxu0
        %v816 = vsel %vm656, %v811, -inf
        %817 = vmax.xlane.f32.xlu0 %v816
        %v818 = vpop.xlane.xlu0 %817
        %v819 = vsub.f32 %v811, %v818
        %v820 = vmul.f32 %v819, 1.442695
        %v821 = vpow.pop %v820
        %v822 = vsel %vm656, %v821, 0.0
        %823 = vadd.xlane.f32.xlu0 %v822
        %v824 = vpop.xlane.xlu0 %823
        %v825 = vpack.c.bf16 %v821, %v821
        %826 = vrot.lane.b32.xlu0 %v655, 88
        %v827 = vpop.permute.xlu0 %826
        %v829 = vsel %vm656, %v825, 0
        %v832 = vsel %vm719, %v827, 0
        %834 = vmatprep.subr.bf16.mxu0 0
        %835 = vmatpush1.bf16.msra.mxu0 %v832
        %836 = vmatprep.subr.bf16.mxu0 0
        %837 = vmatpush1.bf16.msra.mxu0 0
        %838 = vmatprep.subr.bf16.mxu0 0
        %839 = vmatpush1.bf16.msra.mxu0 0
        %840 = vmatprep.subr.bf16.mxu0 0
        %841 = vmatpush1.bf16.msra.mxu0 0
        %842 = vmatprep.subr.bf16.mxu0 0
        %843 = vmatpush1.bf16.msra.mxu0 0
        %844 = vmatprep.subr.bf16.mxu0 0
        %845 = vmatpush1.bf16.msra.mxu0 0
        %846 = vmatprep.subr.bf16.mxu0 0
        %847 = vmatpush1.bf16.msra.mxu0 0
        %848 = vmatprep.subr.bf16.mxu0 0
        %849 = vmatpush1.bf16.msra.mxu0 0
        %850 = vmatprep.subr.bf16.mxu0 0
        %851 = vmatpush1.bf16.msra.mxu0 0
        %852 = vmatprep.subr.bf16.mxu0 0
        %853 = vmatpush1.bf16.msra.mxu0 0
        %854 = vmatprep.subr.bf16.mxu0 0
        %855 = vmatpush1.bf16.msra.mxu0 0
        %856 = vmatprep.subr.bf16.mxu0 0
        %857 = vmatpush1.bf16.msra.mxu0 0
        %858 = vmatprep.subr.bf16.mxu0 0
        %859 = vmatpush1.bf16.msra.mxu0 0
        %860 = vmatprep.subr.bf16.mxu0 0
        %861 = vmatpush1.bf16.msra.mxu0 0
        %862 = vmatprep.subr.bf16.mxu0 0
        %863 = vmatpush1.bf16.msra.mxu0 0
        %864 = vmatprep.subr.bf16.mxu0 0
        %865 = vmatpush1.bf16.msra.mxu0 0
        %866 = vmatprep.mubr.bf16.mxu0 0
        %867 = vmatmul.mubr.bf16.gmra.mrb[0].mxu0 %v829
        %v868 = vpop.f32.mrb[0].mxu0
        %v869 = vadd.f32 0.0, %v868
        %v870 = vpop.f32.mrb[0].mxu0
        %v871 = vpop.f32.mrb[0].mxu0
        %v872 = vpop.f32.mrb[0].mxu0
        %873 = vdwg.mxu0
        %v874 = vrcp.pop %v824
        %v875 = vmul.f32 %v869, %v874
        %876 = vrot.lane.b32.xlu0 %v588, 112
        %v877 = vpop.permute.xlu0 %876
        %878 = vrot.lane.b32.xlu0 %v655, 112
        %v879 = vpop.permute.xlu0 %878
        %v881 = vsel %vm656, %v877, 0
        %v884 = vsel %vm656, %v879, 0
        %886 = vmatprep.subr.bf16.mxu0 0
        %887 = vmatpush1.bf16.xpose.msra.mxu0 %v884
        %888 = vmatprep.subr.bf16.mxu0 0
        %889 = vmatpush1.bf16.xpose.msra.mxu0 0
        %890 = vmatprep.subr.bf16.mxu0 0
        %891 = vmatpush1.bf16.xpose.msra.mxu0 0
        %892 = vmatprep.subr.bf16.mxu0 0
        %893 = vmatpush1.bf16.xpose.msra.mxu0 0
        %894 = vmatprep.subr.bf16.mxu0 0
        %895 = vmatpush1.bf16.xpose.msra.mxu0 0
        %896 = vmatprep.subr.bf16.mxu0 0
        %897 = vmatpush1.bf16.xpose.msra.mxu0 0
        %898 = vmatprep.subr.bf16.mxu0 0
        %899 = vmatpush1.bf16.xpose.msra.mxu0 0
        %900 = vmatprep.subr.bf16.mxu0 0
        %901 = vmatpush1.bf16.xpose.msra.mxu0 0
        %902 = vmatprep.subr.bf16.mxu0 0
        %903 = vmatpush1.bf16.xpose.msra.mxu0 0
        %904 = vmatprep.subr.bf16.mxu0 0
        %905 = vmatpush1.bf16.xpose.msra.mxu0 0
        %906 = vmatprep.subr.bf16.mxu0 0
        %907 = vmatpush1.bf16.xpose.msra.mxu0 0
        %908 = vmatprep.subr.bf16.mxu0 0
        %909 = vmatpush1.bf16.xpose.msra.mxu0 0
        %910 = vmatprep.subr.bf16.mxu0 0
        %911 = vmatpush1.bf16.xpose.msra.mxu0 0
        %912 = vmatprep.subr.bf16.mxu0 0
        %913 = vmatpush1.bf16.xpose.msra.mxu0 0
        %914 = vmatprep.subr.bf16.mxu0 0
        %915 = vmatpush1.bf16.xpose.msra.mxu0 0
        %916 = vmatprep.subr.bf16.mxu0 0
        %917 = vmatpush1.bf16.xpose.msra.mxu0 0
        %918 = vmatprep.mubr.bf16.mxu0 0
        %919 = vmatmul.mubr.bf16.gmra.mrb[0].mxu0 %v881
        %v920 = vpop.f32.mrb[0].mxu0
        %v921 = vadd.f32 0.0, %v920
        %v922 = vpop.f32.mrb[0].mxu0
        %v923 = vpop.f32.mrb[0].mxu0
        %v924 = vpop.f32.mrb[0].mxu0
        %925 = vdwg.mxu0
        %v926 = vsel %vm656, %v921, -inf
        %927 = vmax.xlane.f32.xlu0 %v926
        %v928 = vpop.xlane.xlu0 %927
        %v929 = vsub.f32 %v921, %v928
        %v930 = vmul.f32 %v929, 1.442695
        %v931 = vpow.pop %v930
        %v932 = vsel %vm656, %v931, 0.0
        %933 = vadd.xlane.f32.xlu0 %v932
        %v934 = vpop.xlane.xlu0 %933
        %v935 = vpack.c.bf16 %v931, %v931
        %936 = vrot.lane.b32.xlu0 %v655, 80
        %v937 = vpop.permute.xlu0 %936
        %v939 = vsel %vm656, %v935, 0
        %v942 = vsel %vm719, %v937, 0
        %944 = vmatprep.subr.bf16.mxu0 0
        %945 = vmatpush1.bf16.msra.mxu0 %v942
        %946 = vmatprep.subr.bf16.mxu0 0
        %947 = vmatpush1.bf16.msra.mxu0 0
        %948 = vmatprep.subr.bf16.mxu0 0
        %949 = vmatpush1.bf16.msra.mxu0 0
        %950 = vmatprep.subr.bf16.mxu0 0
        %951 = vmatpush1.bf16.msra.mxu0 0
        %952 = vmatprep.subr.bf16.mxu0 0
        %953 = vmatpush1.bf16.msra.mxu0 0
        %954 = vmatprep.subr.bf16.mxu0 0
        %955 = vmatpush1.bf16.msra.mxu0 0
        %956 = vmatprep.subr.bf16.mxu0 0
        %957 = vmatpush1.bf16.msra.mxu0 0
        %958 = vmatprep.subr.bf16.mxu0 0
        %959 = vmatpush1.bf16.msra.mxu0 0
        %960 = vmatprep.subr.bf16.mxu0 0
        %961 = vmatpush1.bf16.msra.mxu0 0
        %962 = vmatprep.subr.bf16.mxu0 0
        %963 = vmatpush1.bf16.msra.mxu0 0
        %964 = vmatprep.subr.bf16.mxu0 0
        %965 = vmatpush1.bf16.msra.mxu0 0
        %966 = vmatprep.subr.bf16.mxu0 0
        %967 = vmatpush1.bf16.msra.mxu0 0
        %968 = vmatprep.subr.bf16.mxu0 0
        %969 = vmatpush1.bf16.msra.mxu0 0
        %970 = vmatprep.subr.bf16.mxu0 0
        %971 = vmatpush1.bf16.msra.mxu0 0
        %972 = vmatprep.subr.bf16.mxu0 0
        %973 = vmatpush1.bf16.msra.mxu0 0
        %974 = vmatprep.subr.bf16.mxu0 0
        %975 = vmatpush1.bf16.msra.mxu0 0
        %976 = vmatprep.mubr.bf16.mxu0 0
        %977 = vmatmul.mubr.bf16.gmra.mrb[0].mxu0 %v939
        %v978 = vpop.f32.mrb[0].mxu0
        %v979 = vadd.f32 0.0, %v978
        %v980 = vpop.f32.mrb[0].mxu0
        %v981 = vpop.f32.mrb[0].mxu0
        %v982 = vpop.f32.mrb[0].mxu0
        %983 = vdwg.mxu0
        %v984 = vrcp.pop %v934
        %v985 = vmul.f32 %v979, %v984
        %986 = vrot.lane.b32.xlu0 %v588, 104
        %v987 = vpop.permute.xlu0 %986
        %988 = vrot.lane.b32.xlu0 %v655, 104
        %v989 = vpop.permute.xlu0 %988
        %v991 = vsel %vm656, %v987, 0
        %v994 = vsel %vm656, %v989, 0
        %996 = vmatprep.subr.bf16.mxu0 0
        %997 = vmatpush1.bf16.xpose.msra.mxu0 %v994
        %998 = vmatprep.subr.bf16.mxu0 0
        %999 = vmatpush1.bf16.xpose.msra.mxu0 0
        %1000 = vmatprep.subr.bf16.mxu0 0
        %1001 = vmatpush1.bf16.xpose.msra.mxu0 0
        %1002 = vmatprep.subr.bf16.mxu0 0
        %1003 = vmatpush1.bf16.xpose.msra.mxu0 0
        %1004 = vmatprep.subr.bf16.mxu0 0
        %1005 = vmatpush1.bf16.xpose.msra.mxu0 0
        %1006 = vmatprep.subr.bf16.mxu0 0
        %1007 = vmatpush1.bf16.xpose.msra.mxu0 0
        %1008 = vmatprep.subr.bf16.mxu0 0
        %1009 = vmatpush1.bf16.xpose.msra.mxu0 0
        %1010 = vmatprep.subr.bf16.mxu0 0
        %1011 = vmatpush1.bf16.xpose.msra.mxu0 0
        %1012 = vmatprep.subr.bf16.mxu0 0
        %1013 = vmatpush1.bf16.xpose.msra.mxu0 0
        %1014 = vmatprep.subr.bf16.mxu0 0
        %1015 = vmatpush1.bf16.xpose.msra.mxu0 0
        %1016 = vmatprep.subr.bf16.mxu0 0
        %1017 = vmatpush1.bf16.xpose.msra.mxu0 0
        %1018 = vmatprep.subr.bf16.mxu0 0
        %1019 = vmatpush1.bf16.xpose.msra.mxu0 0
        %1020 = vmatprep.subr.bf16.mxu0 0
        %1021 = vmatpush1.bf16.xpose.msra.mxu0 0
        %1022 = vmatprep.subr.bf16.mxu0 0
        %1023 = vmatpush1.bf16.xpose.msra.mxu0 0
        %1024 = vmatprep.subr.bf16.mxu0 0
        %1025 = vmatpush1.bf16.xpose.msra.mxu0 0
        %1026 = vmatprep.subr.bf16.mxu0 0
        %1027 = vmatpush1.bf16.xpose.msra.mxu0 0
        %1028 = vmatprep.mubr.bf16.mxu0 0
        %1029 = vmatmul.mubr.bf16.gmra.mrb[0].mxu0 %v991
        %v1030 = vpop.f32.mrb[0].mxu0
        %v1031 = vadd.f32 0.0, %v1030
        %v1032 = vpop.f32.mrb[0].mxu0
        %v1033 = vpop.f32.mrb[0].mxu0
        %v1034 = vpop.f32.mrb[0].mxu0
        %1035 = vdwg.mxu0
        %v1036 = vsel %vm656, %v1031, -inf
        %1037 = vmax.xlane.f32.xlu0 %v1036
        %v1038 = vpop.xlane.xlu0 %1037
        %v1039 = vsub.f32 %v1031, %v1038
        %v1040 = vmul.f32 %v1039, 1.442695
        %v1041 = vpow.pop %v1040
        %v1042 = vsel %vm656, %v1041, 0.0
        %1043 = vadd.xlane.f32.xlu0 %v1042
        %v1044 = vpop.xlane.xlu0 %1043
        %v1045 = vpack.c.bf16 %v1041, %v1041
        %1046 = vrot.lane.b32.xlu0 %v655, 72
        %v1047 = vpop.permute.xlu0 %1046
        %v1049 = vsel %vm656, %v1045, 0
        %v1052 = vsel %vm719, %v1047, 0
        %1054 = vmatprep.subr.bf16.mxu0 0
        %1055 = vmatpush1.bf16.msra.mxu0 %v1052
        %1056 = vmatprep.subr.bf16.mxu0 0
        %1057 = vmatpush1.bf16.msra.mxu0 0
        %1058 = vmatprep.subr.bf16.mxu0 0
        %1059 = vmatpush1.bf16.msra.mxu0 0
        %1060 = vmatprep.subr.bf16.mxu0 0
        %1061 = vmatpush1.bf16.msra.mxu0 0
        %1062 = vmatprep.subr.bf16.mxu0 0
        %1063 = vmatpush1.bf16.msra.mxu0 0
        %1064 = vmatprep.subr.bf16.mxu0 0
        %1065 = vmatpush1.bf16.msra.mxu0 0
        %1066 = vmatprep.subr.bf16.mxu0 0
        %1067 = vmatpush1.bf16.msra.mxu0 0
        %1068 = vmatprep.subr.bf16.mxu0 0
        %1069 = vmatpush1.bf16.msra.mxu0 0
        %1070 = vmatprep.subr.bf16.mxu0 0
        %1071 = vmatpush1.bf16.msra.mxu0 0
        %1072 = vmatprep.subr.bf16.mxu0 0
        %1073 = vmatpush1.bf16.msra.mxu0 0
        %1074 = vmatprep.subr.bf16.mxu0 0
        %1075 = vmatpush1.bf16.msra.mxu0 0
        %1076 = vmatprep.subr.bf16.mxu0 0
        %1077 = vmatpush1.bf16.msra.mxu0 0
        %1078 = vmatprep.subr.bf16.mxu0 0
        %1079 = vmatpush1.bf16.msra.mxu0 0
        %1080 = vmatprep.subr.bf16.mxu0 0
        %1081 = vmatpush1.bf16.msra.mxu0 0
        %1082 = vmatprep.subr.bf16.mxu0 0
        %1083 = vmatpush1.bf16.msra.mxu0 0
        %1084 = vmatprep.subr.bf16.mxu0 0
        %1085 = vmatpush1.bf16.msra.mxu0 0
        %1086 = vmatprep.mubr.bf16.mxu0 0
        %1087 = vmatmul.mubr.bf16.gmra.mrb[0].mxu0 %v1049
        %v1088 = vpop.f32.mrb[0].mxu0
        %v1089 = vadd.f32 0.0, %v1088
        %v1090 = vpop.f32.mrb[0].mxu0
        %v1091 = vpop.f32.mrb[0].mxu0
        %v1092 = vpop.f32.mrb[0].mxu0
        %1093 = vdwg.mxu0
        %v1094 = vrcp.pop %v1044
        %v1095 = vmul.f32 %v1089, %v1094
        %1097 = vrot.lane.b32.xlu0 %v875, 8
        %v1098 = vpop.permute.xlu0 %1097
        %1101 = vrot.lane.b32.xlu0 %v985, 16
        %v1102 = vpop.permute.xlu0 %1101
        %1105 = vrot.lane.b32.xlu0 %v1095, 24
        %v1106 = vpop.permute.xlu0 %1105
        %v1108 = vsel %vm656, %v764, %v1098
        %vm1109 = vcmask 130048
        %v1110 = vsel %vm1109, %v1108, %v1102
        %vm1111 = vcmask 195584
        %v1112 = vsel %vm1111, %v1110, %v1106
        %v1113 = vpack.c.bf16 %v1112, %v1112
        %v1114 = vld [vmem:[#allocation13] sm:$0xf]
        %v1115 = vld [vmem:[#allocation13 + $0x4] sm:$0xf]
        %v1116 = vld [vmem:[#allocation13 + $0x8] sm:$0xf]
        %v1117 = vld [vmem:[#allocation13 + $0xc] sm:$0xf]
        %v1118 = vld [vmem:[#allocation14] sm:$0x1]
        %v1120 = vlaneseq
        %v1121 = vshrl.u32 %v1120, 7
        %v1122 = vsub.s32 0, %v1121
        %v1123 = vrot.slane %v1118, %v1122
        %v1129 = vunpack.c.l.b16 %v1114
        %v1130 = vunpack.c.l.b16 %v1115
        %v1131 = vunpack.c.l.b16 %v1116
        %v1132 = vunpack.c.l.b16 %v1117
        %v1133 = vpack.c.b16 %v1130, %v1129
        %v1134 = vpack.c.b16 %v1132, %v1131
        %v1138 = vsel %vm544, %v1113, 0
        %1140 = vmatprep.subr.bf16.mxu0 0
        %1141 = vmatpush1.bf16.msra.mxu0 %v1133
        %1142 = vmatprep.subr.bf16.mxu0 0
        %1143 = vmatpush1.bf16.msra.mxu0 %v1134
        %1144 = vmatprep.subr.bf16.mxu0 0
        %1145 = vmatpush1.bf16.msra.mxu0 0
        %1146 = vmatprep.subr.bf16.mxu0 0
        %1147 = vmatpush1.bf16.msra.mxu0 0
        %1148 = vmatprep.subr.bf16.mxu0 0
        %1149 = vmatpush1.bf16.msra.mxu0 0
        %1150 = vmatprep.subr.bf16.mxu0 0
        %1151 = vmatpush1.bf16.msra.mxu0 0
        %1152 = vmatprep.subr.bf16.mxu0 0
        %1153 = vmatpush1.bf16.msra.mxu0 0
        %1154 = vmatprep.subr.bf16.mxu0 0
        %1155 = vmatpush1.bf16.msra.mxu0 0
        %1156 = vmatprep.subr.bf16.mxu0 0
        %1157 = vmatpush1.bf16.msra.mxu0 0
        %1158 = vmatprep.subr.bf16.mxu0 0
        %1159 = vmatpush1.bf16.msra.mxu0 0
        %1160 = vmatprep.subr.bf16.mxu0 0
        %1161 = vmatpush1.bf16.msra.mxu0 0
        %1162 = vmatprep.subr.bf16.mxu0 0
        %1163 = vmatpush1.bf16.msra.mxu0 0
        %1164 = vmatprep.subr.bf16.mxu0 0
        %1165 = vmatpush1.bf16.msra.mxu0 0
        %1166 = vmatprep.subr.bf16.mxu0 0
        %1167 = vmatpush1.bf16.msra.mxu0 0
        %1168 = vmatprep.subr.bf16.mxu0 0
        %1169 = vmatpush1.bf16.msra.mxu0 0
        %1170 = vmatprep.subr.bf16.mxu0 0
        %1171 = vmatpush1.bf16.msra.mxu0 0
        %1172 = vmatprep.mubr.bf16.mxu0 0
        %1173 = vmatmul.mubr.bf16.gmra.mrb[0].mxu0 %v1138
        %v1174 = vpop.f32.mrb[0].mxu0
        %v1175 = vadd.f32 %v1123, %v1174
        %v1176 = vpop.f32.mrb[0].mxu0
        %v1177 = vpop.f32.mrb[0].mxu0
        %v1178 = vpop.f32.mrb[0].mxu0
        %1179 = vdwg.mxu0
        %v1180 = vunpack.c.l.bf16 %v519
        %v1181 = vadd.f32 %v1180, %v1175
        %v1182 = vsel %vm544, %v1181, 0.0
        %1183 = vadd.xlane.f32.xlu0 %v1182
        %v1184 = vpop.xlane.xlu0 %1183
        %v1185 = vrcp.pop 32.0
        %v1186 = vmul.f32 %v1184, %v1185
        %v1187 = vsub.f32 %v1181, %v1186
        %v1188 = vmul.f32 %v1187, %v1187
        %v1189 = vsel %vm544, %v1188, 0.0
        %1190 = vadd.xlane.f32.xlu0 %v1189
        %v1191 = vpop.xlane.xlu0 %1190
        %v1192 = vmul.f32 %v1191, %v1185
        %v1193 = vadd.f32 %v1192, 1e-05
        %v1194 = vrsqrt.pop %v1193
        %v1195 = vmul.f32 %v1187, %v1194
        %v1196 = vld [vmem:[#allocation16] sm:$0x1]
        %v1198 = vlaneseq
        %v1199 = vshrl.u32 %v1198, 7
        %v1200 = vsub.s32 0, %v1199
        %v1201 = vrot.slane %v1196, %v1200
        %v1203 = vmul.f32 %v1195, %v1201
        %v1204 = vld [vmem:[#allocation17] sm:$0x1]
        %v1206 = vlaneseq
        %v1207 = vshrl.u32 %v1206, 7
        %v1208 = vsub.s32 0, %v1207
        %v1209 = vrot.slane %v1204, %v1208
        %v1211 = vadd.f32 %v1203, %v1209
        %v1212 = vpack.c.bf16 %v1211, %v1211
        %vm1213 = vcmask 257024
        %1214 = vst.msk [vmem:[%s517] sm:$0xf] %vm1213, %v1212
        %s1215 = sand.u32 %s262, 1
        %s1216 = scalar_lea.sflag [#allocation4], %s1215
        %s1217 = sand.u32 %s262, 1
        %s1218 = smul.addr %s1217, 4
        %s1219 = scalar_lea.vmem [#allocation19], %s1218
        // Predicated region
        $region101: #{voice_to_notes_forward.12} parent=59 // pred_check
          %p1220 = pneg %p272
        $region102: #{voice_to_notes_forward.12} parent=59 // pred_check_branch
          %1222 = sbr.rel (%p1220) target = $region104
        $region103: #{voice_to_notes_forward.12} parent=59 // pred_region
          %s1224 = ssub.s32 64, 64
          %1225 = vsyncadd %s1216, %s1224
          %s1226 = smul.addr %s34, 64
          %s1227 = scalar_lea.hbm %s10, %s1226
          %s1229 = sshll.u32 %s1219, 4
          %s1230 = int_to_ptr.vmem [resolvable:$true] %s1229
          %1232 = dma.vmem_to_hbm [thread:$0]  %s1230, 64, %s1227, %s1216
        $region104: #{voice_to_notes_forward.12} parent=59 // pred_fallthru
          _
      $region60: #{voice_to_notes_forward.12} parent=5 // pred_fallthru
        _
      %p1233 = scmp.le.s32.totalorder 2, %s29
      // Predicated region
      $region105: #{voice_to_notes_forward.12} parent=5 // pred_check
        %p1234 = pneg %p1233
      $region106: #{voice_to_notes_forward.12} parent=5 // pred_check_branch
        %1236 = sbr.rel (%p1234) target = $region108
      $region107: #{voice_to_notes_forward.12} parent=5 // pred_region
        %s1237 = ssub.s32 %s29, 2
        // Predicated region
        $region109: #{voice_to_notes_forward.12} parent=107 // pred_check
          %p1238 = pneg %p278
        $region110: #{voice_to_notes_forward.12} parent=107 // pred_check_branch
          %1240 = sbr.rel (%p1238) target = $region112
        $region111: #{voice_to_notes_forward.12} parent=107 // pred_region
          %s1241 = sand.u32 %s263, 1
          %s1242 = scalar_lea.sflag [#allocation4], %s1241
          %s1243 = sand.u32 %s263, 1
          %s1244 = smul.addr %s1243, 4
          %s1245 = scalar_lea.vmem [#allocation19], %s1244
          %1246 = dma.done %s1242, 64
        $region112: #{voice_to_notes_forward.12} parent=107 // pred_fallthru
          _
      $region108: #{voice_to_notes_forward.12} parent=5 // pred_fallthru
        _
    $region6: #{voice_to_notes_forward.12} parent=1 // loop_footer
      %s33 = sadd.s32 1, %s29
    $region7: #{voice_to_notes_forward.12} parent=1 // loop_footer_branch
      %28 = sbr.rel target = $region3
    $region8: #{voice_to_notes_forward.12} parent=1 // loop_exit
      _
    %1247 = vsyncpa [#allocation3], 1
    %s1248 = scalar_lea.sflag [#allocation3], 1
    %1249 = vsyncpa %s1248, 1
    %1250 = vsyncpa [#allocation6], 1
    %s1251 = scalar_lea.sflag [#allocation6], 1
    %1252 = vsyncpa %s1251, 1
    %1253 = vsyncpa [#allocation9], 1
    %1254 = vsyncpa [#allocation12], 1
    %1255 = vsyncpa [#allocation15], 1
    %1256 = vsyncpa [#allocation18], 1
    %1257 = vsyncpa [#allocation4], 1
    %s1258 = scalar_lea.sflag [#allocation4], 1
    %1259 = vsyncpa %s1258, 1

// kernel: voice_to_notes_forward.17
$region0: #{voice_to_notes_forward.17}
  #allocation0 [shape = 'u32[]', space=smem, size = 0x4, offset = 0x4, fixed_abs, tag = 'smem constant byte address 0x4 - core index']
  #allocation1 [shape = 'u32[144,128]{1,0:T(1,128)}', space=vmem, size = 0x12000, scoped, tag = 'internal scratch']
  %s0 = inlined_call_operand.hbm [shape: bf16[16,32], index: 0, kind: input, shape index: {}]
  %s1 = inlined_call_operand.hbm [shape: bf16[32,384], index: 1, kind: input, shape index: {}]
  %s2 = inlined_call_operand.hbm [shape: f32[1,384], index: 2, kind: input, shape index: {}]
  %s3 = inlined_call_operand.hbm [shape: f32[16,384], index: 3, kind: output, shape index: {}]
  %s4 = sld [smem:[#allocation0]]
  $region57: #{voice_to_notes_forward.17} parent=0
    _
  %s6 = ssub.s32 1, %s4
  %s7 = scalar_select 0, %s6, %s4
  $region1: #{voice_to_notes_forward.17} parent=0
    #allocation2 [shape = 'u8[4096]{0}', space=vmem, size = 0x1000, scoped, tag = 'input window, operand 0']
    #allocation3 [shape = 's32[2]{0}', space=sflag, size = 0x8, scoped, tag = 'scoped memory for voice_to_notes_forward.17']
    #allocation4 [shape = 's32[2]{0}', space=sflag, size = 0x8, scoped, tag = 'scoped memory for voice_to_notes_forward.17']
    #allocation5 [shape = 'u8[24576]{0}', space=vmem, size = 0x6000, scoped, tag = 'input window, operand 1, single buffered']
    #allocation6 [shape = 's32[1]{0}', space=sflag, size = 0x4, scoped, tag = 'scoped memory for voice_to_notes_forward.17']
    #allocation7 [shape = 'u8[1536]{0}', space=vmem, size = 0x800, scoped, tag = 'input window, operand 2, single buffered']
    #allocation8 [shape = 'u8[24576]{0}', space=vmem, size = 0x6000, scoped, tag = 'output window, operand 0']
    %8 = vsyncpa [#allocation3], 0
    %s9 = scalar_lea.sflag [#allocation3], 1
    %10 = vsyncpa %s9, 0
    %11 = vsyncpa [#allocation6], 0
    %12 = vsyncpa [#allocation4], 0
    %s13 = scalar_lea.sflag [#allocation4], 1
    %14 = vsyncpa %s13, 0
    loop: start=0, step=1, limit=4
    $region2: #{voice_to_notes_forward.17} parent=1 // loop_pre_header
      _
    $region3: #{voice_to_notes_forward.17} parent=1 // loop_header
      %s16 = sphi 0, %s20
      %p17 = scmp.ge.s32.totalorder %s16, 4
      %s26 = sphi 0, %s28
      %s29 = sphi 0, %s26
      %s30 = sphi 0, %s29
      %s46 = sphi 0, %s30
      %s50 = sphi 0, %s50
      %s52 = sphi 0, %s50
      %s53 = sphi 0, %s52
      %s67 = sphi 0, %s53
      %s71 = sphi 0, %s71
      %s73 = sphi 0, %s71
      %s74 = sphi 0, %s73
      %s88 = sphi 0, %s74
      %s94 = sphi 0, %s96
      %s97 = sphi 0, %s94
      %s98 = sphi 0, %s97
      %s114 = sphi 0, %s98
    $region4: #{voice_to_notes_forward.17} parent=1 // loop_header_branch
      %19 = sbr.rel (%p17) target = $region8
    $region5: #{voice_to_notes_forward.17} parent=1 // loop_body
      %s21 = ssub.s32 %s16, 1
      %s22 = ssub.s32 %s16, 2
      %s23 = sadd.s32 %s16, 1
      %s24 = ssub.s32 %s16, %s23
      %p25 = scmp.eq.s32.totalorder %s24, 0
      %s27 = sadd.s32 %s26, 1
      %s28 = scalar_select %p25, %s26, %s27
      %p31 = pneg %p25
      %p32 = scmp.eq.s32.totalorder %s16, 1
      %p33 = por %p31, %p32
      %p34 = scmp.ne.s32.totalorder %s26, %s29
      %p35 = scmp.eq.s32.totalorder %s16, 0
      %p36 = por %p34, %p35
      %p37 = scmp.ne.s32.totalorder %s26, %s29
      %p38 = scmp.eq.s32.totalorder %s21, 1
      %p39 = por %p37, %p38
      %p40 = scmp.ne.s32.totalorder %s29, %s30
      %p41 = scmp.eq.s32.totalorder %s21, 0
      %p42 = por %p40, %p41
      %p43 = scmp.ne.s32.totalorder %s29, %s30
      %p44 = scmp.eq.s32.totalorder %s22, 1
      %p45 = por %p43, %p44
      %p47 = scmp.ne.s32.totalorder %s30, %s46
      %p48 = scmp.eq.s32.totalorder %s22, 0
      %p49 = por %p47, %p48
      %s51 = sadd.s32 %s50, 1
      %p54 = scmp.eq.s32.totalorder %s16, 1
      %p55 = scmp.ne.s32.totalorder %s50, %s52
      %p56 = scmp.eq.s32.totalorder %s16, 0
      %p57 = por %p55, %p56
      %p58 = scmp.ne.s32.totalorder %s50, %s52
      %p59 = scmp.eq.s32.totalorder %s21, 1
      %p60 = por %p58, %p59
      %p61 = scmp.ne.s32.totalorder %s52, %s53
      %p62 = scmp.eq.s32.totalorder %s21, 0
      %p63 = por %p61, %p62
      %p64 = scmp.ne.s32.totalorder %s52, %s53
      %p65 = scmp.eq.s32.totalorder %s22, 1
      %p66 = por %p64, %p65
      %p68 = scmp.ne.s32.totalorder %s53, %s67
      %p69 = scmp.eq.s32.totalorder %s22, 0
      %p70 = por %p68, %p69
      %s72 = sadd.s32 %s71, 1
      %p75 = scmp.eq.s32.totalorder %s16, 1
      %p76 = scmp.ne.s32.totalorder %s71, %s73
      %p77 = scmp.eq.s32.totalorder %s16, 0
      %p78 = por %p76, %p77
      %p79 = scmp.ne.s32.totalorder %s71, %s73
      %p80 = scmp.eq.s32.totalorder %s21, 1
      %p81 = por %p79, %p80
      %p82 = scmp.ne.s32.totalorder %s73, %s74
      %p83 = scmp.eq.s32.totalorder %s21, 0
      %p84 = por %p82, %p83
      %p85 = scmp.ne.s32.totalorder %s73, %s74
      %p86 = scmp.eq.s32.totalorder %s22, 1
      %p87 = por %p85, %p86
      %p89 = scmp.ne.s32.totalorder %s74, %s88
      %p90 = scmp.eq.s32.totalorder %s22, 0
      %p91 = por %p89, %p90
      %s92 = ssub.s32 %s16, %s23
      %p93 = scmp.eq.s32.totalorder %s92, 0
      %s95 = sadd.s32 %s94, 1
      %s96 = scalar_select %p93, %s94, %s95
      %p99 = pneg %p93
      %p100 = scmp.eq.s32.totalorder %s16, 1
      %p101 = por %p99, %p100
      %p102 = scmp.ne.s32.totalorder %s94, %s97
      %p103 = scmp.eq.s32.totalorder %s16, 0
      %p104 = por %p102, %p103
      %p105 = scmp.ne.s32.totalorder %s94, %s97
      %p106 = scmp.eq.s32.totalorder %s21, 1
      %p107 = por %p105, %p106
      %p108 = scmp.ne.s32.totalorder %s97, %s98
      %p109 = scmp.eq.s32.totalorder %s21, 0
      %p110 = por %p108, %p109
      %p111 = scmp.ne.s32.totalorder %s97, %s98
      %p112 = scmp.eq.s32.totalorder %s22, 1
      %p113 = por %p111, %p112
      %p115 = scmp.ne.s32.totalorder %s98, %s114
      %p116 = scmp.eq.s32.totalorder %s22, 0
      %p117 = por %p115, %p116
      %p118 = scmp.le.s32.totalorder 1, %s16
      %p119 = scmp.lt.s32.totalorder %s16, 3
      %p120 = pnand %p118, %p119
      %p121 = pneg %p120
      // Predicated region
      $region9: #{voice_to_notes_forward.17} parent=5 // pred_check
        _
      $region10: #{voice_to_notes_forward.17} parent=5 // pred_check_branch
        %123 = sbr.rel (%p120) target = $region12
      $region11: #{voice_to_notes_forward.17} parent=5 // pred_region
        %s124 = ssub.s32 %s16, 1
        // Predicated region
        $region13: #{voice_to_notes_forward.17} parent=11 // pred_check
          %p125 = pneg %p63
        $region14: #{voice_to_notes_forward.17} parent=11 // pred_check_branch
          %127 = sbr.rel (%p125) target = $region16
        $region15: #{voice_to_notes_forward.17} parent=11 // pred_region
          %s129 = ssub.s32 768, 768
          %130 = vsyncadd [#allocation6], %s129
          %s131 = sshll.u32 [#allocation5], 4
          %s132 = int_to_ptr.vmem [resolvable:$true] %s131
          %137 = dma.hbm_to_vmem [thread:$0]  %s1, 768, %s132, [#allocation6], 192, 192, 12
        $region16: #{voice_to_notes_forward.17} parent=11 // pred_fallthru
          _
        // Predicated region
        $region17: #{voice_to_notes_forward.17} parent=11 // pred_check
          %p138 = pneg %p84
        $region18: #{voice_to_notes_forward.17} parent=11 // pred_check_branch
          %140 = sbr.rel (%p138) target = $region20
        $region19: #{voice_to_notes_forward.17} parent=11 // pred_region
          %s142 = ssub.s32 48, 48
          %143 = vsyncadd [#allocation6], %s142
          %s145 = sshll.u32 [#allocation7], 4
          %s146 = int_to_ptr.vmem [resolvable:$true] %s145
          %148 = dma.hbm_to_vmem [thread:$0]  %s2, 48, %s146, [#allocation6]
        $region20: #{voice_to_notes_forward.17} parent=11 // pred_fallthru
          _
      $region12: #{voice_to_notes_forward.17} parent=5 // pred_fallthru
        _
      %p149 = scmp.lt.s32.totalorder %s16, 2
      // Predicated region
      $region21: #{voice_to_notes_forward.17} parent=5 // pred_check
        %p150 = pneg %p149
      $region22: #{voice_to_notes_forward.17} parent=5 // pred_check_branch
        %152 = sbr.rel (%p150) target = $region24
      $region23: #{voice_to_notes_forward.17} parent=5 // pred_region
        // Predicated region
        $region25: #{voice_to_notes_forward.17} parent=23 // pred_check
          %p153 = pneg %p36
        $region26: #{voice_to_notes_forward.17} parent=23 // pred_check_branch
          %155 = sbr.rel (%p153) target = $region28
        $region27: #{voice_to_notes_forward.17} parent=23 // pred_region
          %s156 = sand.u32 %s26, 1
          %s157 = scalar_lea.sflag [#allocation3], %s156
          %s158 = sand.u32 %s26, 1
          %s159 = smul.addr %s158, 4
          %s160 = scalar_lea.vmem [#allocation2], %s159
          %s162 = ssub.s32 64, 64
          %163 = vsyncadd %s157, %s162
          %s164 = smul.addr %s16, 64
          %s165 = scalar_lea.hbm %s0, %s164
          %s167 = sshll.u32 %s160, 4
          %s168 = int_to_ptr.vmem [resolvable:$true] %s167
          %170 = dma.hbm_to_vmem [thread:$0]  %s165, 64, %s168, %s157
        $region28: #{voice_to_notes_forward.17} parent=23 // pred_fallthru
          _
      $region24: #{voice_to_notes_forward.17} parent=5 // pred_fallthru
        _
      %p171 = scmp.le.s32.totalorder 1, %s16
      %p172 = scmp.lt.s32.totalorder %s16, 3
      %p173 = pnand %p171, %p172
      %p174 = pneg %p173
      // Predicated region
      $region29: #{voice_to_notes_forward.17} parent=5 // pred_check
        _
      $region30: #{voice_to_notes_forward.17} parent=5 // pred_check_branch
        %176 = sbr.rel (%p173) target = $region32
      $region31: #{voice_to_notes_forward.17} parent=5 // pred_region
        %s177 = ssub.s32 %s16, 1
        %s178 = sand.u32 %s29, 1
        %s179 = scalar_lea.sflag [#allocation3], %s178
        %s180 = sand.u32 %s29, 1
        %s181 = smul.addr %s180, 4
        %s182 = scalar_lea.vmem [#allocation2], %s181
        // Predicated region
        $region33: #{voice_to_notes_forward.17} parent=31 // pred_check
          %p183 = pneg %p42
        $region34: #{voice_to_notes_forward.17} parent=31 // pred_check_branch
          %185 = sbr.rel (%p183) target = $region36
        $region35: #{voice_to_notes_forward.17} parent=31 // pred_region
          %186 = dma.done %s179, 64
        $region36: #{voice_to_notes_forward.17} parent=31 // pred_fallthru
          _
        // Predicated region
        $region37: #{voice_to_notes_forward.17} parent=31 // pred_check
          %p187 = pneg %p63
        $region38: #{voice_to_notes_forward.17} parent=31 // pred_check_branch
          %189 = sbr.rel (%p187) target = $region40
        $region39: #{voice_to_notes_forward.17} parent=31 // pred_region
          %190 = dma.done [#allocation6], 768
        $region40: #{voice_to_notes_forward.17} parent=31 // pred_fallthru
          _
        // Predicated region
        $region41: #{voice_to_notes_forward.17} parent=31 // pred_check
          %p191 = pneg %p84
        $region42: #{voice_to_notes_forward.17} parent=31 // pred_check_branch
          %193 = sbr.rel (%p191) target = $region44
        $region43: #{voice_to_notes_forward.17} parent=31 // pred_region
          %194 = dma.done [#allocation6], 48
        $region44: #{voice_to_notes_forward.17} parent=31 // pred_fallthru
          _
        %s195 = sand.u32 %s29, 1
        %s196 = scalar_lea.sflag [#allocation3], %s195
        %s197 = sand.u32 %s29, 1
        %s198 = smul.addr %s197, 4
        %s199 = scalar_lea.vmem [#allocation2], %s198
        %p200 = pneg %p42
        %p201 = pneg %p39
        %p202 = pneg %p63
        %p203 = pneg %p60
        %p204 = pneg %p84
        %p205 = pneg %p81
        %p206 = pneg %p110
        %p207 = pneg %p107
        %s208 = sand.u32 %s97, 1
        %s209 = scalar_lea.sflag [#allocation4], %s208
        %s210 = sand.u32 %s97, 1
        %s211 = smul.addr %s210, 24
        %s212 = scalar_lea.vmem [#allocation8], %s211
        %v214 = vld [vmem:[%s182] sm:$0xf]
        %v215 = vld [vmem:[#allocation5] sm:$0xff]
        %v216 = vld [vmem:[#allocation5 + $0x8] sm:$0xf]
        %v217 = vld [vmem:[#allocation5 + $0xc] sm:$0xff]
        %v218 = vld [vmem:[#allocation5 + $0x14] sm:$0xf]
        %v219 = vld [vmem:[#allocation5 + $0x18] sm:$0xff]
        %v220 = vld [vmem:[#allocation5 + $0x20] sm:$0xf]
        %v221 = vld [vmem:[#allocation5 + $0x24] sm:$0xff]
        %v222 = vld [vmem:[#allocation5 + $0x2c] sm:$0xf]
        %v223 = vld [vmem:[#allocation7] sm:$0x7]
        %v225 = vlaneseq
        %v226 = vshrl.u32 %v225, 7
        %v227 = vsub.s32 0, %v226
        %v228 = vrot.slane %v223, %v227
        %v229 = vlaneseq
        %v230 = vshrl.u32 %v229, 7
        %v231 = vsub.s32 1, %v230
        %v232 = vrot.slane %v223, %v231
        %v233 = vlaneseq
        %v234 = vshrl.u32 %v233, 7
        %v235 = vsub.s32 2, %v234
        %v236 = vrot.slane %v223, %v235
        %v248 = vunpack.c.l.b16 %v215
        %v249 = vunpack.c.h.b16 %v215
        %v250 = vunpack.c.l.b16 %v216
        %v251 = vunpack.c.l.b16 %v217
        %v252 = vunpack.c.h.b16 %v217
        %v253 = vunpack.c.l.b16 %v218
        %v254 = vunpack.c.l.b16 %v219
        %v255 = vunpack.c.h.b16 %v219
        %v256 = vunpack.c.l.b16 %v220
        %v257 = vunpack.c.l.b16 %v221
        %v258 = vunpack.c.h.b16 %v221
        %v259 = vunpack.c.l.b16 %v222
        %v260 = vpack.c.b16 %v251, %v248
        %v261 = vpack.c.b16 %v252, %v249
        %v262 = vpack.c.b16 %v253, %v250
        %v263 = vpack.c.b16 %v257, %v254
        %v264 = vpack.c.b16 %v258, %v255
        %v265 = vpack.c.b16 %v259, %v256
        %vm272 = vcmask 261120
        %v274 = vsel %vm272, %v214, 0
        %276 = vmatprep.subr.bf16.mxu0 %v261
        %277 = vmatpush1.bf16.msra.mxu0 %v260
        %278 = vmatprep.subr.bf16.mxu0 %v264
        %279 = vmatpush1.bf16.msra.mxu0 %v263
        %280 = vmatprep.subr.bf16.mxu0 0
        %281 = vmatpush1.bf16.msra.mxu0 0
        %282 = vmatprep.subr.bf16.mxu0 0
        %283 = vmatpush1.bf16.msra.mxu0 0
        %284 = vmatprep.subr.bf16.mxu0 0
        %285 = vmatpush1.bf16.msra.mxu0 0
        %286 = vmatprep.subr.bf16.mxu0 0
        %287 = vmatpush1.bf16.msra.mxu0 0
        %288 = vmatprep.subr.bf16.mxu0 0
        %289 = vmatpush1.bf16.msra.mxu0 0
        %290 = vmatprep.subr.bf16.mxu0 0
        %291 = vmatpush1.bf16.msra.mxu0 0
        %292 = vmatprep.subr.bf16.mxu0 0
        %293 = vmatpush1.bf16.msra.mxu0 0
        %294 = vmatprep.subr.bf16.mxu0 0
        %295 = vmatpush1.bf16.msra.mxu0 0
        %296 = vmatprep.subr.bf16.mxu0 0
        %297 = vmatpush1.bf16.msra.mxu0 0
        %298 = vmatprep.subr.bf16.mxu0 0
        %299 = vmatpush1.bf16.msra.mxu0 0
        %300 = vmatprep.subr.bf16.mxu0 0
        %301 = vmatpush1.bf16.msra.mxu0 0
        %302 = vmatprep.subr.bf16.mxu0 0
        %303 = vmatpush1.bf16.msra.mxu0 0
        %304 = vmatprep.subr.bf16.mxu0 0
        %305 = vmatpush1.bf16.msra.mxu0 0
        %306 = vmatprep.subr.bf16.mxu0 0
        %307 = vmatpush1.bf16.msra.mxu0 0
        %308 = vmatprep.mubr.bf16.mxu0 0
        %309 = vmatmul.mubr.bf16.gmra.mrb[0].mxu0 %v274
        %v310 = vpop.f32.mrb[0].mxu0
        %v311 = vadd.f32 %v228, %v310
        %v312 = vpop.f32.mrb[0].mxu0
        %v313 = vadd.f32 %v232, %v312
        %v314 = vpop.f32.mrb[0].mxu0
        %v315 = vpop.f32.mrb[0].mxu0
        %316 = vdwg.mxu0
        %317 = vmatprep.subr.bf16.mxu0 0
        %318 = vmatpush1.bf16.msra.mxu0 %v262
        %319 = vmatprep.subr.bf16.mxu0 0
        %320 = vmatpush1.bf16.msra.mxu0 %v265
        %321 = vmatprep.subr.bf16.mxu0 0
        %322 = vmatpush1.bf16.msra.mxu0 0
        %323 = vmatprep.subr.bf16.mxu0 0
        %324 = vmatpush1.bf16.msra.mxu0 0
        %325 = vmatprep.subr.bf16.mxu0 0
        %326 = vmatpush1.bf16.msra.mxu0 0
        %327 = vmatprep.subr.bf16.mxu0 0
        %328 = vmatpush1.bf16.msra.mxu0 0
        %329 = vmatprep.subr.bf16.mxu0 0
        %330 = vmatpush1.bf16.msra.mxu0 0
        %331 = vmatprep.subr.bf16.mxu0 0
        %332 = vmatpush1.bf16.msra.mxu0 0
        %333 = vmatprep.subr.bf16.mxu0 0
        %334 = vmatpush1.bf16.msra.mxu0 0
        %335 = vmatprep.subr.bf16.mxu0 0
        %336 = vmatpush1.bf16.msra.mxu0 0
        %337 = vmatprep.subr.bf16.mxu0 0
        %338 = vmatpush1.bf16.msra.mxu0 0
        %339 = vmatprep.subr.bf16.mxu0 0
        %340 = vmatpush1.bf16.msra.mxu0 0
        %341 = vmatprep.subr.bf16.mxu0 0
        %342 = vmatpush1.bf16.msra.mxu0 0
        %343 = vmatprep.subr.bf16.mxu0 0
        %344 = vmatpush1.bf16.msra.mxu0 0
        %345 = vmatprep.subr.bf16.mxu0 0
        %346 = vmatpush1.bf16.msra.mxu0 0
        %347 = vmatprep.subr.bf16.mxu0 0
        %348 = vmatpush1.bf16.msra.mxu0 0
        %349 = vmatprep.mubr.bf16.mxu0 0
        %350 = vmatmul.mubr.bf16.gmra.mrb[0].mxu0 %v274
        %v351 = vpop.f32.mrb[0].mxu0
        %v352 = vadd.f32 %v236, %v351
        %v353 = vpop.f32.mrb[0].mxu0
        %v354 = vpop.f32.mrb[0].mxu0
        %v355 = vpop.f32.mrb[0].mxu0
        %356 = vdwg.mxu0
        %357 = vst [vmem:[%s212] sm:$0xff] %v311
        %358 = vst [vmem:[%s212 + $0x8] sm:$0xff] %v313
        %359 = vst [vmem:[%s212 + $0x10] sm:$0xff] %v352
        %s360 = sand.u32 %s97, 1
        %s361 = scalar_lea.sflag [#allocation4], %s360
        %s362 = sand.u32 %s97, 1
        %s363 = smul.addr %s362, 24
        %s364 = scalar_lea.vmem [#allocation8], %s363
        // Predicated region
        $region45: #{voice_to_notes_forward.17} parent=31 // pred_check
          %p365 = pneg %p107
        $region46: #{voice_to_notes_forward.17} parent=31 // pred_check_branch
          %367 = sbr.rel (%p365) target = $region48
        $region47: #{voice_to_notes_forward.17} parent=31 // pred_region
          %s369 = ssub.s32 384, 384
          %370 = vsyncadd %s361, %s369
          %s371 = smul.addr %s21, 3
          %s372 = smul.addr %s371, 128
          %s373 = scalar_lea.hbm %s3, %s372
          %s375 = sshll.u32 %s364, 4
          %s376 = int_to_ptr.vmem [resolvable:$true] %s375
          %378 = dma.vmem_to_hbm [thread:$0]  %s376, 384, %s373, %s361
        $region48: #{voice_to_notes_forward.17} parent=31 // pred_fallthru
          _
      $region32: #{voice_to_notes_forward.17} parent=5 // pred_fallthru
        _
      %p379 = scmp.le.s32.totalorder 2, %s16
      // Predicated region
      $region49: #{voice_to_notes_forward.17} parent=5 // pred_check
        %p380 = pneg %p379
      $region50: #{voice_to_notes_forward.17} parent=5 // pred_check_branch
        %382 = sbr.rel (%p380) target = $region52
      $region51: #{voice_to_notes_forward.17} parent=5 // pred_region
        %s383 = ssub.s32 %s16, 2
        // Predicated region
        $region53: #{voice_to_notes_forward.17} parent=51 // pred_check
          %p384 = pneg %p113
        $region54: #{voice_to_notes_forward.17} parent=51 // pred_check_branch
          %386 = sbr.rel (%p384) target = $region56
        $region55: #{voice_to_notes_forward.17} parent=51 // pred_region
          %s387 = sand.u32 %s98, 1
          %s388 = scalar_lea.sflag [#allocation4], %s387
          %s389 = sand.u32 %s98, 1
          %s390 = smul.addr %s389, 24
          %s391 = scalar_lea.vmem [#allocation8], %s390
          %392 = dma.done %s388, 384
        $region56: #{voice_to_notes_forward.17} parent=51 // pred_fallthru
          _
      $region52: #{voice_to_notes_forward.17} parent=5 // pred_fallthru
        _
    $region6: #{voice_to_notes_forward.17} parent=1 // loop_footer
      %s20 = sadd.s32 1, %s16
    $region7: #{voice_to_notes_forward.17} parent=1 // loop_footer_branch
      %15 = sbr.rel target = $region3
    $region8: #{voice_to_notes_forward.17} parent=1 // loop_exit
      _
    %393 = vsyncpa [#allocation3], 1
    %s394 = scalar_lea.sflag [#allocation3], 1
    %395 = vsyncpa %s394, 1
    %396 = vsyncpa [#allocation6], 1
    %397 = vsyncpa [#allocation4], 1
    %s398 = scalar_lea.sflag [#allocation4], 1
    %399 = vsyncpa %s398, 1

// kernel: voice_to_notes_forward.13
$region0: #{voice_to_notes_forward.13}
  #allocation0 [shape = 'u32[]', space=smem, size = 0x4, offset = 0x4, fixed_abs, tag = 'smem constant byte address 0x4 - core index']
  #allocation1 [shape = 'u32[144,128]{1,0:T(1,128)}', space=vmem, size = 0x12000, scoped, tag = 'internal scratch']
  %s0 = inlined_call_operand.hbm [shape: bf16[16,32], index: 0, kind: input, shape index: {}]
  %s1 = inlined_call_operand.hbm [shape: bf16[32,64], index: 1, kind: input, shape index: {}]
  %s2 = inlined_call_operand.hbm [shape: f32[1,64], index: 2, kind: input, shape index: {}]
  %s3 = inlined_call_operand.hbm [shape: bf16[64,32], index: 3, kind: input, shape index: {}]
  %s4 = inlined_call_operand.hbm [shape: f32[1,32], index: 4, kind: input, shape index: {}]
  %s5 = inlined_call_operand.hbm [shape: f32[1,32], index: 5, kind: input, shape index: {}]
  %s6 = inlined_call_operand.hbm [shape: f32[1,32], index: 6, kind: input, shape index: {}]
  %s7 = inlined_call_operand.hbm [shape: bf16[16,32], index: 7, kind: output, shape index: {}]
  %s8 = sld [smem:[#allocation0]]
  $region89: #{voice_to_notes_forward.13} parent=0
    _
  %s10 = ssub.s32 1, %s8
  %s11 = scalar_select 0, %s10, %s8
  $region1: #{voice_to_notes_forward.13} parent=0
    #allocation2 [shape = 'u8[4096]{0}', space=vmem, size = 0x1000, scoped, tag = 'input window, operand 0']
    #allocation3 [shape = 's32[2]{0}', space=sflag, size = 0x8, scoped, tag = 'scoped memory for voice_to_notes_forward.13']
    #allocation4 [shape = 's32[2]{0}', space=sflag, size = 0x8, scoped, tag = 'scoped memory for voice_to_notes_forward.13']
    #allocation5 [shape = 'u8[8192]{0}', space=vmem, size = 0x2000, scoped, tag = 'input window, operand 1, single buffered']
    #allocation6 [shape = 's32[1]{0}', space=sflag, size = 0x4, scoped, tag = 'scoped memory for voice_to_notes_forward.13']
    #allocation7 [shape = 'u8[512]{0}', space=vmem, size = 0x400, scoped, tag = 'input window, operand 2, single buffered']
    #allocation8 [shape = 'u8[16384]{0}', space=vmem, size = 0x4000, scoped, tag = 'input window, operand 3, single buffered']
    #allocation9 [shape = 's32[1]{0}', space=sflag, size = 0x4, scoped, tag = 'scoped memory for voice_to_notes_forward.13']
    #allocation10 [shape = 'u8[512]{0}', space=vmem, size = 0x400, scoped, tag = 'input window, operand 4, single buffered']
    #allocation11 [shape = 'u8[512]{0}', space=vmem, size = 0x400, scoped, tag = 'input window, operand 5, single buffered']
    #allocation12 [shape = 's32[1]{0}', space=sflag, size = 0x4, scoped, tag = 'scoped memory for voice_to_notes_forward.13']
    #allocation13 [shape = 'u8[512]{0}', space=vmem, size = 0x400, scoped, tag = 'input window, operand 6, single buffered']
    #allocation14 [shape = 'u8[4096]{0}', space=vmem, size = 0x1000, scoped, tag = 'output window, operand 0']
    %12 = vsyncpa [#allocation3], 0
    %s13 = scalar_lea.sflag [#allocation3], 1
    %14 = vsyncpa %s13, 0
    %15 = vsyncpa [#allocation6], 0
    %16 = vsyncpa [#allocation9], 0
    %17 = vsyncpa [#allocation12], 0
    %18 = vsyncpa [#allocation4], 0
    %s19 = scalar_lea.sflag [#allocation4], 1
    %20 = vsyncpa %s19, 0
    loop: start=0, step=1, limit=4
    $region2: #{voice_to_notes_forward.13} parent=1 // loop_pre_header
      _
    $region3: #{voice_to_notes_forward.13} parent=1 // loop_header
      %s22 = sphi 0, %s26
      %p23 = scmp.ge.s32.totalorder %s22, 4
      %s32 = sphi 0, %s34
      %s35 = sphi 0, %s32
      %s36 = sphi 0, %s35
      %s52 = sphi 0, %s36
      %s56 = sphi 0, %s56
      %s58 = sphi 0, %s56
      %s59 = sphi 0, %s58
      %s73 = sphi 0, %s59
      %s77 = sphi 0, %s77
      %s79 = sphi 0, %s77
      %s80 = sphi 0, %s79
      %s94 = sphi 0, %s80
      %s98 = sphi 0, %s98
      %s100 = sphi 0, %s98
      %s101 = sphi 0, %s100
      %s115 = sphi 0, %s101
      %s119 = sphi 0, %s119
      %s121 = sphi 0, %s119
      %s122 = sphi 0, %s121
      %s136 = sphi 0, %s122
      %s140 = sphi 0, %s140
      %s142 = sphi 0, %s140
      %s143 = sphi 0, %s142
      %s157 = sphi 0, %s143
      %s161 = sphi 0, %s161
      %s163 = sphi 0, %s161
      %s164 = sphi 0, %s163
      %s178 = sphi 0, %s164
      %s184 = sphi 0, %s186
      %s187 = sphi 0, %s184
      %s188 = sphi 0, %s187
      %s204 = sphi 0, %s188
    $region4: #{voice_to_notes_forward.13} parent=1 // loop_header_branch
      %25 = sbr.rel (%p23) target = $region8
    $region5: #{voice_to_notes_forward.13} parent=1 // loop_body
      %s27 = ssub.s32 %s22, 1
      %s28 = ssub.s32 %s22, 2
      %s29 = sadd.s32 %s22, 1
      %s30 = ssub.s32 %s22, %s29
      %p31 = scmp.eq.s32.totalorder %s30, 0
      %s33 = sadd.s32 %s32, 1
      %s34 = scalar_select %p31, %s32, %s33
      %p37 = pneg %p31
      %p38 = scmp.eq.s32.totalorder %s22, 1
      %p39 = por %p37, %p38
      %p40 = scmp.ne.s32.totalorder %s32, %s35
      %p41 = scmp.eq.s32.totalorder %s22, 0
      %p42 = por %p40, %p41
      %p43 = scmp.ne.s32.totalorder %s32, %s35
      %p44 = scmp.eq.s32.totalorder %s27, 1
      %p45 = por %p43, %p44
      %p46 = scmp.ne.s32.totalorder %s35, %s36
      %p47 = scmp.eq.s32.totalorder %s27, 0
      %p48 = por %p46, %p47
      %p49 = scmp.ne.s32.totalorder %s35, %s36
      %p50 = scmp.eq.s32.totalorder %s28, 1
      %p51 = por %p49, %p50
      %p53 = scmp.ne.s32.totalorder %s36, %s52
      %p54 = scmp.eq.s32.totalorder %s28, 0
      %p55 = por %p53, %p54
      %s57 = sadd.s32 %s56, 1
      %p60 = scmp.eq.s32.totalorder %s22, 1
      %p61 = scmp.ne.s32.totalorder %s56, %s58
      %p62 = scmp.eq.s32.totalorder %s22, 0
      %p63 = por %p61, %p62
      %p64 = scmp.ne.s32.totalorder %s56, %s58
      %p65 = scmp.eq.s32.totalorder %s27, 1
      %p66 = por %p64, %p65
      %p67 = scmp.ne.s32.totalorder %s58, %s59
      %p68 = scmp.eq.s32.totalorder %s27, 0
      %p69 = por %p67, %p68
      %p70 = scmp.ne.s32.totalorder %s58, %s59
      %p71 = scmp.eq.s32.totalorder %s28, 1
      %p72 = por %p70, %p71
      %p74 = scmp.ne.s32.totalorder %s59, %s73
      %p75 = scmp.eq.s32.totalorder %s28, 0
      %p76 = por %p74, %p75
      %s78 = sadd.s32 %s77, 1
      %p81 = scmp.eq.s32.totalorder %s22, 1
      %p82 = scmp.ne.s32.totalorder %s77, %s79
      %p83 = scmp.eq.s32.totalorder %s22, 0
      %p84 = por %p82, %p83
      %p85 = scmp.ne.s32.totalorder %s77, %s79
      %p86 = scmp.eq.s32.totalorder %s27, 1
      %p87 = por %p85, %p86
      %p88 = scmp.ne.s32.totalorder %s79, %s80
      %p89 = scmp.eq.s32.totalorder %s27, 0
      %p90 = por %p88, %p89
      %p91 = scmp.ne.s32.totalorder %s79, %s80
      %p92 = scmp.eq.s32.totalorder %s28, 1
      %p93 = por %p91, %p92
      %p95 = scmp.ne.s32.totalorder %s80, %s94
      %p96 = scmp.eq.s32.totalorder %s28, 0
      %p97 = por %p95, %p96
      %s99 = sadd.s32 %s98, 1
      %p102 = scmp.eq.s32.totalorder %s22, 1
      %p103 = scmp.ne.s32.totalorder %s98, %s100
      %p104 = scmp.eq.s32.totalorder %s22, 0
      %p105 = por %p103, %p104
      %p106 = scmp.ne.s32.totalorder %s98, %s100
      %p107 = scmp.eq.s32.totalorder %s27, 1
      %p108 = por %p106, %p107
      %p109 = scmp.ne.s32.totalorder %s100, %s101
      %p110 = scmp.eq.s32.totalorder %s27, 0
      %p111 = por %p109, %p110
      %p112 = scmp.ne.s32.totalorder %s100, %s101
      %p113 = scmp.eq.s32.totalorder %s28, 1
      %p114 = por %p112, %p113
      %p116 = scmp.ne.s32.totalorder %s101, %s115
      %p117 = scmp.eq.s32.totalorder %s28, 0
      %p118 = por %p116, %p117
      %s120 = sadd.s32 %s119, 1
      %p123 = scmp.eq.s32.totalorder %s22, 1
      %p124 = scmp.ne.s32.totalorder %s119, %s121
      %p125 = scmp.eq.s32.totalorder %s22, 0
      %p126 = por %p124, %p125
      %p127 = scmp.ne.s32.totalorder %s119, %s121
      %p128 = scmp.eq.s32.totalorder %s27, 1
      %p129 = por %p127, %p128
      %p130 = scmp.ne.s32.totalorder %s121, %s122
      %p131 = scmp.eq.s32.totalorder %s27, 0
      %p132 = por %p130, %p131
      %p133 = scmp.ne.s32.totalorder %s121, %s122
      %p134 = scmp.eq.s32.totalorder %s28, 1
      %p135 = por %p133, %p134
      %p137 = scmp.ne.s32.totalorder %s122, %s136
      %p138 = scmp.eq.s32.totalorder %s28, 0
      %p139 = por %p137, %p138
      %s141 = sadd.s32 %s140, 1
      %p144 = scmp.eq.s32.totalorder %s22, 1
      %p145 = scmp.ne.s32.totalorder %s140, %s142
      %p146 = scmp.eq.s32.totalorder %s22, 0
      %p147 = por %p145, %p146
      %p148 = scmp.ne.s32.totalorder %s140, %s142
      %p149 = scmp.eq.s32.totalorder %s27, 1
      %p150 = por %p148, %p149
      %p151 = scmp.ne.s32.totalorder %s142, %s143
      %p152 = scmp.eq.s32.totalorder %s27, 0
      %p153 = por %p151, %p152
      %p154 = scmp.ne.s32.totalorder %s142, %s143
      %p155 = scmp.eq.s32.totalorder %s28, 1
      %p156 = por %p154, %p155
      %p158 = scmp.ne.s32.totalorder %s143, %s157
      %p159 = scmp.eq.s32.totalorder %s28, 0
      %p160 = por %p158, %p159
      %s162 = sadd.s32 %s161, 1
      %p165 = scmp.eq.s32.totalorder %s22, 1
      %p166 = scmp.ne.s32.totalorder %s161, %s163
      %p167 = scmp.eq.s32.totalorder %s22, 0
      %p168 = por %p166, %p167
      %p169 = scmp.ne.s32.totalorder %s161, %s163
      %p170 = scmp.eq.s32.totalorder %s27, 1
      %p171 = por %p169, %p170
      %p172 = scmp.ne.s32.totalorder %s163, %s164
      %p173 = scmp.eq.s32.totalorder %s27, 0
      %p174 = por %p172, %p173
      %p175 = scmp.ne.s32.totalorder %s163, %s164
      %p176 = scmp.eq.s32.totalorder %s28, 1
      %p177 = por %p175, %p176
      %p179 = scmp.ne.s32.totalorder %s164, %s178
      %p180 = scmp.eq.s32.totalorder %s28, 0
      %p181 = por %p179, %p180
      %s182 = ssub.s32 %s22, %s29
      %p183 = scmp.eq.s32.totalorder %s182, 0
      %s185 = sadd.s32 %s184, 1
      %s186 = scalar_select %p183, %s184, %s185
      %p189 = pneg %p183
      %p190 = scmp.eq.s32.totalorder %s22, 1
      %p191 = por %p189, %p190
      %p192 = scmp.ne.s32.totalorder %s184, %s187
      %p193 = scmp.eq.s32.totalorder %s22, 0
      %p194 = por %p192, %p193
      %p195 = scmp.ne.s32.totalorder %s184, %s187
      %p196 = scmp.eq.s32.totalorder %s27, 1
      %p197 = por %p195, %p196
      %p198 = scmp.ne.s32.totalorder %s187, %s188
      %p199 = scmp.eq.s32.totalorder %s27, 0
      %p200 = por %p198, %p199
      %p201 = scmp.ne.s32.totalorder %s187, %s188
      %p202 = scmp.eq.s32.totalorder %s28, 1
      %p203 = por %p201, %p202
      %p205 = scmp.ne.s32.totalorder %s188, %s204
      %p206 = scmp.eq.s32.totalorder %s28, 0
      %p207 = por %p205, %p206
      %p208 = scmp.le.s32.totalorder 1, %s22
      %p209 = scmp.lt.s32.totalorder %s22, 3
      %p210 = pnand %p208, %p209
      %p211 = pneg %p210
      // Predicated region
      $region9: #{voice_to_notes_forward.13} parent=5 // pred_check
        _
      $region10: #{voice_to_notes_forward.13} parent=5 // pred_check_branch
        %213 = sbr.rel (%p210) target = $region12
      $region11: #{voice_to_notes_forward.13} parent=5 // pred_region
        %s214 = ssub.s32 %s22, 1
        // Predicated region
        $region13: #{voice_to_notes_forward.13} parent=11 // pred_check
          %p215 = pneg %p69
        $region14: #{voice_to_notes_forward.13} parent=11 // pred_check_branch
          %217 = sbr.rel (%p215) target = $region16
        $region15: #{voice_to_notes_forward.13} parent=11 // pred_region
          %s219 = ssub.s32 256, 256
          %220 = vsyncadd [#allocation6], %s219
          %s221 = sshll.u32 [#allocation5], 4
          %s222 = int_to_ptr.vmem [resolvable:$true] %s221
          %227 = dma.hbm_to_vmem [thread:$0]  %s1, 256, %s222, [#allocation6], 64, 64, 4
        $region16: #{voice_to_notes_forward.13} parent=11 // pred_fallthru
          _
        // Predicated region
        $region17: #{voice_to_notes_forward.13} parent=11 // pred_check
          %p228 = pneg %p90
        $region18: #{voice_to_notes_forward.13} parent=11 // pred_check_branch
          %230 = sbr.rel (%p228) target = $region20
        $region19: #{voice_to_notes_forward.13} parent=11 // pred_region
          %s232 = ssub.s32 16, 16
          %233 = vsyncadd [#allocation6], %s232
          %s235 = sshll.u32 [#allocation7], 4
          %s236 = int_to_ptr.vmem [resolvable:$true] %s235
          %238 = dma.hbm_to_vmem [thread:$0]  %s2, 16, %s236, [#allocation6]
        $region20: #{voice_to_notes_forward.13} parent=11 // pred_fallthru
          _
        // Predicated region
        $region21: #{voice_to_notes_forward.13} parent=11 // pred_check
          %p239 = pneg %p111
        $region22: #{voice_to_notes_forward.13} parent=11 // pred_check_branch
          %241 = sbr.rel (%p239) target = $region24
        $region23: #{voice_to_notes_forward.13} parent=11 // pred_region
          %s243 = ssub.s32 512, 512
          %244 = vsyncadd [#allocation9], %s243
          %s245 = sshll.u32 [#allocation8], 4
          %s246 = int_to_ptr.vmem [resolvable:$true] %s245
          %251 = dma.hbm_to_vmem [thread:$0]  %s3, 512, %s246, [#allocation9], 64, 64, 4
        $region24: #{voice_to_notes_forward.13} parent=11 // pred_fallthru
          _
        // Predicated region
        $region25: #{voice_to_notes_forward.13} parent=11 // pred_check
          %p252 = pneg %p132
        $region26: #{voice_to_notes_forward.13} parent=11 // pred_check_branch
          %254 = sbr.rel (%p252) target = $region28
        $region27: #{voice_to_notes_forward.13} parent=11 // pred_region
          %s256 = ssub.s32 16, 16
          %257 = vsyncadd [#allocation9], %s256
          %s259 = sshll.u32 [#allocation10], 4
          %s260 = int_to_ptr.vmem [resolvable:$true] %s259
          %262 = dma.hbm_to_vmem [thread:$0]  %s4, 16, %s260, [#allocation9]
        $region28: #{voice_to_notes_forward.13} parent=11 // pred_fallthru
          _
        // Predicated region
        $region29: #{voice_to_notes_forward.13} parent=11 // pred_check
          %p263 = pneg %p153
        $region30: #{voice_to_notes_forward.13} parent=11 // pred_check_branch
          %265 = sbr.rel (%p263) target = $region32
        $region31: #{voice_to_notes_forward.13} parent=11 // pred_region
          %s267 = ssub.s32 16, 16
          %268 = vsyncadd [#allocation12], %s267
          %s270 = sshll.u32 [#allocation11], 4
          %s271 = int_to_ptr.vmem [resolvable:$true] %s270
          %273 = dma.hbm_to_vmem [thread:$0]  %s5, 16, %s271, [#allocation12]
        $region32: #{voice_to_notes_forward.13} parent=11 // pred_fallthru
          _
        // Predicated region
        $region33: #{voice_to_notes_forward.13} parent=11 // pred_check
          %p274 = pneg %p174
        $region34: #{voice_to_notes_forward.13} parent=11 // pred_check_branch
          %276 = sbr.rel (%p274) target = $region36
        $region35: #{voice_to_notes_forward.13} parent=11 // pred_region
          %s278 = ssub.s32 16, 16
          %279 = vsyncadd [#allocation12], %s278
          %s281 = sshll.u32 [#allocation13], 4
          %s282 = int_to_ptr.vmem [resolvable:$true] %s281
          %284 = dma.hbm_to_vmem [thread:$0]  %s6, 16, %s282, [#allocation12]
        $region36: #{voice_to_notes_forward.13} parent=11 // pred_fallthru
          _
      $region12: #{voice_to_notes_forward.13} parent=5 // pred_fallthru
        _
      %p285 = scmp.lt.s32.totalorder %s22, 2
      // Predicated region
      $region37: #{voice_to_notes_forward.13} parent=5 // pred_check
        %p286 = pneg %p285
      $region38: #{voice_to_notes_forward.13} parent=5 // pred_check_branch
        %288 = sbr.rel (%p286) target = $region40
      $region39: #{voice_to_notes_forward.13} parent=5 // pred_region
        // Predicated region
        $region41: #{voice_to_notes_forward.13} parent=39 // pred_check
          %p289 = pneg %p42
        $region42: #{voice_to_notes_forward.13} parent=39 // pred_check_branch
          %291 = sbr.rel (%p289) target = $region44
        $region43: #{voice_to_notes_forward.13} parent=39 // pred_region
          %s292 = sand.u32 %s32, 1
          %s293 = scalar_lea.sflag [#allocation3], %s292
          %s294 = sand.u32 %s32, 1
          %s295 = smul.addr %s294, 4
          %s296 = scalar_lea.vmem [#allocation2], %s295
          %s298 = ssub.s32 64, 64
          %299 = vsyncadd %s293, %s298
          %s300 = smul.addr %s22, 64
          %s301 = scalar_lea.hbm %s0, %s300
          %s303 = sshll.u32 %s296, 4
          %s304 = int_to_ptr.vmem [resolvable:$true] %s303
          %306 = dma.hbm_to_vmem [thread:$0]  %s301, 64, %s304, %s293
        $region44: #{voice_to_notes_forward.13} parent=39 // pred_fallthru
          _
      $region40: #{voice_to_notes_forward.13} parent=5 // pred_fallthru
        _
      %p307 = scmp.le.s32.totalorder 1, %s22
      %p308 = scmp.lt.s32.totalorder %s22, 3
      %p309 = pnand %p307, %p308
      %p310 = pneg %p309
      // Predicated region
      $region45: #{voice_to_notes_forward.13} parent=5 // pred_check
        _
      $region46: #{voice_to_notes_forward.13} parent=5 // pred_check_branch
        %312 = sbr.rel (%p309) target = $region48
      $region47: #{voice_to_notes_forward.13} parent=5 // pred_region
        %s313 = ssub.s32 %s22, 1
        %s314 = sand.u32 %s35, 1
        %s315 = scalar_lea.sflag [#allocation3], %s314
        %s316 = sand.u32 %s35, 1
        %s317 = smul.addr %s316, 4
        %s318 = scalar_lea.vmem [#allocation2], %s317
        // Predicated region
        $region49: #{voice_to_notes_forward.13} parent=47 // pred_check
          %p319 = pneg %p48
        $region50: #{voice_to_notes_forward.13} parent=47 // pred_check_branch
          %321 = sbr.rel (%p319) target = $region52
        $region51: #{voice_to_notes_forward.13} parent=47 // pred_region
          %322 = dma.done %s315, 64
        $region52: #{voice_to_notes_forward.13} parent=47 // pred_fallthru
          _
        // Predicated region
        $region53: #{voice_to_notes_forward.13} parent=47 // pred_check
          %p323 = pneg %p69
        $region54: #{voice_to_notes_forward.13} parent=47 // pred_check_branch
          %325 = sbr.rel (%p323) target = $region56
        $region55: #{voice_to_notes_forward.13} parent=47 // pred_region
          %326 = dma.done [#allocation6], 256
        $region56: #{voice_to_notes_forward.13} parent=47 // pred_fallthru
          _
        // Predicated region
        $region57: #{voice_to_notes_forward.13} parent=47 // pred_check
          %p327 = pneg %p90
        $region58: #{voice_to_notes_forward.13} parent=47 // pred_check_branch
          %329 = sbr.rel (%p327) target = $region60
        $region59: #{voice_to_notes_forward.13} parent=47 // pred_region
          %330 = dma.done [#allocation6], 16
        $region60: #{voice_to_notes_forward.13} parent=47 // pred_fallthru
          _
        // Predicated region
        $region61: #{voice_to_notes_forward.13} parent=47 // pred_check
          %p331 = pneg %p111
        $region62: #{voice_to_notes_forward.13} parent=47 // pred_check_branch
          %333 = sbr.rel (%p331) target = $region64
        $region63: #{voice_to_notes_forward.13} parent=47 // pred_region
          %334 = dma.done [#allocation9], 512
        $region64: #{voice_to_notes_forward.13} parent=47 // pred_fallthru
          _
        // Predicated region
        $region65: #{voice_to_notes_forward.13} parent=47 // pred_check
          %p335 = pneg %p132
        $region66: #{voice_to_notes_forward.13} parent=47 // pred_check_branch
          %337 = sbr.rel (%p335) target = $region68
        $region67: #{voice_to_notes_forward.13} parent=47 // pred_region
          %338 = dma.done [#allocation9], 16
        $region68: #{voice_to_notes_forward.13} parent=47 // pred_fallthru
          _
        // Predicated region
        $region69: #{voice_to_notes_forward.13} parent=47 // pred_check
          %p339 = pneg %p153
        $region70: #{voice_to_notes_forward.13} parent=47 // pred_check_branch
          %341 = sbr.rel (%p339) target = $region72
        $region71: #{voice_to_notes_forward.13} parent=47 // pred_region
          %342 = dma.done [#allocation12], 16
        $region72: #{voice_to_notes_forward.13} parent=47 // pred_fallthru
          _
        // Predicated region
        $region73: #{voice_to_notes_forward.13} parent=47 // pred_check
          %p343 = pneg %p174
        $region74: #{voice_to_notes_forward.13} parent=47 // pred_check_branch
          %345 = sbr.rel (%p343) target = $region76
        $region75: #{voice_to_notes_forward.13} parent=47 // pred_region
          %346 = dma.done [#allocation12], 16
        $region76: #{voice_to_notes_forward.13} parent=47 // pred_fallthru
          _
        %s347 = sand.u32 %s35, 1
        %s348 = scalar_lea.sflag [#allocation3], %s347
        %s349 = sand.u32 %s35, 1
        %s350 = smul.addr %s349, 4
        %s351 = scalar_lea.vmem [#allocation2], %s350
        %p352 = pneg %p48
        %p353 = pneg %p45
        %p354 = pneg %p69
        %p355 = pneg %p66
        %p356 = pneg %p90
        %p357 = pneg %p87
        %p358 = pneg %p111
        %p359 = pneg %p108
        %p360 = pneg %p132
        %p361 = pneg %p129
        %p362 = pneg %p153
        %p363 = pneg %p150
        %p364 = pneg %p174
        %p365 = pneg %p171
        %p366 = pneg %p200
        %p367 = pneg %p197
        %s368 = sand.u32 %s187, 1
        %s369 = scalar_lea.sflag [#allocation4], %s368
        %s370 = sand.u32 %s187, 1
        %s371 = smul.addr %s370, 4
        %s372 = scalar_lea.vmem [#allocation14], %s371
        %v374 = vld [vmem:[%s318] sm:$0xf]
        %v375 = vld [vmem:[#allocation5] sm:$0xf]
        %v376 = vld [vmem:[#allocation5 + $0x4] sm:$0xf]
        %v377 = vld [vmem:[#allocation5 + $0x8] sm:$0xf]
        %v378 = vld [vmem:[#allocation5 + $0xc] sm:$0xf]
        %v379 = vld [vmem:[#allocation7] sm:$0x1]
        %v381 = vlaneseq
        %v382 = vshrl.u32 %v381, 7
        %v383 = vsub.s32 0, %v382
        %v384 = vrot.slane %v379, %v383
        %v390 = vunpack.c.l.b16 %v375
        %v391 = vunpack.c.l.b16 %v376
        %v392 = vunpack.c.l.b16 %v377
        %v393 = vunpack.c.l.b16 %v378
        %v394 = vpack.c.b16 %v391, %v390
        %v395 = vpack.c.b16 %v393, %v392
        %vm398 = vcmask 261120
        %v400 = vsel %vm398, %v374, 0
        %402 = vmatprep.subr.bf16.mxu0 0
        %403 = vmatpush1.bf16.msra.mxu0 %v394
        %404 = vmatprep.subr.bf16.mxu0 0
        %405 = vmatpush1.bf16.msra.mxu0 %v395
        %406 = vmatprep.subr.bf16.mxu0 0
        %407 = vmatpush1.bf16.msra.mxu0 0
        %408 = vmatprep.subr.bf16.mxu0 0
        %409 = vmatpush1.bf16.msra.mxu0 0
        %410 = vmatprep.subr.bf16.mxu0 0
        %411 = vmatpush1.bf16.msra.mxu0 0
        %412 = vmatprep.subr.bf16.mxu0 0
        %413 = vmatpush1.bf16.msra.mxu0 0
        %414 = vmatprep.subr.bf16.mxu0 0
        %415 = vmatpush1.bf16.msra.mxu0 0
        %416 = vmatprep.subr.bf16.mxu0 0
        %417 = vmatpush1.bf16.msra.mxu0 0
        %418 = vmatprep.subr.bf16.mxu0 0
        %419 = vmatpush1.bf16.msra.mxu0 0
        %420 = vmatprep.subr.bf16.mxu0 0
        %421 = vmatpush1.bf16.msra.mxu0 0
        %422 = vmatprep.subr.bf16.mxu0 0
        %423 = vmatpush1.bf16.msra.mxu0 0
        %424 = vmatprep.subr.bf16.mxu0 0
        %425 = vmatpush1.bf16.msra.mxu0 0
        %426 = vmatprep.subr.bf16.mxu0 0
        %427 = vmatpush1.bf16.msra.mxu0 0
        %428 = vmatprep.subr.bf16.mxu0 0
        %429 = vmatpush1.bf16.msra.mxu0 0
        %430 = vmatprep.subr.bf16.mxu0 0
        %431 = vmatpush1.bf16.msra.mxu0 0
        %432 = vmatprep.subr.bf16.mxu0 0
        %433 = vmatpush1.bf16.msra.mxu0 0
        %434 = vmatprep.mubr.bf16.mxu0 0
        %435 = vmatmul.mubr.bf16.gmra.mrb[0].mxu0 %v400
        %v436 = vpop.f32.mrb[0].mxu0
        %v437 = vadd.f32 %v384, %v436
        %v438 = vpop.f32.mrb[0].mxu0
        %v439 = vpop.f32.mrb[0].mxu0
        %v440 = vpop.f32.mrb[0].mxu0
        %441 = vdwg.mxu0
        %v442 = vmax.f32 %v437, 0.0
        %v443 = vpack.c.bf16 %v442, %v442
        %v444 = vld [vmem:[#allocation8] sm:$0xf]
        %v445 = vld [vmem:[#allocation8 + $0x4] sm:$0xf]
        %v446 = vld [vmem:[#allocation8 + $0x8] sm:$0xf]
        %v447 = vld [vmem:[#allocation8 + $0xc] sm:$0xf]
        %v448 = vld [vmem:[#allocation8 + $0x10] sm:$0xf]
        %v449 = vld [vmem:[#allocation8 + $0x14] sm:$0xf]
        %v450 = vld [vmem:[#allocation8 + $0x18] sm:$0xf]
        %v451 = vld [vmem:[#allocation8 + $0x1c] sm:$0xf]
        %v452 = vld [vmem:[#allocation10] sm:$0x1]
        %v454 = vlaneseq
        %v455 = vshrl.u32 %v454, 7
        %v456 = vsub.s32 0, %v455
        %v457 = vrot.slane %v452, %v456
        %v467 = vunpack.c.l.b16 %v444
        %v468 = vunpack.c.l.b16 %v445
        %v469 = vunpack.c.l.b16 %v446
        %v470 = vunpack.c.l.b16 %v447
        %v471 = vunpack.c.l.b16 %v448
        %v472 = vunpack.c.l.b16 %v449
        %v473 = vunpack.c.l.b16 %v450
        %v474 = vunpack.c.l.b16 %v451
        %v475 = vpack.c.b16 %v468, %v467
        %v476 = vpack.c.b16 %v470, %v469
        %v477 = vpack.c.b16 %v472, %v471
        %v478 = vpack.c.b16 %v474, %v473
        %vm483 = vcmask 523264
        %v485 = vsel %vm483, %v443, 0
        %487 = vmatprep.subr.bf16.mxu0 0
        %488 = vmatpush1.bf16.msra.mxu0 %v475
        %489 = vmatprep.subr.bf16.mxu0 0
        %490 = vmatpush1.bf16.msra.mxu0 %v476
        %491 = vmatprep.subr.bf16.mxu0 0
        %492 = vmatpush1.bf16.msra.mxu0 %v477
        %493 = vmatprep.subr.bf16.mxu0 0
        %494 = vmatpush1.bf16.msra.mxu0 %v478
        %495 = vmatprep.subr.bf16.mxu0 0
        %496 = vmatpush1.bf16.msra.mxu0 0
        %497 = vmatprep.subr.bf16.mxu0 0
        %498 = vmatpush1.bf16.msra.mxu0 0
        %499 = vmatprep.subr.bf16.mxu0 0
        %500 = vmatpush1.bf16.msra.mxu0 0
        %501 = vmatprep.subr.bf16.mxu0 0
        %502 = vmatpush1.bf16.msra.mxu0 0
        %503 = vmatprep.subr.bf16.mxu0 0
        %504 = vmatpush1.bf16.msra.mxu0 0
        %505 = vmatprep.subr.bf16.mxu0 0
        %506 = vmatpush1.bf16.msra.mxu0 0
        %507 = vmatprep.subr.bf16.mxu0 0
        %508 = vmatpush1.bf16.msra.mxu0 0
        %509 = vmatprep.subr.bf16.mxu0 0
        %510 = vmatpush1.bf16.msra.mxu0 0
        %511 = vmatprep.subr.bf16.mxu0 0
        %512 = vmatpush1.bf16.msra.mxu0 0
        %513 = vmatprep.subr.bf16.mxu0 0
        %514 = vmatpush1.bf16.msra.mxu0 0
        %515 = vmatprep.subr.bf16.mxu0 0
        %516 = vmatpush1.bf16.msra.mxu0 0
        %517 = vmatprep.subr.bf16.mxu0 0
        %518 = vmatpush1.bf16.msra.mxu0 0
        %519 = vmatprep.mubr.bf16.mxu0 0
        %520 = vmatmul.mubr.bf16.gmra.mrb[0].mxu0 %v485
        %v521 = vpop.f32.mrb[0].mxu0
        %v522 = vadd.f32 %v457, %v521
        %v523 = vpop.f32.mrb[0].mxu0
        %v524 = vpop.f32.mrb[0].mxu0
        %v525 = vpop.f32.mrb[0].mxu0
        %526 = vdwg.mxu0
        %v527 = vunpack.c.l.bf16 %v374
        %v528 = vadd.f32 %v527, %v522
        %v529 = vsel %vm398, %v528, 0.0
        %530 = vadd.xlane.f32.xlu0 %v529
        %v531 = vpop.xlane.xlu0 %530
        %v532 = vrcp.pop 32.0
        %v533 = vmul.f32 %v531, %v532
        %v534 = vsub.f32 %v528, %v533
        %v535 = vmul.f32 %v534, %v534
        %v536 = vsel %vm398, %v535, 0.0
        %537 = vadd.xlane.f32.xlu0 %v536
        %v538 = vpop.xlane.xlu0 %537
        %v539 = vmul.f32 %v538, %v532
        %v540 = vadd.f32 %v539, 1e-05
        %v541 = vrsqrt.pop %v540
        %v542 = vmul.f32 %v534, %v541
        %v543 = vld [vmem:[#allocation11] sm:$0x1]
        %v545 = vlaneseq
        %v546 = vshrl.u32 %v545, 7
        %v547 = vsub.s32 0, %v546
        %v548 = vrot.slane %v543, %v547
        %v550 = vmul.f32 %v542, %v548
        %v551 = vld [vmem:[#allocation13] sm:$0x1]
        %v553 = vlaneseq
        %v554 = vshrl.u32 %v553, 7
        %v555 = vsub.s32 0, %v554
        %v556 = vrot.slane %v551, %v555
        %v558 = vadd.f32 %v550, %v556
        %v559 = vpack.c.bf16 %v558, %v558
        %vm560 = vcmask 257024
        %561 = vst.msk [vmem:[%s372] sm:$0xf] %vm560, %v559
        %s562 = sand.u32 %s187, 1
        %s563 = scalar_lea.sflag [#allocation4], %s562
        %s564 = sand.u32 %s187, 1
        %s565 = smul.addr %s564, 4
        %s566 = scalar_lea.vmem [#allocation14], %s565
        // Predicated region
        $region77: #{voice_to_notes_forward.13} parent=47 // pred_check
          %p567 = pneg %p197
        $region78: #{voice_to_notes_forward.13} parent=47 // pred_check_branch
          %569 = sbr.rel (%p567) target = $region80
        $region79: #{voice_to_notes_forward.13} parent=47 // pred_region
          %s571 = ssub.s32 64, 64
          %572 = vsyncadd %s563, %s571
          %s573 = smul.addr %s27, 64
          %s574 = scalar_lea.hbm %s7, %s573
          %s576 = sshll.u32 %s566, 4
          %s577 = int_to_ptr.vmem [resolvable:$true] %s576
          %579 = dma.vmem_to_hbm [thread:$0]  %s577, 64, %s574, %s563
        $region80: #{voice_to_notes_forward.13} parent=47 // pred_fallthru
          _
      $region48: #{voice_to_notes_forward.13} parent=5 // pred_fallthru
        _
      %p580 = scmp.le.s32.totalorder 2, %s22
      // Predicated region
      $region81: #{voice_to_notes_forward.13} parent=5 // pred_check
        %p581 = pneg %p580
      $region82: #{voice_to_notes_forward.13} parent=5 // pred_check_branch
        %583 = sbr.rel (%p581) target = $region84
      $region83: #{voice_to_notes_forward.13} parent=5 // pred_region
        %s584 = ssub.s32 %s22, 2
        // Predicated region
        $region85: #{voice_to_notes_forward.13} parent=83 // pred_check
          %p585 = pneg %p203
        $region86: #{voice_to_notes_forward.13} parent=83 // pred_check_branch
          %587 = sbr.rel (%p585) target = $region88
        $region87: #{voice_to_notes_forward.13} parent=83 // pred_region
          %s588 = sand.u32 %s188, 1
          %s589 = scalar_lea.sflag [#allocation4], %s588
          %s590 = sand.u32 %s188, 1
          %s591 = smul.addr %s590, 4
          %s592 = scalar_lea.vmem [#allocation14], %s591
          %593 = dma.done %s589, 64
        $region88: #{voice_to_notes_forward.13} parent=83 // pred_fallthru
          _
      $region84: #{voice_to_notes_forward.13} parent=5 // pred_fallthru
        _
    $region6: #{voice_to_notes_forward.13} parent=1 // loop_footer
      %s26 = sadd.s32 1, %s22
    $region7: #{voice_to_notes_forward.13} parent=1 // loop_footer_branch
      %21 = sbr.rel target = $region3
    $region8: #{voice_to_notes_forward.13} parent=1 // loop_exit
      _
    %594 = vsyncpa [#allocation3], 1
    %s595 = scalar_lea.sflag [#allocation3], 1
    %596 = vsyncpa %s595, 1
    %597 = vsyncpa [#allocation6], 1
    %598 = vsyncpa [#allocation9], 1
    %599 = vsyncpa [#allocation12], 1
    %600 = vsyncpa [#allocation4], 1
    %s601 = scalar_lea.sflag [#allocation4], 1
    %602 = vsyncpa %s601, 1

</llo_original>
